<compile_context>
chip_gen: v7x
topology: tpu7x:2x2x1
jax: 0.10.0
libtpu: 0.0.40
codegen_flags: <defaults>
</compile_context>

<pallas_src>
import numpy as np
import jax
import jax.numpy as jnp
from jax import lax
from jax.experimental import pallas as pl
from jax.experimental.pallas import tpu as pltpu


def _round_up(x, m):
    return (x + m - 1) // m * m


# ---------------------------------------------------------------------------
# Kernel
# ---------------------------------------------------------------------------
def _make_kernel(C, H, W, KB, KS, Lp, G, Wext):
    PB, PS = KB // 2, KS // 2
    Wp = W + 2 * PB                      # padded row width (flat layout stride)
    HW = H * W
    NT = KB * KB + KS * KS               # taps per stage (big conv + small conv)
    base = PB * Wp + PB                  # flat-padded index of image pixel (0, 0)
    img0 = G + base                      # lane offset of pixel (0, 0) in the scratch

    # (table tap index, lane offset of the shifted window) — big conv then small.
    taps = []
    for dy in range(KB):
        for dx in range(KB):
            taps.append((dy * KB + dx, G + (dy - PB) * Wp + (dx - PB)))
    for dy in range(KS):
        for dx in range(KS):
            taps.append((KB * KB + dy * KS + dx, G + (dy - PS) * Wp + (dx - PS)))

    MASK_E = 2 * NT * C                  # table entry holding the interior mask
    SH1_E, SH2_E = MASK_E + 1, MASK_E + 2

    def conv_stage(stage, src, tab_ref):
        """src: (C, Wext) zero-guarded flat image.  Returns list of C (1, Lp)
        pre-activation rows (one per output channel)."""
        partials = [jnp.zeros((C, Lp), jnp.float32) for _ in range(C)]
        for t, a in taps:
            win = src[:, a:a + Lp]                       # (Cin, Lp) lane window
            for co in range(C):
                idx = (stage * NT + t) * C + co          # static table index
                # pre-broadcast weight entry: pure vld + vmul + vadd, no XLU.
                partials[co] = partials[co] + tab_ref[idx] * win
        # contract the Cin sublanes -> one row per output channel.
        return [jnp.sum(p, axis=0, keepdims=True) for p in partials]

    def kernel(x_ref, tab_ref, o_ref, ext_ref):
        x_flat = x_ref[0]                                # (C, H*W) compact image
        mask = tab_ref[MASK_E]                           # (C, Lp) interior mask
        sh1 = tab_ref[SH1_E]                             # (C, Lp) stage-1 shift
        sh2 = tab_ref[SH2_E]                             # (C, Lp) stage-2 shift

        # ---- place the image into the zero-guarded padded flat layout --------
        # (replaces the wrapper-side pad/reshape/pad sequence)
        ext_ref[...] = jnp.zeros_like(ext_ref)
        for i in range(H):
            ext_ref[:, img0 + i * Wp: img0 + i * Wp + W] = \
                x_flat[:, i * W:(i + 1) * W]
        src1 = ext_ref[...]                              # (C, Wext)

        # ---- stage 1: h = relu(norm1(cconv1(x)) + norm1s(cconv1s(x))) --------
        rows1 = conv_stage(0, src1, tab_ref)
        h = jnp.maximum(jnp.concatenate(rows1, axis=0) + sh1, 0.0) * mask
        # TODO(synk): self.dp (Dropout p=0.1) is identity in eval mode.

        # re-use the scratch: overwrite [G, G+Lp) with h (halo/tail already zero
        # via the mask, guards untouched) -> valid zero-padded input for stage 2.
        ext_ref[:, G:G + Lp] = h
        src2 = ext_ref[...]

        # ---- stage 2: y = norm2(cconv2(h)) + norm2s(cconv2s(h)) --------------
        rows2 = conv_stage(1, src2, tab_ref)
        y = jnp.concatenate(rows2, axis=0) + sh2         # (C, Lp)

        # ---- fused halo strip + identity shortcut + final ReLU ---------------
        # compact interior pixels, add residual, ReLU; stage in the scratch so
        # the output store is a single lane-dense block write.
        for i in range(H):
            off = base + i * Wp
            seg = jnp.maximum(y[:, off:off + W] +
                              x_flat[:, i * W:(i + 1) * W], 0.0)
            ext_ref[:, i * W:(i + 1) * W] = seg
        o_ref[0] = ext_ref[:, 0:HW].astype(o_ref.dtype)

    return kernel


# ---------------------------------------------------------------------------
# Wrapper: constant-table construction + pallas_call
# ---------------------------------------------------------------------------
def _fold_taps(w_hwio, scale):
    """(K,K,Cin,Cout) HWIO conv weight -> (K*K, Cout, Cin) with the per-channel
    BatchNorm(eval) scale folded into the output channel."""
    K, _, Cin, Cout = w_hwio.shape
    w = jnp.transpose(w_hwio, (0, 1, 3, 2)).reshape(K * K, Cout, Cin)
    return w * scale[None, :, None]


def _build_table(params, C, KB, KS, H, W, Lp, Hp, Wp, PB, Lflat):
    NT = KB * KB + KS * KS
    w_s1 = jnp.concatenate([_fold_taps(params["w1"], params["scale1"]),
                            _fold_taps(params["w1s"], params["scale1s"])], axis=0)
    w_s2 = jnp.concatenate([_fold_taps(params["w2"], params["scale2"]),
                            _fold_taps(params["w2s"], params["scale2s"])], axis=0)
    # row index = (stage*NT + tap)*Cout + co ; row = the Cin weight vector.
    w_rows = jnp.concatenate([w_s1, w_s2], axis=0).reshape(2 * NT * C, C)
    wtab = jnp.broadcast_to(w_rows[:, :, None], (2 * NT * C, C, Lp))

    # interior mask over the flattened padded grid.
    m2 = jnp.zeros((Hp, Wp), jnp.float32).at[PB:PB + H, PB:PB + W].set(1.0)
    mvec = jnp.zeros((Lp,), jnp.float32).at[:Lflat].set(m2.reshape(-1))
    mask_e = jnp.broadcast_to(mvec[None, :], (C, Lp))

    # BatchNorm(eval) shift + conv bias folded into one per-stage shift row.
    shift1 = params["shift1"] + params["b1"] * params["scale1"] + params["shift1s"]
    shift2 = params["shift2"] + params["b2"] * params["scale2"] + params["shift2s"]
    sh1_e = jnp.broadcast_to(shift1[:, None], (C, Lp))
    sh2_e = jnp.broadcast_to(shift2[:, None], (C, Lp))

    return jnp.concatenate([wtab, mask_e[None], sh1_e[None], sh2_e[None]],
                           axis=0).astype(jnp.float32)      # (2*NT*C + 3, C, Lp)


def residual_block_forward(x, params):
    """x: (N, C, H, W) float32 (PyTorch NCHW layout). Returns (N, C, H, W)."""
    N, C, H, W = x.shape
    KB = params["w1"].shape[0]           # big conv kernel size (ConvType, k=5)
    KS = params["w1s"].shape[0]          # small_kernel_size (k=3)
    PB = KB // 2
    Hp, Wp = H + 2 * PB, W + 2 * PB
    Lflat = Hp * Wp
    Lp = _round_up(Lflat, 128)           # lane-dense flattened spatial axis
    G = 128                              # 128-aligned zero guard on each side
    Wext = G + Lp + G
    HW = H * W
    NT = KB * KB + KS * KS
    NE = 2 * NT * C + 3

    assert PB * Wp + PB <= G, "zero guard too small for this kernel/spatial size"
    assert HW % 128 == 0, "H*W must be a multiple of 128 for the lane-dense output"

    tab = _build_table(params, C, KB, KS, H, W, Lp, Hp, Wp, PB, Lflat)
    x_flat = x.reshape(N, C, HW).astype(jnp.float32)

    kernel = _make_kernel(C, H, W, KB, KS, Lp, G, Wext)

    out = pl.pallas_call(
        kernel,
        out_shape=jax.ShapeDtypeStruct((N, C, HW), jnp.float32),
        grid=(N,),
        in_specs=[
            pl.BlockSpec((1, C, HW), lambda n: (n, 0, 0)),
            pl.BlockSpec((NE, C, Lp), lambda n: (0, 0, 0)),   # constant -> one DMA
        ],
        out_specs=pl.BlockSpec((1, C, HW), lambda n: (n, 0, 0)),
        scratch_shapes=[pltpu.VMEM((C, Wext), jnp.float32)],
        compiler_params=pltpu.CompilerParams(
            dimension_semantics=("parallel",),     # 2 images -> 2 v7x TensorCores
            vmem_limit_bytes=32 * 1024 * 1024),
    )(x_flat, tab)

    return out.reshape(N, C, H, W)


# ---------------------------------------------------------------------------
# Pure-JAX reference (lax.conv) for numerical validation.
# ---------------------------------------------------------------------------
def ref_forward(x, params):
    def conv(h, w, pad, b=None):
        y = lax.conv_general_dilated(
            h, w, (1, 1), [(pad, pad), (pad, pad)],
            dimension_numbers=("NCHW", "HWIO", "NCHW"))
        if b is not None:
            y = y + b[None, :, None, None]
        return y

    def norm(h, scale, shift):
        return h * scale[None, :, None, None] + shift[None, :, None, None]

    KB = params["w1"].shape[0]
    KS = params["w1s"].shape[0]
    h = jax.nn.relu(
        norm(conv(x, params["w1"], KB // 2, params["b1"]),
             params["scale1"], params["shift1"])
        + norm(conv(x, params["w1s"], KS // 2),
               params["scale1s"], params["shift1s"]))
    y = (norm(conv(h, params["w2"], KB // 2, params["b2"]),
              params["scale2"], params["shift2"])
         + norm(conv(h, params["w2s"], KS // 2),
                params["scale2s"], params["shift2s"]))
    return jax.nn.relu(y + x)


def trunc_normal(key, shape, std=0.02):
    # trunc_normal_(std=0.02): truncated at +/- 2 std.
    return std * jax.random.truncated_normal(key, -2.0, 2.0, shape, jnp.float32)


if __name__ == "__main__":
    N, C, H, W = 2, 4, 16, 16          # in_channels == out_channels == 4
    KB, KS = 5, 3                      # ConvType kernel, small_kernel_size

    key = jax.random.PRNGKey(0)
    ks = jax.random.split(key, 12)
    x = jax.random.normal(ks[0], (N, C, H, W), jnp.float32)   # PyTorch NCHW

    params = {
        "w1":  trunc_normal(ks[1], (KB, KB, C, C)),   # cconv1  (HWIO)
        "b1":  0.05 * jax.random.normal(ks[2], (C,), jnp.float32),
        "w1s": trunc_normal(ks[3], (KS, KS, C, C)),   # cconv1s (bias=False)
        "w2":  trunc_normal(ks[4], (KB, KB, C, C)),   # cconv2
        "b2":  0.05 * jax.random.normal(ks[5], (C,), jnp.float32),
        "w2s": trunc_normal(ks[6], (KS, KS, C, C)),   # cconv2s (bias=False)
    }

    # BatchNorm2d in eval mode reduces to a per-channel affine:
    #   scale = gamma / sqrt(var + eps),  shift = beta - mean * scale.
    eps = 1e-5

    def bn_eval_affine(k):
        kg, kb, km, kv = jax.random.split(k, 4)
        gamma = 1.0 + 0.1 * jax.random.normal(kg, (C,), jnp.float32)
        beta = 0.1 * jax.random.normal(kb, (C,), jnp.float32)
        mean = 0.1 * jax.random.normal(km, (C,), jnp.float32)
        var = 1.0 + 0.1 * jax.random.uniform(kv, (C,), jnp.float32)
        scale = gamma / jnp.sqrt(var + eps)
        shift = beta - mean * scale
        return scale, shift

    params["scale1"], params["shift1"] = bn_eval_affine(ks[7])
    params["scale1s"], params["shift1s"] = bn_eval_affine(ks[8])
    params["scale2"], params["shift2"] = bn_eval_affine(ks[9])
    params["scale2s"], params["shift2s"] = bn_eval_affine(ks[10])

    fwd = jax.jit(residual_block_forward)
    out = jax.block_until_ready(fwd(x, params))

    ref = ref_forward(x, params)
    assert out.shape == (N, C, H, W)
    np.testing.assert_allclose(np.asarray(out), np.asarray(ref),
                               rtol=1e-4, atol=2e-5)
    print("KERNEL_OK")
</pallas_src>

<mosaic_0001>
module attributes {stable_mosaic.version = 11 : i64} {
  func.func @kernel(%arg0: i32, %arg1: memref<1x4x256xf32, #tpu.memory_space<vmem>>, %arg2: memref<275x4x512xf32, #tpu.memory_space<vmem>>, %arg3: memref<1x4x256xf32, #tpu.memory_space<vmem>>, %arg4: memref<4x768xf32, #tpu.memory_space<vmem>>) attributes {dimension_semantics = [#tpu.dimension_semantics<parallel>], iteration_bounds = array<i64: 2>, scalar_prefetch = 0 : i64, scratch_operands = 1 : i64, tpu.core_type = #tpu.core_type<tc>, window_params = [{transform_indices = @transform_0, window_bounds = array<i64: 1, 4, 256>}, {pipeline_mode = #tpu.pipeline_mode<synchronous>, transform_indices = @transform_1, window_bounds = array<i64: 275, 4, 512>}, {transform_indices = @transform_2, window_bounds = array<i64: 1, 4, 256>}]} {
    %c0 = arith.constant 0 : index
    %c0_0 = arith.constant 0 : index
    %c0_1 = arith.constant 0 : index
    %0 = vector.load %arg1[%c0, %c0_0, %c0_1] : memref<1x4x256xf32, #tpu.memory_space<vmem>>, vector<1x4x256xf32>
    %1 = vector.shape_cast %0 : vector<1x4x256xf32> to vector<4x256xf32>
    %c272 = arith.constant 272 : index
    %c0_2 = arith.constant 0 : index
    %c0_3 = arith.constant 0 : index
    %2 = vector.load %arg2[%c272, %c0_2, %c0_3] : memref<275x4x512xf32, #tpu.memory_space<vmem>>, vector<1x4x512xf32>
    %3 = vector.shape_cast %2 : vector<1x4x512xf32> to vector<4x512xf32>
    %c273 = arith.constant 273 : index
    %c0_4 = arith.constant 0 : index
    %c0_5 = arith.constant 0 : index
    %4 = vector.load %arg2[%c273, %c0_4, %c0_5] : memref<275x4x512xf32, #tpu.memory_space<vmem>>, vector<1x4x512xf32>
    %5 = vector.shape_cast %4 : vector<1x4x512xf32> to vector<4x512xf32>
    %c274 = arith.constant 274 : index
    %c0_6 = arith.constant 0 : index
    %c0_7 = arith.constant 0 : index
    %6 = vector.load %arg2[%c274, %c0_6, %c0_7] : memref<275x4x512xf32, #tpu.memory_space<vmem>>, vector<1x4x512xf32>
    %7 = vector.shape_cast %6 : vector<1x4x512xf32> to vector<4x512xf32>
    %cst = arith.constant 0.000000e+00 : f32
    %8 = vector.broadcast %cst : f32 to vector<4x768xf32>
    %c0_8 = arith.constant 0 : index
    %c0_9 = arith.constant 0 : index
    %9 = vector.load %arg4[%c0_8, %c0_9] : memref<4x768xf32, #tpu.memory_space<vmem>>, vector<4x768xf32>
    tpu.vector_store %arg4[%c0_8, %c0_9], %8 {strides = array<i32>} : memref<4x768xf32, #tpu.memory_space<vmem>>, vector<4x768xf32>,
    %10 = vector.extract_strided_slice %1 {offsets = [0, 0], sizes = [4, 16], strides = [1, 1]} : vector<4x256xf32> to vector<4x16xf32>
    %c0_10 = arith.constant 0 : index
    %c170 = arith.constant 170 : index
    %11 = vector.load %arg4[%c0_10, %c170] : memref<4x768xf32, #tpu.memory_space<vmem>>, vector<4x16xf32>
    tpu.vector_store %arg4[%c0_10, %c170], %10 {strides = array<i32>} : memref<4x768xf32, #tpu.memory_space<vmem>>, vector<4x16xf32>,
    %12 = vector.extract_strided_slice %1 {offsets = [0, 16], sizes = [4, 16], strides = [1, 1]} : vector<4x256xf32> to vector<4x16xf32>
    %c0_11 = arith.constant 0 : index
    %c190 = arith.constant 190 : index
    %13 = vector.load %arg4[%c0_11, %c190] : memref<4x768xf32, #tpu.memory_space<vmem>>, vector<4x16xf32>
    tpu.vector_store %arg4[%c0_11, %c190], %12 {strides = array<i32>} : memref<4x768xf32, #tpu.memory_space<vmem>>, vector<4x16xf32>,
    %14 = vector.extract_strided_slice %1 {offsets = [0, 32], sizes = [4, 16], strides = [1, 1]} : vector<4x256xf32> to vector<4x16xf32>
    %c0_12 = arith.constant 0 : index
    %c210 = arith.constant 210 : index
    %15 = vector.load %arg4[%c0_12, %c210] : memref<4x768xf32, #tpu.memory_space<vmem>>, vector<4x16xf32>
    tpu.vector_store %arg4[%c0_12, %c210], %14 {strides = array<i32>} : memref<4x768xf32, #tpu.memory_space<vmem>>, vector<4x16xf32>,
    %16 = vector.extract_strided_slice %1 {offsets = [0, 48], sizes = [4, 16], strides = [1, 1]} : vector<4x256xf32> to vector<4x16xf32>
    %c0_13 = arith.constant 0 : index
    %c230 = arith.constant 230 : index
    %17 = vector.load %arg4[%c0_13, %c230] : memref<4x768xf32, #tpu.memory_space<vmem>>, vector<4x16xf32>
    tpu.vector_store %arg4[%c0_13, %c230], %16 {strides = array<i32>} : memref<4x768xf32, #tpu.memory_space<vmem>>, vector<4x16xf32>,
    %18 = vector.extract_strided_slice %1 {offsets = [0, 64], sizes = [4, 16], strides = [1, 1]} : vector<4x256xf32> to vector<4x16xf32>
    %c0_14 = arith.constant 0 : index
    %c250 = arith.constant 250 : index
    %19 = vector.load %arg4[%c0_14, %c250] : memref<4x768xf32, #tpu.memory_space<vmem>>, vector<4x16xf32>
    tpu.vector_store %arg4[%c0_14, %c250], %18 {strides = array<i32>} : memref<4x768xf32, #tpu.memory_space<vmem>>, vector<4x16xf32>,
    %20 = vector.extract_strided_slice %1 {offsets = [0, 80], sizes = [4, 16], strides = [1, 1]} : vector<4x256xf32> to vector<4x16xf32>
    %c0_15 = arith.constant 0 : index
    %c270 = arith.constant 270 : index
    %21 = vector.load %arg4[%c0_15, %c270] : memref<4x768xf32, #tpu.memory_space<vmem>>, vector<4x16xf32>
    tpu.vector_store %arg4[%c0_15, %c270], %20 {strides = array<i32>} : memref<4x768xf32, #tpu.memory_space<vmem>>, vector<4x16xf32>,
    %22 = vector.extract_strided_slice %1 {offsets = [0, 96], sizes = [4, 16], strides = [1, 1]} : vector<4x256xf32> to vector<4x16xf32>
    %c0_16 = arith.constant 0 : index
    %c290 = arith.constant 290 : index
    %23 = vector.load %arg4[%c0_16, %c290] : memref<4x768xf32, #tpu.memory_space<vmem>>, vector<4x16xf32>
    tpu.vector_store %arg4[%c0_16, %c290], %22 {strides = array<i32>} : memref<4x768xf32, #tpu.memory_space<vmem>>, vector<4x16xf32>,
    %24 = vector.extract_strided_slice %1 {offsets = [0, 112], sizes = [4, 16], strides = [1, 1]} : vector<4x256xf32> to vector<4x16xf32>
    %c0_17 = arith.constant 0 : index
    %c310 = arith.constant 310 : index
    %25 = vector.load %arg4[%c0_17, %c310] : memref<4x768xf32, #tpu.memory_space<vmem>>, vector<4x16xf32>
    tpu.vector_store %arg4[%c0_17, %c310], %24 {strides = array<i32>} : memref<4x768xf32, #tpu.memory_space<vmem>>, vector<4x16xf32>,
    %26 = vector.extract_strided_slice %1 {offsets = [0, 128], sizes = [4, 16], strides = [1, 1]} : vector<4x256xf32> to vector<4x16xf32>
    %c0_18 = arith.constant 0 : index
    %c330 = arith.constant 330 : index
    %27 = vector.load %arg4[%c0_18, %c330] : memref<4x768xf32, #tpu.memory_space<vmem>>, vector<4x16xf32>
    tpu.vector_store %arg4[%c0_18, %c330], %26 {strides = array<i32>} : memref<4x768xf32, #tpu.memory_space<vmem>>, vector<4x16xf32>,
    %28 = vector.extract_strided_slice %1 {offsets = [0, 144], sizes = [4, 16], strides = [1, 1]} : vector<4x256xf32> to vector<4x16xf32>
    %c0_19 = arith.constant 0 : index
    %c350 = arith.constant 350 : index
    %29 = vector.load %arg4[%c0_19, %c350] : memref<4x768xf32, #tpu.memory_space<vmem>>, vector<4x16xf32>
    tpu.vector_store %arg4[%c0_19, %c350], %28 {strides = array<i32>} : memref<4x768xf32, #tpu.memory_space<vmem>>, vector<4x16xf32>,
    %30 = vector.extract_strided_slice %1 {offsets = [0, 160], sizes = [4, 16], strides = [1, 1]} : vector<4x256xf32> to vector<4x16xf32>
    %c0_20 = arith.constant 0 : index
    %c370 = arith.constant 370 : index
    %31 = vector.load %arg4[%c0_20, %c370] : memref<4x768xf32, #tpu.memory_space<vmem>>, vector<4x16xf32>
    tpu.vector_store %arg4[%c0_20, %c370], %30 {strides = array<i32>} : memref<4x768xf32, #tpu.memory_space<vmem>>, vector<4x16xf32>,
    %32 = vector.extract_strided_slice %1 {offsets = [0, 176], sizes = [4, 16], strides = [1, 1]} : vector<4x256xf32> to vector<4x16xf32>
    %c0_21 = arith.constant 0 : index
    %c390 = arith.constant 390 : index
    %33 = vector.load %arg4[%c0_21, %c390] : memref<4x768xf32, #tpu.memory_space<vmem>>, vector<4x16xf32>
    tpu.vector_store %arg4[%c0_21, %c390], %32 {strides = array<i32>} : memref<4x768xf32, #tpu.memory_space<vmem>>, vector<4x16xf32>,
    %34 = vector.extract_strided_slice %1 {offsets = [0, 192], sizes = [4, 16], strides = [1, 1]} : vector<4x256xf32> to vector<4x16xf32>
    %c0_22 = arith.constant 0 : index
    %c410 = arith.constant 410 : index
    %35 = vector.load %arg4[%c0_22, %c410] : memref<4x768xf32, #tpu.memory_space<vmem>>, vector<4x16xf32>
    tpu.vector_store %arg4[%c0_22, %c410], %34 {strides = array<i32>} : memref<4x768xf32, #tpu.memory_space<vmem>>, vector<4x16xf32>,
    %36 = vector.extract_strided_slice %1 {offsets = [0, 208], sizes = [4, 16], strides = [1, 1]} : vector<4x256xf32> to vector<4x16xf32>
    %c0_23 = arith.constant 0 : index
    %c430 = arith.constant 430 : index
    %37 = vector.load %arg4[%c0_23, %c430] : memref<4x768xf32, #tpu.memory_space<vmem>>, vector<4x16xf32>
    tpu.vector_store %arg4[%c0_23, %c430], %36 {strides = array<i32>} : memref<4x768xf32, #tpu.memory_space<vmem>>, vector<4x16xf32>,
    %38 = vector.extract_strided_slice %1 {offsets = [0, 224], sizes = [4, 16], strides = [1, 1]} : vector<4x256xf32> to vector<4x16xf32>
    %c0_24 = arith.constant 0 : index
    %c450 = arith.constant 450 : index
    %39 = vector.load %arg4[%c0_24, %c450] : memref<4x768xf32, #tpu.memory_space<vmem>>, vector<4x16xf32>
    tpu.vector_store %arg4[%c0_24, %c450], %38 {strides = array<i32>} : memref<4x768xf32, #tpu.memory_space<vmem>>, vector<4x16xf32>,
    %40 = vector.extract_strided_slice %1 {offsets = [0, 240], sizes = [4, 16], strides = [1, 1]} : vector<4x256xf32> to vector<4x16xf32>
    %c0_25 = arith.constant 0 : index
    %c470 = arith.constant 470 : index
    %41 = vector.load %arg4[%c0_25, %c470] : memref<4x768xf32, #tpu.memory_space<vmem>>, vector<4x16xf32>
    tpu.vector_store %arg4[%c0_25, %c470], %40 {strides = array<i32>} : memref<4x768xf32, #tpu.memory_space<vmem>>, vector<4x16xf32>,
    %c0_26 = arith.constant 0 : index
    %c0_27 = arith.constant 0 : index
    %42 = vector.load %arg4[%c0_26, %c0_27] : memref<4x768xf32, #tpu.memory_space<vmem>>, vector<4x768xf32>
    %cst_28 = arith.constant 0.000000e+00 : f32
    %43 = vector.broadcast %cst_28 : f32 to vector<4x512xf32>
    %cst_29 = arith.constant 0.000000e+00 : f32
    %44 = vector.broadcast %cst_29 : f32 to vector<4x512xf32>
    %cst_30 = arith.constant 0.000000e+00 : f32
    %45 = vector.broadcast %cst_30 : f32 to vector<4x512xf32>
    %cst_31 = arith.constant 0.000000e+00 : f32
    %46 = vector.broadcast %cst_31 : f32 to vector<4x512xf32>
    %47 = vector.extract_strided_slice %42 {offsets = [0, 86], sizes = [4, 512], strides = [1, 1]} : vector<4x768xf32> to vector<4x512xf32>
    %c0_32 = arith.constant 0 : index
    %c0_33 = arith.constant 0 : index
    %c0_34 = arith.constant 0 : index
    %48 = vector.load %arg2[%c0_32, %c0_33, %c0_34] : memref<275x4x512xf32, #tpu.memory_space<vmem>>, vector<1x4x512xf32>
    %49 = vector.shape_cast %48 : vector<1x4x512xf32> to vector<4x512xf32>
    %50 = arith.mulf %49, %47 : vector<4x512xf32>
    %51 = arith.addf %43, %50 : vector<4x512xf32>
    %c1 = arith.constant 1 : index
    %c0_35 = arith.constant 0 : index
    %c0_36 = arith.constant 0 : index
    %52 = vector.load %arg2[%c1, %c0_35, %c0_36] : memref<275x4x512xf32, #tpu.memory_space<vmem>>, vector<1x4x512xf32>
    %53 = vector.shape_cast %52 : vector<1x4x512xf32> to vector<4x512xf32>
    %54 = arith.mulf %53, %47 : vector<4x512xf32>
    %55 = arith.addf %44, %54 : vector<4x512xf32>
    %c2 = arith.constant 2 : index
    %c0_37 = arith.constant 0 : index
    %c0_38 = arith.constant 0 : index
    %56 = vector.load %arg2[%c2, %c0_37, %c0_38] : memref<275x4x512xf32, #tpu.memory_space<vmem>>, vector<1x4x512xf32>
    %57 = vector.shape_cast %56 : vector<1x4x512xf32> to vector<4x512xf32>
    %58 = arith.mulf %57, %47 : vector<4x512xf32>
    %59 = arith.addf %45, %58 : vector<4x512xf32>
    %c3 = arith.constant 3 : index
    %c0_39 = arith.constant 0 : index
    %c0_40 = arith.constant 0 : index
    %60 = vector.load %arg2[%c3, %c0_39, %c0_40] : memref<275x4x512xf32, #tpu.memory_space<vmem>>, vector<1x4x512xf32>
    %61 = vector.shape_cast %60 : vector<1x4x512xf32> to vector<4x512xf32>
    %62 = arith.mulf %61, %47 : vector<4x512xf32>
    %63 = arith.addf %46, %62 : vector<4x512xf32>
    %64 = vector.extract_strided_slice %42 {offsets = [0, 87], sizes = [4, 512], strides = [1, 1]} : vector<4x768xf32> to vector<4x512xf32>
    %c4 = arith.constant 4 : index
    %c0_41 = arith.constant 0 : index
    %c0_42 = arith.constant 0 : index
    %65 = vector.load %arg2[%c4, %c0_41, %c0_42] : memref<275x4x512xf32, #tpu.memory_space<vmem>>, vector<1x4x512xf32>
    %66 = vector.shape_cast %65 : vector<1x4x512xf32> to vector<4x512xf32>
    %67 = arith.mulf %66, %64 : vector<4x512xf32>
    %68 = arith.addf %51, %67 : vector<4x512xf32>
    %c5 = arith.constant 5 : index
    %c0_43 = arith.constant 0 : index
    %c0_44 = arith.constant 0 : index
    %69 = vector.load %arg2[%c5, %c0_43, %c0_44] : memref<275x4x512xf32, #tpu.memory_space<vmem>>, vector<1x4x512xf32>
    %70 = vector.shape_cast %69 : vector<1x4x512xf32> to vector<4x512xf32>
    %71 = arith.mulf %70, %64 : vector<4x512xf32>
    %72 = arith.addf %55, %71 : vector<4x512xf32>
    %c6 = arith.constant 6 : index
    %c0_45 = arith.constant 0 : index
    %c0_46 = arith.constant 0 : index
    %73 = vector.load %arg2[%c6, %c0_45, %c0_46] : memref<275x4x512xf32, #tpu.memory_space<vmem>>, vector<1x4x512xf32>
    %74 = vector.shape_cast %73 : vector<1x4x512xf32> to vector<4x512xf32>
    %75 = arith.mulf %74, %64 : vector<4x512xf32>
    %76 = arith.addf %59, %75 : vector<4x512xf32>
    %c7 = arith.constant 7 : index
    %c0_47 = arith.constant 0 : index
    %c0_48 = arith.constant 0 : index
    %77 = vector.load %arg2[%c7, %c0_47, %c0_48] : memref<275x4x512xf32, #tpu.memory_space<vmem>>, vector<1x4x512xf32>
    %78 = vector.shape_cast %77 : vector<1x4x512xf32> to vector<4x512xf32>
    %79 = arith.mulf %78, %64 : vector<4x512xf32>
    %80 = arith.addf %63, %79 : vector<4x512xf32>
    %81 = vector.extract_strided_slice %42 {offsets = [0, 88], sizes = [4, 512], strides = [1, 1]} : vector<4x768xf32> to vector<4x512xf32>
    %c8 = arith.constant 8 : index
    %c0_49 = arith.constant 0 : index
    %c0_50 = arith.constant 0 : index
    %82 = vector.load %arg2[%c8, %c0_49, %c0_50] : memref<275x4x512xf32, #tpu.memory_space<vmem>>, vector<1x4x512xf32>
    %83 = vector.shape_cast %82 : vector<1x4x512xf32> to vector<4x512xf32>
    %84 = arith.mulf %83, %81 : vector<4x512xf32>
    %85 = arith.addf %68, %84 : vector<4x512xf32>
    %c9 = arith.constant 9 : index
    %c0_51 = arith.constant 0 : index
    %c0_52 = arith.constant 0 : index
    %86 = vector.load %arg2[%c9, %c0_51, %c0_52] : memref<275x4x512xf32, #tpu.memory_space<vmem>>, vector<1x4x512xf32>
    %87 = vector.shape_cast %86 : vector<1x4x512xf32> to vector<4x512xf32>
    %88 = arith.mulf %87, %81 : vector<4x512xf32>
    %89 = arith.addf %72, %88 : vector<4x512xf32>
    %c10 = arith.constant 10 : index
    %c0_53 = arith.constant 0 : index
    %c0_54 = arith.constant 0 : index
    %90 = vector.load %arg2[%c10, %c0_53, %c0_54] : memref<275x4x512xf32, #tpu.memory_space<vmem>>, vector<1x4x512xf32>
    %91 = vector.shape_cast %90 : vector<1x4x512xf32> to vector<4x512xf32>
    %92 = arith.mulf %91, %81 : vector<4x512xf32>
    %93 = arith.addf %76, %92 : vector<4x512xf32>
    %c11 = arith.constant 11 : index
    %c0_55 = arith.constant 0 : index
    %c0_56 = arith.constant 0 : index
    %94 = vector.load %arg2[%c11, %c0_55, %c0_56] : memref<275x4x512xf32, #tpu.memory_space<vmem>>, vector<1x4x512xf32>
    %95 = vector.shape_cast %94 : vector<1x4x512xf32> to vector<4x512xf32>
    %96 = arith.mulf %95, %81 : vector<4x512xf32>
    %97 = arith.addf %80, %96 : vector<4x512xf32>
    %98 = vector.extract_strided_slice %42 {offsets = [0, 89], sizes = [4, 512], strides = [1, 1]} : vector<4x768xf32> to vector<4x512xf32>
    %c12 = arith.constant 12 : index
    %c0_57 = arith.constant 0 : index
    %c0_58 = arith.constant 0 : index
    %99 = vector.load %arg2[%c12, %c0_57, %c0_58] : memref<275x4x512xf32, #tpu.memory_space<vmem>>, vector<1x4x512xf32>
    %100 = vector.shape_cast %99 : vector<1x4x512xf32> to vector<4x512xf32>
    %101 = arith.mulf %100, %98 : vector<4x512xf32>
    %102 = arith.addf %85, %101 : vector<4x512xf32>
    %c13 = arith.constant 13 : index
    %c0_59 = arith.constant 0 : index
    %c0_60 = arith.constant 0 : index
    %103 = vector.load %arg2[%c13, %c0_59, %c0_60] : memref<275x4x512xf32, #tpu.memory_space<vmem>>, vector<1x4x512xf32>
    %104 = vector.shape_cast %103 : vector<1x4x512xf32> to vector<4x512xf32>
    %105 = arith.mulf %104, %98 : vector<4x512xf32>
    %106 = arith.addf %89, %105 : vector<4x512xf32>
    %c14 = arith.constant 14 : index
    %c0_61 = arith.constant 0 : index
    %c0_62 = arith.constant 0 : index
    %107 = vector.load %arg2[%c14, %c0_61, %c0_62] : memref<275x4x512xf32, #tpu.memory_space<vmem>>, vector<1x4x512xf32>
    %108 = vector.shape_cast %107 : vector<1x4x512xf32> to vector<4x512xf32>
    %109 = arith.mulf %108, %98 : vector<4x512xf32>
    %110 = arith.addf %93, %109 : vector<4x512xf32>
    %c15 = arith.constant 15 : index
    %c0_63 = arith.constant 0 : index
    %c0_64 = arith.constant 0 : index
    %111 = vector.load %arg2[%c15, %c0_63, %c0_64] : memref<275x4x512xf32, #tpu.memory_space<vmem>>, vector<1x4x512xf32>
    %112 = vector.shape_cast %111 : vector<1x4x512xf32> to vector<4x512xf32>
    %113 = arith.mulf %112, %98 : vector<4x512xf32>
    %114 = arith.addf %97, %113 : vector<4x512xf32>
    %115 = vector.extract_strided_slice %42 {offsets = [0, 90], sizes = [4, 512], strides = [1, 1]} : vector<4x768xf32> to vector<4x512xf32>
    %c16 = arith.constant 16 : index
    %c0_65 = arith.constant 0 : index
    %c0_66 = arith.constant 0 : index
    %116 = vector.load %arg2[%c16, %c0_65, %c0_66] : memref<275x4x512xf32, #tpu.memory_space<vmem>>, vector<1x4x512xf32>
    %117 = vector.shape_cast %116 : vector<1x4x512xf32> to vector<4x512xf32>
    %118 = arith.mulf %117, %115 : vector<4x512xf32>
    %119 = arith.addf %102, %118 : vector<4x512xf32>
    %c17 = arith.constant 17 : index
    %c0_67 = arith.constant 0 : index
    %c0_68 = arith.constant 0 : index
    %120 = vector.load %arg2[%c17, %c0_67, %c0_68] : memref<275x4x512xf32, #tpu.memory_space<vmem>>, vector<1x4x512xf32>
    %121 = vector.shape_cast %120 : vector<1x4x512xf32> to vector<4x512xf32>
    %122 = arith.mulf %121, %115 : vector<4x512xf32>
    %123 = arith.addf %106, %122 : vector<4x512xf32>
    %c18 = arith.constant 18 : index
    %c0_69 = arith.constant 0 : index
    %c0_70 = arith.constant 0 : index
    %124 = vector.load %arg2[%c18, %c0_69, %c0_70] : memref<275x4x512xf32, #tpu.memory_space<vmem>>, vector<1x4x512xf32>
    %125 = vector.shape_cast %124 : vector<1x4x512xf32> to vector<4x512xf32>
    %126 = arith.mulf %125, %115 : vector<4x512xf32>
    %127 = arith.addf %110, %126 : vector<4x512xf32>
    %c19 = arith.constant 19 : index
    %c0_71 = arith.constant 0 : index
    %c0_72 = arith.constant 0 : index
    %128 = vector.load %arg2[%c19, %c0_71, %c0_72] : memref<275x4x512xf32, #tpu.memory_space<vmem>>, vector<1x4x512xf32>
    %129 = vector.shape_cast %128 : vector<1x4x512xf32> to vector<4x512xf32>
    %130 = arith.mulf %129, %115 : vector<4x512xf32>
    %131 = arith.addf %114, %130 : vector<4x512xf32>
    %132 = vector.extract_strided_slice %42 {offsets = [0, 106], sizes = [4, 512], strides = [1, 1]} : vector<4x768xf32> to vector<4x512xf32>
    %c20 = arith.constant 20 : index
    %c0_73 = arith.constant 0 : index
    %c0_74 = arith.constant 0 : index
    %133 = vector.load %arg2[%c20, %c0_73, %c0_74] : memref<275x4x512xf32, #tpu.memory_space<vmem>>, vector<1x4x512xf32>
    %134 = vector.shape_cast %133 : vector<1x4x512xf32> to vector<4x512xf32>
    %135 = arith.mulf %134, %132 : vector<4x512xf32>
    %136 = arith.addf %119, %135 : vector<4x512xf32>
    %c21 = arith.constant 21 : index
    %c0_75 = arith.constant 0 : index
    %c0_76 = arith.constant 0 : index
    %137 = vector.load %arg2[%c21, %c0_75, %c0_76] : memref<275x4x512xf32, #tpu.memory_space<vmem>>, vector<1x4x512xf32>
    %138 = vector.shape_cast %137 : vector<1x4x512xf32> to vector<4x512xf32>
    %139 = arith.mulf %138, %132 : vector<4x512xf32>
    %140 = arith.addf %123, %139 : vector<4x512xf32>
    %c22 = arith.constant 22 : index
    %c0_77 = arith.constant 0 : index
    %c0_78 = arith.constant 0 : index
    %141 = vector.load %arg2[%c22, %c0_77, %c0_78] : memref<275x4x512xf32, #tpu.memory_space<vmem>>, vector<1x4x512xf32>
    %142 = vector.shape_cast %141 : vector<1x4x512xf32> to vector<4x512xf32>
    %143 = arith.mulf %142, %132 : vector<4x512xf32>
    %144 = arith.addf %127, %143 : vector<4x512xf32>
    %c23 = arith.constant 23 : index
    %c0_79 = arith.constant 0 : index
    %c0_80 = arith.constant 0 : index
    %145 = vector.load %arg2[%c23, %c0_79, %c0_80] : memref<275x4x512xf32, #tpu.memory_space<vmem>>, vector<1x4x512xf32>
    %146 = vector.shape_cast %145 : vector<1x4x512xf32> to vector<4x512xf32>
    %147 = arith.mulf %146, %132 : vector<4x512xf32>
    %148 = arith.addf %131, %147 : vector<4x512xf32>
    %149 = vector.extract_strided_slice %42 {offsets = [0, 107], sizes = [4, 512], strides = [1, 1]} : vector<4x768xf32> to vector<4x512xf32>
    %c24 = arith.constant 24 : index
    %c0_81 = arith.constant 0 : index
    %c0_82 = arith.constant 0 : index
    %150 = vector.load %arg2[%c24, %c0_81, %c0_82] : memref<275x4x512xf32, #tpu.memory_space<vmem>>, vector<1x4x512xf32>
    %151 = vector.shape_cast %150 : vector<1x4x512xf32> to vector<4x512xf32>
    %152 = arith.mulf %151, %149 : vector<4x512xf32>
    %153 = arith.addf %136, %152 : vector<4x512xf32>
    %c25 = arith.constant 25 : index
    %c0_83 = arith.constant 0 : index
    %c0_84 = arith.constant 0 : index
    %154 = vector.load %arg2[%c25, %c0_83, %c0_84] : memref<275x4x512xf32, #tpu.memory_space<vmem>>, vector<1x4x512xf32>
    %155 = vector.shape_cast %154 : vector<1x4x512xf32> to vector<4x512xf32>
    %156 = arith.mulf %155, %149 : vector<4x512xf32>
    %157 = arith.addf %140, %156 : vector<4x512xf32>
    %c26 = arith.constant 26 : index
    %c0_85 = arith.constant 0 : index
    %c0_86 = arith.constant 0 : index
    %158 = vector.load %arg2[%c26, %c0_85, %c0_86] : memref<275x4x512xf32, #tpu.memory_space<vmem>>, vector<1x4x512xf32>
    %159 = vector.shape_cast %158 : vector<1x4x512xf32> to vector<4x512xf32>
    %160 = arith.mulf %159, %149 : vector<4x512xf32>
    %161 = arith.addf %144, %160 : vector<4x512xf32>
    %c27 = arith.constant 27 : index
    %c0_87 = arith.constant 0 : index
    %c0_88 = arith.constant 0 : index
    %162 = vector.load %arg2[%c27, %c0_87, %c0_88] : memref<275x4x512xf32, #tpu.memory_space<vmem>>, vector<1x4x512xf32>
    %163 = vector.shape_cast %162 : vector<1x4x512xf32> to vector<4x512xf32>
    %164 = arith.mulf %163, %149 : vector<4x512xf32>
    %165 = arith.addf %148, %164 : vector<4x512xf32>
    %166 = vector.extract_strided_slice %42 {offsets = [0, 108], sizes = [4, 512], strides = [1, 1]} : vector<4x768xf32> to vector<4x512xf32>
    %c28 = arith.constant 28 : index
    %c0_89 = arith.constant 0 : index
    %c0_90 = arith.constant 0 : index
    %167 = vector.load %arg2[%c28, %c0_89, %c0_90] : memref<275x4x512xf32, #tpu.memory_space<vmem>>, vector<1x4x512xf32>
    %168 = vector.shape_cast %167 : vector<1x4x512xf32> to vector<4x512xf32>
    %169 = arith.mulf %168, %166 : vector<4x512xf32>
    %170 = arith.addf %153, %169 : vector<4x512xf32>
    %c29 = arith.constant 29 : index
    %c0_91 = arith.constant 0 : index
    %c0_92 = arith.constant 0 : index
    %171 = vector.load %arg2[%c29, %c0_91, %c0_92] : memref<275x4x512xf32, #tpu.memory_space<vmem>>, vector<1x4x512xf32>
    %172 = vector.shape_cast %171 : vector<1x4x512xf32> to vector<4x512xf32>
    %173 = arith.mulf %172, %166 : vector<4x512xf32>
    %174 = arith.addf %157, %173 : vector<4x512xf32>
    %c30 = arith.constant 30 : index
    %c0_93 = arith.constant 0 : index
    %c0_94 = arith.constant 0 : index
    %175 = vector.load %arg2[%c30, %c0_93, %c0_94] : memref<275x4x512xf32, #tpu.memory_space<vmem>>, vector<1x4x512xf32>
    %176 = vector.shape_cast %175 : vector<1x4x512xf32> to vector<4x512xf32>
    %177 = arith.mulf %176, %166 : vector<4x512xf32>
    %178 = arith.addf %161, %177 : vector<4x512xf32>
    %c31 = arith.constant 31 : index
    %c0_95 = arith.constant 0 : index
    %c0_96 = arith.constant 0 : index
    %179 = vector.load %arg2[%c31, %c0_95, %c0_96] : memref<275x4x512xf32, #tpu.memory_space<vmem>>, vector<1x4x512xf32>
    %180 = vector.shape_cast %179 : vector<1x4x512xf32> to vector<4x512xf32>
    %181 = arith.mulf %180, %166 : vector<4x512xf32>
    %182 = arith.addf %165, %181 : vector<4x512xf32>
    %183 = vector.extract_strided_slice %42 {offsets = [0, 109], sizes = [4, 512], strides = [1, 1]} : vector<4x768xf32> to vector<4x512xf32>
    %c32 = arith.constant 32 : index
    %c0_97 = arith.constant 0 : index
    %c0_98 = arith.constant 0 : index
    %184 = vector.load %arg2[%c32, %c0_97, %c0_98] : memref<275x4x512xf32, #tpu.memory_space<vmem>>, vector<1x4x512xf32>
    %185 = vector.shape_cast %184 : vector<1x4x512xf32> to vector<4x512xf32>
    %186 = arith.mulf %185, %183 : vector<4x512xf32>
    %187 = arith.addf %170, %186 : vector<4x512xf32>
    %c33 = arith.constant 33 : index
    %c0_99 = arith.constant 0 : index
    %c0_100 = arith.constant 0 : index
    %188 = vector.load %arg2[%c33, %c0_99, %c0_100] : memref<275x4x512xf32, #tpu.memory_space<vmem>>, vector<1x4x512xf32>
    %189 = vector.shape_cast %188 : vector<1x4x512xf32> to vector<4x512xf32>
    %190 = arith.mulf %189, %183 : vector<4x512xf32>
    %191 = arith.addf %174, %190 : vector<4x512xf32>
    %c34 = arith.constant 34 : index
    %c0_101 = arith.constant 0 : index
    %c0_102 = arith.constant 0 : index
    %192 = vector.load %arg2[%c34, %c0_101, %c0_102] : memref<275x4x512xf32, #tpu.memory_space<vmem>>, vector<1x4x512xf32>
    %193 = vector.shape_cast %192 : vector<1x4x512xf32> to vector<4x512xf32>
    %194 = arith.mulf %193, %183 : vector<4x512xf32>
    %195 = arith.addf %178, %194 : vector<4x512xf32>
    %c35 = arith.constant 35 : index
    %c0_103 = arith.constant 0 : index
    %c0_104 = arith.constant 0 : index
    %196 = vector.load %arg2[%c35, %c0_103, %c0_104] : memref<275x4x512xf32, #tpu.memory_space<vmem>>, vector<1x4x512xf32>
    %197 = vector.shape_cast %196 : vector<1x4x512xf32> to vector<4x512xf32>
    %198 = arith.mulf %197, %183 : vector<4x512xf32>
    %199 = arith.addf %182, %198 : vector<4x512xf32>
    %200 = vector.extract_strided_slice %42 {offsets = [0, 110], sizes = [4, 512], strides = [1, 1]} : vector<4x768xf32> to vector<4x512xf32>
    %c36 = arith.constant 36 : index
    %c0_105 = arith.constant 0 : index
    %c0_106 = arith.constant 0 : index
    %201 = vector.load %arg2[%c36, %c0_105, %c0_106] : memref<275x4x512xf32, #tpu.memory_space<vmem>>, vector<1x4x512xf32>
    %202 = vector.shape_cast %201 : vector<1x4x512xf32> to vector<4x512xf32>
    %203 = arith.mulf %202, %200 : vector<4x512xf32>
    %204 = arith.addf %187, %203 : vector<4x512xf32>
    %c37 = arith.constant 37 : index
    %c0_107 = arith.constant 0 : index
    %c0_108 = arith.constant 0 : index
    %205 = vector.load %arg2[%c37, %c0_107, %c0_108] : memref<275x4x512xf32, #tpu.memory_space<vmem>>, vector<1x4x512xf32>
    %206 = vector.shape_cast %205 : vector<1x4x512xf32> to vector<4x512xf32>
    %207 = arith.mulf %206, %200 : vector<4x512xf32>
    %208 = arith.addf %191, %207 : vector<4x512xf32>
    %c38 = arith.constant 38 : index
    %c0_109 = arith.constant 0 : index
    %c0_110 = arith.constant 0 : index
    %209 = vector.load %arg2[%c38, %c0_109, %c0_110] : memref<275x4x512xf32, #tpu.memory_space<vmem>>, vector<1x4x512xf32>
    %210 = vector.shape_cast %209 : vector<1x4x512xf32> to vector<4x512xf32>
    %211 = arith.mulf %210, %200 : vector<4x512xf32>
    %212 = arith.addf %195, %211 : vector<4x512xf32>
    %c39 = arith.constant 39 : index
    %c0_111 = arith.constant 0 : index
    %c0_112 = arith.constant 0 : index
    %213 = vector.load %arg2[%c39, %c0_111, %c0_112] : memref<275x4x512xf32, #tpu.memory_space<vmem>>, vector<1x4x512xf32>
    %214 = vector.shape_cast %213 : vector<1x4x512xf32> to vector<4x512xf32>
    %215 = arith.mulf %214, %200 : vector<4x512xf32>
    %216 = arith.addf %199, %215 : vector<4x512xf32>
    %217 = vector.extract_strided_slice %42 {offsets = [0, 126], sizes = [4, 512], strides = [1, 1]} : vector<4x768xf32> to vector<4x512xf32>
    %c40 = arith.constant 40 : index
    %c0_113 = arith.constant 0 : index
    %c0_114 = arith.constant 0 : index
    %218 = vector.load %arg2[%c40, %c0_113, %c0_114] : memref<275x4x512xf32, #tpu.memory_space<vmem>>, vector<1x4x512xf32>
    %219 = vector.shape_cast %218 : vector<1x4x512xf32> to vector<4x512xf32>
    %220 = arith.mulf %219, %217 : vector<4x512xf32>
    %221 = arith.addf %204, %220 : vector<4x512xf32>
    %c41 = arith.constant 41 : index
    %c0_115 = arith.constant 0 : index
    %c0_116 = arith.constant 0 : index
    %222 = vector.load %arg2[%c41, %c0_115, %c0_116] : memref<275x4x512xf32, #tpu.memory_space<vmem>>, vector<1x4x512xf32>
    %223 = vector.shape_cast %222 : vector<1x4x512xf32> to vector<4x512xf32>
    %224 = arith.mulf %223, %217 : vector<4x512xf32>
    %225 = arith.addf %208, %224 : vector<4x512xf32>
    %c42 = arith.constant 42 : index
    %c0_117 = arith.constant 0 : index
    %c0_118 = arith.constant 0 : index
    %226 = vector.load %arg2[%c42, %c0_117, %c0_118] : memref<275x4x512xf32, #tpu.memory_space<vmem>>, vector<1x4x512xf32>
    %227 = vector.shape_cast %226 : vector<1x4x512xf32> to vector<4x512xf32>
    %228 = arith.mulf %227, %217 : vector<4x512xf32>
    %229 = arith.addf %212, %228 : vector<4x512xf32>
    %c43 = arith.constant 43 : index
    %c0_119 = arith.constant 0 : index
    %c0_120 = arith.constant 0 : index
    %230 = vector.load %arg2[%c43, %c0_119, %c0_120] : memref<275x4x512xf32, #tpu.memory_space<vmem>>, vector<1x4x512xf32>
    %231 = vector.shape_cast %230 : vector<1x4x512xf32> to vector<4x512xf32>
    %232 = arith.mulf %231, %217 : vector<4x512xf32>
    %233 = arith.addf %216, %232 : vector<4x512xf32>
    %234 = vector.extract_strided_slice %42 {offsets = [0, 127], sizes = [4, 512], strides = [1, 1]} : vector<4x768xf32> to vector<4x512xf32>
    %c44 = arith.constant 44 : index
    %c0_121 = arith.constant 0 : index
    %c0_122 = arith.constant 0 : index
    %235 = vector.load %arg2[%c44, %c0_121, %c0_122] : memref<275x4x512xf32, #tpu.memory_space<vmem>>, vector<1x4x512xf32>
    %236 = vector.shape_cast %235 : vector<1x4x512xf32> to vector<4x512xf32>
    %237 = arith.mulf %236, %234 : vector<4x512xf32>
    %238 = arith.addf %221, %237 : vector<4x512xf32>
    %c45 = arith.constant 45 : index
    %c0_123 = arith.constant 0 : index
    %c0_124 = arith.constant 0 : index
    %239 = vector.load %arg2[%c45, %c0_123, %c0_124] : memref<275x4x512xf32, #tpu.memory_space<vmem>>, vector<1x4x512xf32>
    %240 = vector.shape_cast %239 : vector<1x4x512xf32> to vector<4x512xf32>
    %241 = arith.mulf %240, %234 : vector<4x512xf32>
    %242 = arith.addf %225, %241 : vector<4x512xf32>
    %c46 = arith.constant 46 : index
    %c0_125 = arith.constant 0 : index
    %c0_126 = arith.constant 0 : index
    %243 = vector.load %arg2[%c46, %c0_125, %c0_126] : memref<275x4x512xf32, #tpu.memory_space<vmem>>, vector<1x4x512xf32>
    %244 = vector.shape_cast %243 : vector<1x4x512xf32> to vector<4x512xf32>
    %245 = arith.mulf %244, %234 : vector<4x512xf32>
    %246 = arith.addf %229, %245 : vector<4x512xf32>
    %c47 = arith.constant 47 : index
    %c0_127 = arith.constant 0 : index
    %c0_128 = arith.constant 0 : index
    %247 = vector.load %arg2[%c47, %c0_127, %c0_128] : memref<275x4x512xf32, #tpu.memory_space<vmem>>, vector<1x4x512xf32>
    %248 = vector.shape_cast %247 : vector<1x4x512xf32> to vector<4x512xf32>
    %249 = arith.mulf %248, %234 : vector<4x512xf32>
    %250 = arith.addf %233, %249 : vector<4x512xf32>
    %251 = vector.extract_strided_slice %42 {offsets = [0, 128], sizes = [4, 512], strides = [1, 1]} : vector<4x768xf32> to vector<4x512xf32>
    %c48 = arith.constant 48 : index
    %c0_129 = arith.constant 0 : index
    %c0_130 = arith.constant 0 : index
    %252 = vector.load %arg2[%c48, %c0_129, %c0_130] : memref<275x4x512xf32, #tpu.memory_space<vmem>>, vector<1x4x512xf32>
    %253 = vector.shape_cast %252 : vector<1x4x512xf32> to vector<4x512xf32>
    %254 = arith.mulf %253, %251 : vector<4x512xf32>
    %255 = arith.addf %238, %254 : vector<4x512xf32>
    %c49 = arith.constant 49 : index
    %c0_131 = arith.constant 0 : index
    %c0_132 = arith.constant 0 : index
    %256 = vector.load %arg2[%c49, %c0_131, %c0_132] : memref<275x4x512xf32, #tpu.memory_space<vmem>>, vector<1x4x512xf32>
    %257 = vector.shape_cast %256 : vector<1x4x512xf32> to vector<4x512xf32>
    %258 = arith.mulf %257, %251 : vector<4x512xf32>
    %259 = arith.addf %242, %258 : vector<4x512xf32>
    %c50 = arith.constant 50 : index
    %c0_133 = arith.constant 0 : index
    %c0_134 = arith.constant 0 : index
    %260 = vector.load %arg2[%c50, %c0_133, %c0_134] : memref<275x4x512xf32, #tpu.memory_space<vmem>>, vector<1x4x512xf32>
    %261 = vector.shape_cast %260 : vector<1x4x512xf32> to vector<4x512xf32>
    %262 = arith.mulf %261, %251 : vector<4x512xf32>
    %263 = arith.addf %246, %262 : vector<4x512xf32>
    %c51 = arith.constant 51 : index
    %c0_135 = arith.constant 0 : index
    %c0_136 = arith.constant 0 : index
    %264 = vector.load %arg2[%c51, %c0_135, %c0_136] : memref<275x4x512xf32, #tpu.memory_space<vmem>>, vector<1x4x512xf32>
    %265 = vector.shape_cast %264 : vector<1x4x512xf32> to vector<4x512xf32>
    %266 = arith.mulf %265, %251 : vector<4x512xf32>
    %267 = arith.addf %250, %266 : vector<4x512xf32>
    %268 = vector.extract_strided_slice %42 {offsets = [0, 129], sizes = [4, 512], strides = [1, 1]} : vector<4x768xf32> to vector<4x512xf32>
    %c52 = arith.constant 52 : index
    %c0_137 = arith.constant 0 : index
    %c0_138 = arith.constant 0 : index
    %269 = vector.load %arg2[%c52, %c0_137, %c0_138] : memref<275x4x512xf32, #tpu.memory_space<vmem>>, vector<1x4x512xf32>
    %270 = vector.shape_cast %269 : vector<1x4x512xf32> to vector<4x512xf32>
    %271 = arith.mulf %270, %268 : vector<4x512xf32>
    %272 = arith.addf %255, %271 : vector<4x512xf32>
    %c53 = arith.constant 53 : index
    %c0_139 = arith.constant 0 : index
    %c0_140 = arith.constant 0 : index
    %273 = vector.load %arg2[%c53, %c0_139, %c0_140] : memref<275x4x512xf32, #tpu.memory_space<vmem>>, vector<1x4x512xf32>
    %274 = vector.shape_cast %273 : vector<1x4x512xf32> to vector<4x512xf32>
    %275 = arith.mulf %274, %268 : vector<4x512xf32>
    %276 = arith.addf %259, %275 : vector<4x512xf32>
    %c54 = arith.constant 54 : index
    %c0_141 = arith.constant 0 : index
    %c0_142 = arith.constant 0 : index
    %277 = vector.load %arg2[%c54, %c0_141, %c0_142] : memref<275x4x512xf32, #tpu.memory_space<vmem>>, vector<1x4x512xf32>
    %278 = vector.shape_cast %277 : vector<1x4x512xf32> to vector<4x512xf32>
    %279 = arith.mulf %278, %268 : vector<4x512xf32>
    %280 = arith.addf %263, %279 : vector<4x512xf32>
    %c55 = arith.constant 55 : index
    %c0_143 = arith.constant 0 : index
    %c0_144 = arith.constant 0 : index
    %281 = vector.load %arg2[%c55, %c0_143, %c0_144] : memref<275x4x512xf32, #tpu.memory_space<vmem>>, vector<1x4x512xf32>
    %282 = vector.shape_cast %281 : vector<1x4x512xf32> to vector<4x512xf32>
    %283 = arith.mulf %282, %268 : vector<4x512xf32>
    %284 = arith.addf %267, %283 : vector<4x512xf32>
    %285 = vector.extract_strided_slice %42 {offsets = [0, 130], sizes = [4, 512], strides = [1, 1]} : vector<4x768xf32> to vector<4x512xf32>
    %c56 = arith.constant 56 : index
    %c0_145 = arith.constant 0 : index
    %c0_146 = arith.constant 0 : index
    %286 = vector.load %arg2[%c56, %c0_145, %c0_146] : memref<275x4x512xf32, #tpu.memory_space<vmem>>, vector<1x4x512xf32>
    %287 = vector.shape_cast %286 : vector<1x4x512xf32> to vector<4x512xf32>
    %288 = arith.mulf %287, %285 : vector<4x512xf32>
    %289 = arith.addf %272, %288 : vector<4x512xf32>
    %c57 = arith.constant 57 : index
    %c0_147 = arith.constant 0 : index
    %c0_148 = arith.constant 0 : index
    %290 = vector.load %arg2[%c57, %c0_147, %c0_148] : memref<275x4x512xf32, #tpu.memory_space<vmem>>, vector<1x4x512xf32>
    %291 = vector.shape_cast %290 : vector<1x4x512xf32> to vector<4x512xf32>
    %292 = arith.mulf %291, %285 : vector<4x512xf32>
    %293 = arith.addf %276, %292 : vector<4x512xf32>
    %c58 = arith.constant 58 : index
    %c0_149 = arith.constant 0 : index
    %c0_150 = arith.constant 0 : index
    %294 = vector.load %arg2[%c58, %c0_149, %c0_150] : memref<275x4x512xf32, #tpu.memory_space<vmem>>, vector<1x4x512xf32>
    %295 = vector.shape_cast %294 : vector<1x4x512xf32> to vector<4x512xf32>
    %296 = arith.mulf %295, %285 : vector<4x512xf32>
    %297 = arith.addf %280, %296 : vector<4x512xf32>
    %c59 = arith.constant 59 : index
    %c0_151 = arith.constant 0 : index
    %c0_152 = arith.constant 0 : index
    %298 = vector.load %arg2[%c59, %c0_151, %c0_152] : memref<275x4x512xf32, #tpu.memory_space<vmem>>, vector<1x4x512xf32>
    %299 = vector.shape_cast %298 : vector<1x4x512xf32> to vector<4x512xf32>
    %300 = arith.mulf %299, %285 : vector<4x512xf32>
    %301 = arith.addf %284, %300 : vector<4x512xf32>
    %302 = vector.extract_strided_slice %42 {offsets = [0, 146], sizes = [4, 512], strides = [1, 1]} : vector<4x768xf32> to vector<4x512xf32>
    %c60 = arith.constant 60 : index
    %c0_153 = arith.constant 0 : index
    %c0_154 = arith.constant 0 : index
    %303 = vector.load %arg2[%c60, %c0_153, %c0_154] : memref<275x4x512xf32, #tpu.memory_space<vmem>>, vector<1x4x512xf32>
    %304 = vector.shape_cast %303 : vector<1x4x512xf32> to vector<4x512xf32>
    %305 = arith.mulf %304, %302 : vector<4x512xf32>
    %306 = arith.addf %289, %305 : vector<4x512xf32>
    %c61 = arith.constant 61 : index
    %c0_155 = arith.constant 0 : index
    %c0_156 = arith.constant 0 : index
    %307 = vector.load %arg2[%c61, %c0_155, %c0_156] : memref<275x4x512xf32, #tpu.memory_space<vmem>>, vector<1x4x512xf32>
    %308 = vector.shape_cast %307 : vector<1x4x512xf32> to vector<4x512xf32>
    %309 = arith.mulf %308, %302 : vector<4x512xf32>
    %310 = arith.addf %293, %309 : vector<4x512xf32>
    %c62 = arith.constant 62 : index
    %c0_157 = arith.constant 0 : index
    %c0_158 = arith.constant 0 : index
    %311 = vector.load %arg2[%c62, %c0_157, %c0_158] : memref<275x4x512xf32, #tpu.memory_space<vmem>>, vector<1x4x512xf32>
    %312 = vector.shape_cast %311 : vector<1x4x512xf32> to vector<4x512xf32>
    %313 = arith.mulf %312, %302 : vector<4x512xf32>
    %314 = arith.addf %297, %313 : vector<4x512xf32>
    %c63 = arith.constant 63 : index
    %c0_159 = arith.constant 0 : index
    %c0_160 = arith.constant 0 : index
    %315 = vector.load %arg2[%c63, %c0_159, %c0_160] : memref<275x4x512xf32, #tpu.memory_space<vmem>>, vector<1x4x512xf32>
    %316 = vector.shape_cast %315 : vector<1x4x512xf32> to vector<4x512xf32>
    %317 = arith.mulf %316, %302 : vector<4x512xf32>
    %318 = arith.addf %301, %317 : vector<4x512xf32>
    %319 = vector.extract_strided_slice %42 {offsets = [0, 147], sizes = [4, 512], strides = [1, 1]} : vector<4x768xf32> to vector<4x512xf32>
    %c64 = arith.constant 64 : index
    %c0_161 = arith.constant 0 : index
    %c0_162 = arith.constant 0 : index
    %320 = vector.load %arg2[%c64, %c0_161, %c0_162] : memref<275x4x512xf32, #tpu.memory_space<vmem>>, vector<1x4x512xf32>
    %321 = vector.shape_cast %320 : vector<1x4x512xf32> to vector<4x512xf32>
    %322 = arith.mulf %321, %319 : vector<4x512xf32>
    %323 = arith.addf %306, %322 : vector<4x512xf32>
    %c65 = arith.constant 65 : index
    %c0_163 = arith.constant 0 : index
    %c0_164 = arith.constant 0 : index
    %324 = vector.load %arg2[%c65, %c0_163, %c0_164] : memref<275x4x512xf32, #tpu.memory_space<vmem>>, vector<1x4x512xf32>
    %325 = vector.shape_cast %324 : vector<1x4x512xf32> to vector<4x512xf32>
    %326 = arith.mulf %325, %319 : vector<4x512xf32>
    %327 = arith.addf %310, %326 : vector<4x512xf32>
    %c66 = arith.constant 66 : index
    %c0_165 = arith.constant 0 : index
    %c0_166 = arith.constant 0 : index
    %328 = vector.load %arg2[%c66, %c0_165, %c0_166] : memref<275x4x512xf32, #tpu.memory_space<vmem>>, vector<1x4x512xf32>
    %329 = vector.shape_cast %328 : vector<1x4x512xf32> to vector<4x512xf32>
    %330 = arith.mulf %329, %319 : vector<4x512xf32>
    %331 = arith.addf %314, %330 : vector<4x512xf32>
    %c67 = arith.constant 67 : index
    %c0_167 = arith.constant 0 : index
    %c0_168 = arith.constant 0 : index
    %332 = vector.load %arg2[%c67, %c0_167, %c0_168] : memref<275x4x512xf32, #tpu.memory_space<vmem>>, vector<1x4x512xf32>
    %333 = vector.shape_cast %332 : vector<1x4x512xf32> to vector<4x512xf32>
    %334 = arith.mulf %333, %319 : vector<4x512xf32>
    %335 = arith.addf %318, %334 : vector<4x512xf32>
    %336 = vector.extract_strided_slice %42 {offsets = [0, 148], sizes = [4, 512], strides = [1, 1]} : vector<4x768xf32> to vector<4x512xf32>
    %c68 = arith.constant 68 : index
    %c0_169 = arith.constant 0 : index
    %c0_170 = arith.constant 0 : index
    %337 = vector.load %arg2[%c68, %c0_169, %c0_170] : memref<275x4x512xf32, #tpu.memory_space<vmem>>, vector<1x4x512xf32>
    %338 = vector.shape_cast %337 : vector<1x4x512xf32> to vector<4x512xf32>
    %339 = arith.mulf %338, %336 : vector<4x512xf32>
    %340 = arith.addf %323, %339 : vector<4x512xf32>
    %c69 = arith.constant 69 : index
    %c0_171 = arith.constant 0 : index
    %c0_172 = arith.constant 0 : index
    %341 = vector.load %arg2[%c69, %c0_171, %c0_172] : memref<275x4x512xf32, #tpu.memory_space<vmem>>, vector<1x4x512xf32>
    %342 = vector.shape_cast %341 : vector<1x4x512xf32> to vector<4x512xf32>
    %343 = arith.mulf %342, %336 : vector<4x512xf32>
    %344 = arith.addf %327, %343 : vector<4x512xf32>
    %c70 = arith.constant 70 : index
    %c0_173 = arith.constant 0 : index
    %c0_174 = arith.constant 0 : index
    %345 = vector.load %arg2[%c70, %c0_173, %c0_174] : memref<275x4x512xf32, #tpu.memory_space<vmem>>, vector<1x4x512xf32>
    %346 = vector.shape_cast %345 : vector<1x4x512xf32> to vector<4x512xf32>
    %347 = arith.mulf %346, %336 : vector<4x512xf32>
    %348 = arith.addf %331, %347 : vector<4x512xf32>
    %c71 = arith.constant 71 : index
    %c0_175 = arith.constant 0 : index
    %c0_176 = arith.constant 0 : index
    %349 = vector.load %arg2[%c71, %c0_175, %c0_176] : memref<275x4x512xf32, #tpu.memory_space<vmem>>, vector<1x4x512xf32>
    %350 = vector.shape_cast %349 : vector<1x4x512xf32> to vector<4x512xf32>
    %351 = arith.mulf %350, %336 : vector<4x512xf32>
    %352 = arith.addf %335, %351 : vector<4x512xf32>
    %353 = vector.extract_strided_slice %42 {offsets = [0, 149], sizes = [4, 512], strides = [1, 1]} : vector<4x768xf32> to vector<4x512xf32>
    %c72 = arith.constant 72 : index
    %c0_177 = arith.constant 0 : index
    %c0_178 = arith.constant 0 : index
    %354 = vector.load %arg2[%c72, %c0_177, %c0_178] : memref<275x4x512xf32, #tpu.memory_space<vmem>>, vector<1x4x512xf32>
    %355 = vector.shape_cast %354 : vector<1x4x512xf32> to vector<4x512xf32>
    %356 = arith.mulf %355, %353 : vector<4x512xf32>
    %357 = arith.addf %340, %356 : vector<4x512xf32>
    %c73 = arith.constant 73 : index
    %c0_179 = arith.constant 0 : index
    %c0_180 = arith.constant 0 : index
    %358 = vector.load %arg2[%c73, %c0_179, %c0_180] : memref<275x4x512xf32, #tpu.memory_space<vmem>>, vector<1x4x512xf32>
    %359 = vector.shape_cast %358 : vector<1x4x512xf32> to vector<4x512xf32>
    %360 = arith.mulf %359, %353 : vector<4x512xf32>
    %361 = arith.addf %344, %360 : vector<4x512xf32>
    %c74 = arith.constant 74 : index
    %c0_181 = arith.constant 0 : index
    %c0_182 = arith.constant 0 : index
    %362 = vector.load %arg2[%c74, %c0_181, %c0_182] : memref<275x4x512xf32, #tpu.memory_space<vmem>>, vector<1x4x512xf32>
    %363 = vector.shape_cast %362 : vector<1x4x512xf32> to vector<4x512xf32>
    %364 = arith.mulf %363, %353 : vector<4x512xf32>
    %365 = arith.addf %348, %364 : vector<4x512xf32>
    %c75 = arith.constant 75 : index
    %c0_183 = arith.constant 0 : index
    %c0_184 = arith.constant 0 : index
    %366 = vector.load %arg2[%c75, %c0_183, %c0_184] : memref<275x4x512xf32, #tpu.memory_space<vmem>>, vector<1x4x512xf32>
    %367 = vector.shape_cast %366 : vector<1x4x512xf32> to vector<4x512xf32>
    %368 = arith.mulf %367, %353 : vector<4x512xf32>
    %369 = arith.addf %352, %368 : vector<4x512xf32>
    %370 = vector.extract_strided_slice %42 {offsets = [0, 150], sizes = [4, 512], strides = [1, 1]} : vector<4x768xf32> to vector<4x512xf32>
    %c76 = arith.constant 76 : index
    %c0_185 = arith.constant 0 : index
    %c0_186 = arith.constant 0 : index
    %371 = vector.load %arg2[%c76, %c0_185, %c0_186] : memref<275x4x512xf32, #tpu.memory_space<vmem>>, vector<1x4x512xf32>
    %372 = vector.shape_cast %371 : vector<1x4x512xf32> to vector<4x512xf32>
    %373 = arith.mulf %372, %370 : vector<4x512xf32>
    %374 = arith.addf %357, %373 : vector<4x512xf32>
    %c77 = arith.constant 77 : index
    %c0_187 = arith.constant 0 : index
    %c0_188 = arith.constant 0 : index
    %375 = vector.load %arg2[%c77, %c0_187, %c0_188] : memref<275x4x512xf32, #tpu.memory_space<vmem>>, vector<1x4x512xf32>
    %376 = vector.shape_cast %375 : vector<1x4x512xf32> to vector<4x512xf32>
    %377 = arith.mulf %376, %370 : vector<4x512xf32>
    %378 = arith.addf %361, %377 : vector<4x512xf32>
    %c78 = arith.constant 78 : index
    %c0_189 = arith.constant 0 : index
    %c0_190 = arith.constant 0 : index
    %379 = vector.load %arg2[%c78, %c0_189, %c0_190] : memref<275x4x512xf32, #tpu.memory_space<vmem>>, vector<1x4x512xf32>
    %380 = vector.shape_cast %379 : vector<1x4x512xf32> to vector<4x512xf32>
    %381 = arith.mulf %380, %370 : vector<4x512xf32>
    %382 = arith.addf %365, %381 : vector<4x512xf32>
    %c79 = arith.constant 79 : index
    %c0_191 = arith.constant 0 : index
    %c0_192 = arith.constant 0 : index
    %383 = vector.load %arg2[%c79, %c0_191, %c0_192] : memref<275x4x512xf32, #tpu.memory_space<vmem>>, vector<1x4x512xf32>
    %384 = vector.shape_cast %383 : vector<1x4x512xf32> to vector<4x512xf32>
    %385 = arith.mulf %384, %370 : vector<4x512xf32>
    %386 = arith.addf %369, %385 : vector<4x512xf32>
    %387 = vector.extract_strided_slice %42 {offsets = [0, 166], sizes = [4, 512], strides = [1, 1]} : vector<4x768xf32> to vector<4x512xf32>
    %c80 = arith.constant 80 : index
    %c0_193 = arith.constant 0 : index
    %c0_194 = arith.constant 0 : index
    %388 = vector.load %arg2[%c80, %c0_193, %c0_194] : memref<275x4x512xf32, #tpu.memory_space<vmem>>, vector<1x4x512xf32>
    %389 = vector.shape_cast %388 : vector<1x4x512xf32> to vector<4x512xf32>
    %390 = arith.mulf %389, %387 : vector<4x512xf32>
    %391 = arith.addf %374, %390 : vector<4x512xf32>
    %c81 = arith.constant 81 : index
    %c0_195 = arith.constant 0 : index
    %c0_196 = arith.constant 0 : index
    %392 = vector.load %arg2[%c81, %c0_195, %c0_196] : memref<275x4x512xf32, #tpu.memory_space<vmem>>, vector<1x4x512xf32>
    %393 = vector.shape_cast %392 : vector<1x4x512xf32> to vector<4x512xf32>
    %394 = arith.mulf %393, %387 : vector<4x512xf32>
    %395 = arith.addf %378, %394 : vector<4x512xf32>
    %c82 = arith.constant 82 : index
    %c0_197 = arith.constant 0 : index
    %c0_198 = arith.constant 0 : index
    %396 = vector.load %arg2[%c82, %c0_197, %c0_198] : memref<275x4x512xf32, #tpu.memory_space<vmem>>, vector<1x4x512xf32>
    %397 = vector.shape_cast %396 : vector<1x4x512xf32> to vector<4x512xf32>
    %398 = arith.mulf %397, %387 : vector<4x512xf32>
    %399 = arith.addf %382, %398 : vector<4x512xf32>
    %c83 = arith.constant 83 : index
    %c0_199 = arith.constant 0 : index
    %c0_200 = arith.constant 0 : index
    %400 = vector.load %arg2[%c83, %c0_199, %c0_200] : memref<275x4x512xf32, #tpu.memory_space<vmem>>, vector<1x4x512xf32>
    %401 = vector.shape_cast %400 : vector<1x4x512xf32> to vector<4x512xf32>
    %402 = arith.mulf %401, %387 : vector<4x512xf32>
    %403 = arith.addf %386, %402 : vector<4x512xf32>
    %404 = vector.extract_strided_slice %42 {offsets = [0, 167], sizes = [4, 512], strides = [1, 1]} : vector<4x768xf32> to vector<4x512xf32>
    %c84 = arith.constant 84 : index
    %c0_201 = arith.constant 0 : index
    %c0_202 = arith.constant 0 : index
    %405 = vector.load %arg2[%c84, %c0_201, %c0_202] : memref<275x4x512xf32, #tpu.memory_space<vmem>>, vector<1x4x512xf32>
    %406 = vector.shape_cast %405 : vector<1x4x512xf32> to vector<4x512xf32>
    %407 = arith.mulf %406, %404 : vector<4x512xf32>
    %408 = arith.addf %391, %407 : vector<4x512xf32>
    %c85 = arith.constant 85 : index
    %c0_203 = arith.constant 0 : index
    %c0_204 = arith.constant 0 : index
    %409 = vector.load %arg2[%c85, %c0_203, %c0_204] : memref<275x4x512xf32, #tpu.memory_space<vmem>>, vector<1x4x512xf32>
    %410 = vector.shape_cast %409 : vector<1x4x512xf32> to vector<4x512xf32>
    %411 = arith.mulf %410, %404 : vector<4x512xf32>
    %412 = arith.addf %395, %411 : vector<4x512xf32>
    %c86 = arith.constant 86 : index
    %c0_205 = arith.constant 0 : index
    %c0_206 = arith.constant 0 : index
    %413 = vector.load %arg2[%c86, %c0_205, %c0_206] : memref<275x4x512xf32, #tpu.memory_space<vmem>>, vector<1x4x512xf32>
    %414 = vector.shape_cast %413 : vector<1x4x512xf32> to vector<4x512xf32>
    %415 = arith.mulf %414, %404 : vector<4x512xf32>
    %416 = arith.addf %399, %415 : vector<4x512xf32>
    %c87 = arith.constant 87 : index
    %c0_207 = arith.constant 0 : index
    %c0_208 = arith.constant 0 : index
    %417 = vector.load %arg2[%c87, %c0_207, %c0_208] : memref<275x4x512xf32, #tpu.memory_space<vmem>>, vector<1x4x512xf32>
    %418 = vector.shape_cast %417 : vector<1x4x512xf32> to vector<4x512xf32>
    %419 = arith.mulf %418, %404 : vector<4x512xf32>
    %420 = arith.addf %403, %419 : vector<4x512xf32>
    %421 = vector.extract_strided_slice %42 {offsets = [0, 168], sizes = [4, 512], strides = [1, 1]} : vector<4x768xf32> to vector<4x512xf32>
    %c88 = arith.constant 88 : index
    %c0_209 = arith.constant 0 : index
    %c0_210 = arith.constant 0 : index
    %422 = vector.load %arg2[%c88, %c0_209, %c0_210] : memref<275x4x512xf32, #tpu.memory_space<vmem>>, vector<1x4x512xf32>
    %423 = vector.shape_cast %422 : vector<1x4x512xf32> to vector<4x512xf32>
    %424 = arith.mulf %423, %421 : vector<4x512xf32>
    %425 = arith.addf %408, %424 : vector<4x512xf32>
    %c89 = arith.constant 89 : index
    %c0_211 = arith.constant 0 : index
    %c0_212 = arith.constant 0 : index
    %426 = vector.load %arg2[%c89, %c0_211, %c0_212] : memref<275x4x512xf32, #tpu.memory_space<vmem>>, vector<1x4x512xf32>
    %427 = vector.shape_cast %426 : vector<1x4x512xf32> to vector<4x512xf32>
    %428 = arith.mulf %427, %421 : vector<4x512xf32>
    %429 = arith.addf %412, %428 : vector<4x512xf32>
    %c90 = arith.constant 90 : index
    %c0_213 = arith.constant 0 : index
    %c0_214 = arith.constant 0 : index
    %430 = vector.load %arg2[%c90, %c0_213, %c0_214] : memref<275x4x512xf32, #tpu.memory_space<vmem>>, vector<1x4x512xf32>
    %431 = vector.shape_cast %430 : vector<1x4x512xf32> to vector<4x512xf32>
    %432 = arith.mulf %431, %421 : vector<4x512xf32>
    %433 = arith.addf %416, %432 : vector<4x512xf32>
    %c91 = arith.constant 91 : index
    %c0_215 = arith.constant 0 : index
    %c0_216 = arith.constant 0 : index
    %434 = vector.load %arg2[%c91, %c0_215, %c0_216] : memref<275x4x512xf32, #tpu.memory_space<vmem>>, vector<1x4x512xf32>
    %435 = vector.shape_cast %434 : vector<1x4x512xf32> to vector<4x512xf32>
    %436 = arith.mulf %435, %421 : vector<4x512xf32>
    %437 = arith.addf %420, %436 : vector<4x512xf32>
    %438 = vector.extract_strided_slice %42 {offsets = [0, 169], sizes = [4, 512], strides = [1, 1]} : vector<4x768xf32> to vector<4x512xf32>
    %c92 = arith.constant 92 : index
    %c0_217 = arith.constant 0 : index
    %c0_218 = arith.constant 0 : index
    %439 = vector.load %arg2[%c92, %c0_217, %c0_218] : memref<275x4x512xf32, #tpu.memory_space<vmem>>, vector<1x4x512xf32>
    %440 = vector.shape_cast %439 : vector<1x4x512xf32> to vector<4x512xf32>
    %441 = arith.mulf %440, %438 : vector<4x512xf32>
    %442 = arith.addf %425, %441 : vector<4x512xf32>
    %c93 = arith.constant 93 : index
    %c0_219 = arith.constant 0 : index
    %c0_220 = arith.constant 0 : index
    %443 = vector.load %arg2[%c93, %c0_219, %c0_220] : memref<275x4x512xf32, #tpu.memory_space<vmem>>, vector<1x4x512xf32>
    %444 = vector.shape_cast %443 : vector<1x4x512xf32> to vector<4x512xf32>
    %445 = arith.mulf %444, %438 : vector<4x512xf32>
    %446 = arith.addf %429, %445 : vector<4x512xf32>
    %c94 = arith.constant 94 : index
    %c0_221 = arith.constant 0 : index
    %c0_222 = arith.constant 0 : index
    %447 = vector.load %arg2[%c94, %c0_221, %c0_222] : memref<275x4x512xf32, #tpu.memory_space<vmem>>, vector<1x4x512xf32>
    %448 = vector.shape_cast %447 : vector<1x4x512xf32> to vector<4x512xf32>
    %449 = arith.mulf %448, %438 : vector<4x512xf32>
    %450 = arith.addf %433, %449 : vector<4x512xf32>
    %c95 = arith.constant 95 : index
    %c0_223 = arith.constant 0 : index
    %c0_224 = arith.constant 0 : index
    %451 = vector.load %arg2[%c95, %c0_223, %c0_224] : memref<275x4x512xf32, #tpu.memory_space<vmem>>, vector<1x4x512xf32>
    %452 = vector.shape_cast %451 : vector<1x4x512xf32> to vector<4x512xf32>
    %453 = arith.mulf %452, %438 : vector<4x512xf32>
    %454 = arith.addf %437, %453 : vector<4x512xf32>
    %455 = vector.extract_strided_slice %42 {offsets = [0, 170], sizes = [4, 512], strides = [1, 1]} : vector<4x768xf32> to vector<4x512xf32>
    %c96 = arith.constant 96 : index
    %c0_225 = arith.constant 0 : index
    %c0_226 = arith.constant 0 : index
    %456 = vector.load %arg2[%c96, %c0_225, %c0_226] : memref<275x4x512xf32, #tpu.memory_space<vmem>>, vector<1x4x512xf32>
    %457 = vector.shape_cast %456 : vector<1x4x512xf32> to vector<4x512xf32>
    %458 = arith.mulf %457, %455 : vector<4x512xf32>
    %459 = arith.addf %442, %458 : vector<4x512xf32>
    %c97 = arith.constant 97 : index
    %c0_227 = arith.constant 0 : index
    %c0_228 = arith.constant 0 : index
    %460 = vector.load %arg2[%c97, %c0_227, %c0_228] : memref<275x4x512xf32, #tpu.memory_space<vmem>>, vector<1x4x512xf32>
    %461 = vector.shape_cast %460 : vector<1x4x512xf32> to vector<4x512xf32>
    %462 = arith.mulf %461, %455 : vector<4x512xf32>
    %463 = arith.addf %446, %462 : vector<4x512xf32>
    %c98 = arith.constant 98 : index
    %c0_229 = arith.constant 0 : index
    %c0_230 = arith.constant 0 : index
    %464 = vector.load %arg2[%c98, %c0_229, %c0_230] : memref<275x4x512xf32, #tpu.memory_space<vmem>>, vector<1x4x512xf32>
    %465 = vector.shape_cast %464 : vector<1x4x512xf32> to vector<4x512xf32>
    %466 = arith.mulf %465, %455 : vector<4x512xf32>
    %467 = arith.addf %450, %466 : vector<4x512xf32>
    %c99 = arith.constant 99 : index
    %c0_231 = arith.constant 0 : index
    %c0_232 = arith.constant 0 : index
    %468 = vector.load %arg2[%c99, %c0_231, %c0_232] : memref<275x4x512xf32, #tpu.memory_space<vmem>>, vector<1x4x512xf32>
    %469 = vector.shape_cast %468 : vector<1x4x512xf32> to vector<4x512xf32>
    %470 = arith.mulf %469, %455 : vector<4x512xf32>
    %471 = arith.addf %454, %470 : vector<4x512xf32>
    %472 = vector.extract_strided_slice %42 {offsets = [0, 107], sizes = [4, 512], strides = [1, 1]} : vector<4x768xf32> to vector<4x512xf32>
    %c100 = arith.constant 100 : index
    %c0_233 = arith.constant 0 : index
    %c0_234 = arith.constant 0 : index
    %473 = vector.load %arg2[%c100, %c0_233, %c0_234] : memref<275x4x512xf32, #tpu.memory_space<vmem>>, vector<1x4x512xf32>
    %474 = vector.shape_cast %473 : vector<1x4x512xf32> to vector<4x512xf32>
    %475 = arith.mulf %474, %472 : vector<4x512xf32>
    %476 = arith.addf %459, %475 : vector<4x512xf32>
    %c101 = arith.constant 101 : index
    %c0_235 = arith.constant 0 : index
    %c0_236 = arith.constant 0 : index
    %477 = vector.load %arg2[%c101, %c0_235, %c0_236] : memref<275x4x512xf32, #tpu.memory_space<vmem>>, vector<1x4x512xf32>
    %478 = vector.shape_cast %477 : vector<1x4x512xf32> to vector<4x512xf32>
    %479 = arith.mulf %478, %472 : vector<4x512xf32>
    %480 = arith.addf %463, %479 : vector<4x512xf32>
    %c102 = arith.constant 102 : index
    %c0_237 = arith.constant 0 : index
    %c0_238 = arith.constant 0 : index
    %481 = vector.load %arg2[%c102, %c0_237, %c0_238] : memref<275x4x512xf32, #tpu.memory_space<vmem>>, vector<1x4x512xf32>
    %482 = vector.shape_cast %481 : vector<1x4x512xf32> to vector<4x512xf32>
    %483 = arith.mulf %482, %472 : vector<4x512xf32>
    %484 = arith.addf %467, %483 : vector<4x512xf32>
    %c103 = arith.constant 103 : index
    %c0_239 = arith.constant 0 : index
    %c0_240 = arith.constant 0 : index
    %485 = vector.load %arg2[%c103, %c0_239, %c0_240] : memref<275x4x512xf32, #tpu.memory_space<vmem>>, vector<1x4x512xf32>
    %486 = vector.shape_cast %485 : vector<1x4x512xf32> to vector<4x512xf32>
    %487 = arith.mulf %486, %472 : vector<4x512xf32>
    %488 = arith.addf %471, %487 : vector<4x512xf32>
    %489 = vector.extract_strided_slice %42 {offsets = [0, 108], sizes = [4, 512], strides = [1, 1]} : vector<4x768xf32> to vector<4x512xf32>
    %c104 = arith.constant 104 : index
    %c0_241 = arith.constant 0 : index
    %c0_242 = arith.constant 0 : index
    %490 = vector.load %arg2[%c104, %c0_241, %c0_242] : memref<275x4x512xf32, #tpu.memory_space<vmem>>, vector<1x4x512xf32>
    %491 = vector.shape_cast %490 : vector<1x4x512xf32> to vector<4x512xf32>
    %492 = arith.mulf %491, %489 : vector<4x512xf32>
    %493 = arith.addf %476, %492 : vector<4x512xf32>
    %c105 = arith.constant 105 : index
    %c0_243 = arith.constant 0 : index
    %c0_244 = arith.constant 0 : index
    %494 = vector.load %arg2[%c105, %c0_243, %c0_244] : memref<275x4x512xf32, #tpu.memory_space<vmem>>, vector<1x4x512xf32>
    %495 = vector.shape_cast %494 : vector<1x4x512xf32> to vector<4x512xf32>
    %496 = arith.mulf %495, %489 : vector<4x512xf32>
    %497 = arith.addf %480, %496 : vector<4x512xf32>
    %c106 = arith.constant 106 : index
    %c0_245 = arith.constant 0 : index
    %c0_246 = arith.constant 0 : index
    %498 = vector.load %arg2[%c106, %c0_245, %c0_246] : memref<275x4x512xf32, #tpu.memory_space<vmem>>, vector<1x4x512xf32>
    %499 = vector.shape_cast %498 : vector<1x4x512xf32> to vector<4x512xf32>
    %500 = arith.mulf %499, %489 : vector<4x512xf32>
    %501 = arith.addf %484, %500 : vector<4x512xf32>
    %c107 = arith.constant 107 : index
    %c0_247 = arith.constant 0 : index
    %c0_248 = arith.constant 0 : index
    %502 = vector.load %arg2[%c107, %c0_247, %c0_248] : memref<275x4x512xf32, #tpu.memory_space<vmem>>, vector<1x4x512xf32>
    %503 = vector.shape_cast %502 : vector<1x4x512xf32> to vector<4x512xf32>
    %504 = arith.mulf %503, %489 : vector<4x512xf32>
    %505 = arith.addf %488, %504 : vector<4x512xf32>
    %506 = vector.extract_strided_slice %42 {offsets = [0, 109], sizes = [4, 512], strides = [1, 1]} : vector<4x768xf32> to vector<4x512xf32>
    %c108 = arith.constant 108 : index
    %c0_249 = arith.constant 0 : index
    %c0_250 = arith.constant 0 : index
    %507 = vector.load %arg2[%c108, %c0_249, %c0_250] : memref<275x4x512xf32, #tpu.memory_space<vmem>>, vector<1x4x512xf32>
    %508 = vector.shape_cast %507 : vector<1x4x512xf32> to vector<4x512xf32>
    %509 = arith.mulf %508, %506 : vector<4x512xf32>
    %510 = arith.addf %493, %509 : vector<4x512xf32>
    %c109 = arith.constant 109 : index
    %c0_251 = arith.constant 0 : index
    %c0_252 = arith.constant 0 : index
    %511 = vector.load %arg2[%c109, %c0_251, %c0_252] : memref<275x4x512xf32, #tpu.memory_space<vmem>>, vector<1x4x512xf32>
    %512 = vector.shape_cast %511 : vector<1x4x512xf32> to vector<4x512xf32>
    %513 = arith.mulf %512, %506 : vector<4x512xf32>
    %514 = arith.addf %497, %513 : vector<4x512xf32>
    %c110 = arith.constant 110 : index
    %c0_253 = arith.constant 0 : index
    %c0_254 = arith.constant 0 : index
    %515 = vector.load %arg2[%c110, %c0_253, %c0_254] : memref<275x4x512xf32, #tpu.memory_space<vmem>>, vector<1x4x512xf32>
    %516 = vector.shape_cast %515 : vector<1x4x512xf32> to vector<4x512xf32>
    %517 = arith.mulf %516, %506 : vector<4x512xf32>
    %518 = arith.addf %501, %517 : vector<4x512xf32>
    %c111 = arith.constant 111 : index
    %c0_255 = arith.constant 0 : index
    %c0_256 = arith.constant 0 : index
    %519 = vector.load %arg2[%c111, %c0_255, %c0_256] : memref<275x4x512xf32, #tpu.memory_space<vmem>>, vector<1x4x512xf32>
    %520 = vector.shape_cast %519 : vector<1x4x512xf32> to vector<4x512xf32>
    %521 = arith.mulf %520, %506 : vector<4x512xf32>
    %522 = arith.addf %505, %521 : vector<4x512xf32>
    %523 = vector.extract_strided_slice %42 {offsets = [0, 127], sizes = [4, 512], strides = [1, 1]} : vector<4x768xf32> to vector<4x512xf32>
    %c112 = arith.constant 112 : index
    %c0_257 = arith.constant 0 : index
    %c0_258 = arith.constant 0 : index
    %524 = vector.load %arg2[%c112, %c0_257, %c0_258] : memref<275x4x512xf32, #tpu.memory_space<vmem>>, vector<1x4x512xf32>
    %525 = vector.shape_cast %524 : vector<1x4x512xf32> to vector<4x512xf32>
    %526 = arith.mulf %525, %523 : vector<4x512xf32>
    %527 = arith.addf %510, %526 : vector<4x512xf32>
    %c113 = arith.constant 113 : index
    %c0_259 = arith.constant 0 : index
    %c0_260 = arith.constant 0 : index
    %528 = vector.load %arg2[%c113, %c0_259, %c0_260] : memref<275x4x512xf32, #tpu.memory_space<vmem>>, vector<1x4x512xf32>
    %529 = vector.shape_cast %528 : vector<1x4x512xf32> to vector<4x512xf32>
    %530 = arith.mulf %529, %523 : vector<4x512xf32>
    %531 = arith.addf %514, %530 : vector<4x512xf32>
    %c114 = arith.constant 114 : index
    %c0_261 = arith.constant 0 : index
    %c0_262 = arith.constant 0 : index
    %532 = vector.load %arg2[%c114, %c0_261, %c0_262] : memref<275x4x512xf32, #tpu.memory_space<vmem>>, vector<1x4x512xf32>
    %533 = vector.shape_cast %532 : vector<1x4x512xf32> to vector<4x512xf32>
    %534 = arith.mulf %533, %523 : vector<4x512xf32>
    %535 = arith.addf %518, %534 : vector<4x512xf32>
    %c115 = arith.constant 115 : index
    %c0_263 = arith.constant 0 : index
    %c0_264 = arith.constant 0 : index
    %536 = vector.load %arg2[%c115, %c0_263, %c0_264] : memref<275x4x512xf32, #tpu.memory_space<vmem>>, vector<1x4x512xf32>
    %537 = vector.shape_cast %536 : vector<1x4x512xf32> to vector<4x512xf32>
    %538 = arith.mulf %537, %523 : vector<4x512xf32>
    %539 = arith.addf %522, %538 : vector<4x512xf32>
    %540 = vector.extract_strided_slice %42 {offsets = [0, 128], sizes = [4, 512], strides = [1, 1]} : vector<4x768xf32> to vector<4x512xf32>
    %c116 = arith.constant 116 : index
    %c0_265 = arith.constant 0 : index
    %c0_266 = arith.constant 0 : index
    %541 = vector.load %arg2[%c116, %c0_265, %c0_266] : memref<275x4x512xf32, #tpu.memory_space<vmem>>, vector<1x4x512xf32>
    %542 = vector.shape_cast %541 : vector<1x4x512xf32> to vector<4x512xf32>
    %543 = arith.mulf %542, %540 : vector<4x512xf32>
    %544 = arith.addf %527, %543 : vector<4x512xf32>
    %c117 = arith.constant 117 : index
    %c0_267 = arith.constant 0 : index
    %c0_268 = arith.constant 0 : index
    %545 = vector.load %arg2[%c117, %c0_267, %c0_268] : memref<275x4x512xf32, #tpu.memory_space<vmem>>, vector<1x4x512xf32>
    %546 = vector.shape_cast %545 : vector<1x4x512xf32> to vector<4x512xf32>
    %547 = arith.mulf %546, %540 : vector<4x512xf32>
    %548 = arith.addf %531, %547 : vector<4x512xf32>
    %c118 = arith.constant 118 : index
    %c0_269 = arith.constant 0 : index
    %c0_270 = arith.constant 0 : index
    %549 = vector.load %arg2[%c118, %c0_269, %c0_270] : memref<275x4x512xf32, #tpu.memory_space<vmem>>, vector<1x4x512xf32>
    %550 = vector.shape_cast %549 : vector<1x4x512xf32> to vector<4x512xf32>
    %551 = arith.mulf %550, %540 : vector<4x512xf32>
    %552 = arith.addf %535, %551 : vector<4x512xf32>
    %c119 = arith.constant 119 : index
    %c0_271 = arith.constant 0 : index
    %c0_272 = arith.constant 0 : index
    %553 = vector.load %arg2[%c119, %c0_271, %c0_272] : memref<275x4x512xf32, #tpu.memory_space<vmem>>, vector<1x4x512xf32>
    %554 = vector.shape_cast %553 : vector<1x4x512xf32> to vector<4x512xf32>
    %555 = arith.mulf %554, %540 : vector<4x512xf32>
    %556 = arith.addf %539, %555 : vector<4x512xf32>
    %557 = vector.extract_strided_slice %42 {offsets = [0, 129], sizes = [4, 512], strides = [1, 1]} : vector<4x768xf32> to vector<4x512xf32>
    %c120 = arith.constant 120 : index
    %c0_273 = arith.constant 0 : index
    %c0_274 = arith.constant 0 : index
    %558 = vector.load %arg2[%c120, %c0_273, %c0_274] : memref<275x4x512xf32, #tpu.memory_space<vmem>>, vector<1x4x512xf32>
    %559 = vector.shape_cast %558 : vector<1x4x512xf32> to vector<4x512xf32>
    %560 = arith.mulf %559, %557 : vector<4x512xf32>
    %561 = arith.addf %544, %560 : vector<4x512xf32>
    %c121 = arith.constant 121 : index
    %c0_275 = arith.constant 0 : index
    %c0_276 = arith.constant 0 : index
    %562 = vector.load %arg2[%c121, %c0_275, %c0_276] : memref<275x4x512xf32, #tpu.memory_space<vmem>>, vector<1x4x512xf32>
    %563 = vector.shape_cast %562 : vector<1x4x512xf32> to vector<4x512xf32>
    %564 = arith.mulf %563, %557 : vector<4x512xf32>
    %565 = arith.addf %548, %564 : vector<4x512xf32>
    %c122 = arith.constant 122 : index
    %c0_277 = arith.constant 0 : index
    %c0_278 = arith.constant 0 : index
    %566 = vector.load %arg2[%c122, %c0_277, %c0_278] : memref<275x4x512xf32, #tpu.memory_space<vmem>>, vector<1x4x512xf32>
    %567 = vector.shape_cast %566 : vector<1x4x512xf32> to vector<4x512xf32>
    %568 = arith.mulf %567, %557 : vector<4x512xf32>
    %569 = arith.addf %552, %568 : vector<4x512xf32>
    %c123 = arith.constant 123 : index
    %c0_279 = arith.constant 0 : index
    %c0_280 = arith.constant 0 : index
    %570 = vector.load %arg2[%c123, %c0_279, %c0_280] : memref<275x4x512xf32, #tpu.memory_space<vmem>>, vector<1x4x512xf32>
    %571 = vector.shape_cast %570 : vector<1x4x512xf32> to vector<4x512xf32>
    %572 = arith.mulf %571, %557 : vector<4x512xf32>
    %573 = arith.addf %556, %572 : vector<4x512xf32>
    %574 = vector.extract_strided_slice %42 {offsets = [0, 147], sizes = [4, 512], strides = [1, 1]} : vector<4x768xf32> to vector<4x512xf32>
    %c124 = arith.constant 124 : index
    %c0_281 = arith.constant 0 : index
    %c0_282 = arith.constant 0 : index
    %575 = vector.load %arg2[%c124, %c0_281, %c0_282] : memref<275x4x512xf32, #tpu.memory_space<vmem>>, vector<1x4x512xf32>
    %576 = vector.shape_cast %575 : vector<1x4x512xf32> to vector<4x512xf32>
    %577 = arith.mulf %576, %574 : vector<4x512xf32>
    %578 = arith.addf %561, %577 : vector<4x512xf32>
    %c125 = arith.constant 125 : index
    %c0_283 = arith.constant 0 : index
    %c0_284 = arith.constant 0 : index
    %579 = vector.load %arg2[%c125, %c0_283, %c0_284] : memref<275x4x512xf32, #tpu.memory_space<vmem>>, vector<1x4x512xf32>
    %580 = vector.shape_cast %579 : vector<1x4x512xf32> to vector<4x512xf32>
    %581 = arith.mulf %580, %574 : vector<4x512xf32>
    %582 = arith.addf %565, %581 : vector<4x512xf32>
    %c126 = arith.constant 126 : index
    %c0_285 = arith.constant 0 : index
    %c0_286 = arith.constant 0 : index
    %583 = vector.load %arg2[%c126, %c0_285, %c0_286] : memref<275x4x512xf32, #tpu.memory_space<vmem>>, vector<1x4x512xf32>
    %584 = vector.shape_cast %583 : vector<1x4x512xf32> to vector<4x512xf32>
    %585 = arith.mulf %584, %574 : vector<4x512xf32>
    %586 = arith.addf %569, %585 : vector<4x512xf32>
    %c127 = arith.constant 127 : index
    %c0_287 = arith.constant 0 : index
    %c0_288 = arith.constant 0 : index
    %587 = vector.load %arg2[%c127, %c0_287, %c0_288] : memref<275x4x512xf32, #tpu.memory_space<vmem>>, vector<1x4x512xf32>
    %588 = vector.shape_cast %587 : vector<1x4x512xf32> to vector<4x512xf32>
    %589 = arith.mulf %588, %574 : vector<4x512xf32>
    %590 = arith.addf %573, %589 : vector<4x512xf32>
    %591 = vector.extract_strided_slice %42 {offsets = [0, 148], sizes = [4, 512], strides = [1, 1]} : vector<4x768xf32> to vector<4x512xf32>
    %c128 = arith.constant 128 : index
    %c0_289 = arith.constant 0 : index
    %c0_290 = arith.constant 0 : index
    %592 = vector.load %arg2[%c128, %c0_289, %c0_290] : memref<275x4x512xf32, #tpu.memory_space<vmem>>, vector<1x4x512xf32>
    %593 = vector.shape_cast %592 : vector<1x4x512xf32> to vector<4x512xf32>
    %594 = arith.mulf %593, %591 : vector<4x512xf32>
    %595 = arith.addf %578, %594 : vector<4x512xf32>
    %c129 = arith.constant 129 : index
    %c0_291 = arith.constant 0 : index
    %c0_292 = arith.constant 0 : index
    %596 = vector.load %arg2[%c129, %c0_291, %c0_292] : memref<275x4x512xf32, #tpu.memory_space<vmem>>, vector<1x4x512xf32>
    %597 = vector.shape_cast %596 : vector<1x4x512xf32> to vector<4x512xf32>
    %598 = arith.mulf %597, %591 : vector<4x512xf32>
    %599 = arith.addf %582, %598 : vector<4x512xf32>
    %c130 = arith.constant 130 : index
    %c0_293 = arith.constant 0 : index
    %c0_294 = arith.constant 0 : index
    %600 = vector.load %arg2[%c130, %c0_293, %c0_294] : memref<275x4x512xf32, #tpu.memory_space<vmem>>, vector<1x4x512xf32>
    %601 = vector.shape_cast %600 : vector<1x4x512xf32> to vector<4x512xf32>
    %602 = arith.mulf %601, %591 : vector<4x512xf32>
    %603 = arith.addf %586, %602 : vector<4x512xf32>
    %c131 = arith.constant 131 : index
    %c0_295 = arith.constant 0 : index
    %c0_296 = arith.constant 0 : index
    %604 = vector.load %arg2[%c131, %c0_295, %c0_296] : memref<275x4x512xf32, #tpu.memory_space<vmem>>, vector<1x4x512xf32>
    %605 = vector.shape_cast %604 : vector<1x4x512xf32> to vector<4x512xf32>
    %606 = arith.mulf %605, %591 : vector<4x512xf32>
    %607 = arith.addf %590, %606 : vector<4x512xf32>
    %608 = vector.extract_strided_slice %42 {offsets = [0, 149], sizes = [4, 512], strides = [1, 1]} : vector<4x768xf32> to vector<4x512xf32>
    %c132 = arith.constant 132 : index
    %c0_297 = arith.constant 0 : index
    %c0_298 = arith.constant 0 : index
    %609 = vector.load %arg2[%c132, %c0_297, %c0_298] : memref<275x4x512xf32, #tpu.memory_space<vmem>>, vector<1x4x512xf32>
    %610 = vector.shape_cast %609 : vector<1x4x512xf32> to vector<4x512xf32>
    %611 = arith.mulf %610, %608 : vector<4x512xf32>
    %612 = arith.addf %595, %611 : vector<4x512xf32>
    %c133 = arith.constant 133 : index
    %c0_299 = arith.constant 0 : index
    %c0_300 = arith.constant 0 : index
    %613 = vector.load %arg2[%c133, %c0_299, %c0_300] : memref<275x4x512xf32, #tpu.memory_space<vmem>>, vector<1x4x512xf32>
    %614 = vector.shape_cast %613 : vector<1x4x512xf32> to vector<4x512xf32>
    %615 = arith.mulf %614, %608 : vector<4x512xf32>
    %616 = arith.addf %599, %615 : vector<4x512xf32>
    %c134 = arith.constant 134 : index
    %c0_301 = arith.constant 0 : index
    %c0_302 = arith.constant 0 : index
    %617 = vector.load %arg2[%c134, %c0_301, %c0_302] : memref<275x4x512xf32, #tpu.memory_space<vmem>>, vector<1x4x512xf32>
    %618 = vector.shape_cast %617 : vector<1x4x512xf32> to vector<4x512xf32>
    %619 = arith.mulf %618, %608 : vector<4x512xf32>
    %620 = arith.addf %603, %619 : vector<4x512xf32>
    %c135 = arith.constant 135 : index
    %c0_303 = arith.constant 0 : index
    %c0_304 = arith.constant 0 : index
    %621 = vector.load %arg2[%c135, %c0_303, %c0_304] : memref<275x4x512xf32, #tpu.memory_space<vmem>>, vector<1x4x512xf32>
    %622 = vector.shape_cast %621 : vector<1x4x512xf32> to vector<4x512xf32>
    %623 = arith.mulf %622, %608 : vector<4x512xf32>
    %624 = arith.addf %607, %623 : vector<4x512xf32>
    %cst_305 = arith.constant dense<0.000000e+00> : vector<512xf32>
    %625 = vector.multi_reduction <add>, %612, %cst_305 [0] : vector<4x512xf32> to vector<512xf32>
    %626 = vector.shape_cast %625 : vector<512xf32> to vector<1x512xf32>
    %cst_306 = arith.constant dense<0.000000e+00> : vector<512xf32>
    %627 = vector.multi_reduction <add>, %616, %cst_306 [0] : vector<4x512xf32> to vector<512xf32>
    %628 = vector.shape_cast %627 : vector<512xf32> to vector<1x512xf32>
    %cst_307 = arith.constant dense<0.000000e+00> : vector<512xf32>
    %629 = vector.multi_reduction <add>, %620, %cst_307 [0] : vector<4x512xf32> to vector<512xf32>
    %630 = vector.shape_cast %629 : vector<512xf32> to vector<1x512xf32>
    %cst_308 = arith.constant dense<0.000000e+00> : vector<512xf32>
    %631 = vector.multi_reduction <add>, %624, %cst_308 [0] : vector<4x512xf32> to vector<512xf32>
    %632 = vector.shape_cast %631 : vector<512xf32> to vector<1x512xf32>
    %633 = tpu.concatenate %626, %628, %630, %632 in 0 : vector<1x512xf32>, vector<1x512xf32>, vector<1x512xf32>, vector<1x512xf32> -> vector<4x512xf32>
    %634 = arith.addf %633, %5 : vector<4x512xf32>
    %cst_309 = arith.constant 0.000000e+00 : f32
    %635 = vector.broadcast %cst_309 : f32 to vector<4x512xf32>
    %636 = arith.maximumf %634, %635 : vector<4x512xf32>
    %637 = arith.mulf %636, %3 : vector<4x512xf32>
    %c0_310 = arith.constant 0 : index
    %c128_311 = arith.constant 128 : index
    %638 = vector.load %arg4[%c0_310, %c128_311] : memref<4x768xf32, #tpu.memory_space<vmem>>, vector<4x512xf32>
    tpu.vector_store %arg4[%c0_310, %c128_311], %637 {strides = array<i32>} : memref<4x768xf32, #tpu.memory_space<vmem>>, vector<4x512xf32>,
    %c0_312 = arith.constant 0 : index
    %c0_313 = arith.constant 0 : index
    %639 = vector.load %arg4[%c0_312, %c0_313] : memref<4x768xf32, #tpu.memory_space<vmem>>, vector<4x768xf32>
    %cst_314 = arith.constant 0.000000e+00 : f32
    %640 = vector.broadcast %cst_314 : f32 to vector<4x512xf32>
    %cst_315 = arith.constant 0.000000e+00 : f32
    %641 = vector.broadcast %cst_315 : f32 to vector<4x512xf32>
    %cst_316 = arith.constant 0.000000e+00 : f32
    %642 = vector.broadcast %cst_316 : f32 to vector<4x512xf32>
    %cst_317 = arith.constant 0.000000e+00 : f32
    %643 = vector.broadcast %cst_317 : f32 to vector<4x512xf32>
    %644 = vector.extract_strided_slice %639 {offsets = [0, 86], sizes = [4, 512], strides = [1, 1]} : vector<4x768xf32> to vector<4x512xf32>
    %c136 = arith.constant 136 : index
    %c0_318 = arith.constant 0 : index
    %c0_319 = arith.constant 0 : index
    %645 = vector.load %arg2[%c136, %c0_318, %c0_319] : memref<275x4x512xf32, #tpu.memory_space<vmem>>, vector<1x4x512xf32>
    %646 = vector.shape_cast %645 : vector<1x4x512xf32> to vector<4x512xf32>
    %647 = arith.mulf %646, %644 : vector<4x512xf32>
    %648 = arith.addf %640, %647 : vector<4x512xf32>
    %c137 = arith.constant 137 : index
    %c0_320 = arith.constant 0 : index
    %c0_321 = arith.constant 0 : index
    %649 = vector.load %arg2[%c137, %c0_320, %c0_321] : memref<275x4x512xf32, #tpu.memory_space<vmem>>, vector<1x4x512xf32>
    %650 = vector.shape_cast %649 : vector<1x4x512xf32> to vector<4x512xf32>
    %651 = arith.mulf %650, %644 : vector<4x512xf32>
    %652 = arith.addf %641, %651 : vector<4x512xf32>
    %c138 = arith.constant 138 : index
    %c0_322 = arith.constant 0 : index
    %c0_323 = arith.constant 0 : index
    %653 = vector.load %arg2[%c138, %c0_322, %c0_323] : memref<275x4x512xf32, #tpu.memory_space<vmem>>, vector<1x4x512xf32>
    %654 = vector.shape_cast %653 : vector<1x4x512xf32> to vector<4x512xf32>
    %655 = arith.mulf %654, %644 : vector<4x512xf32>
    %656 = arith.addf %642, %655 : vector<4x512xf32>
    %c139 = arith.constant 139 : index
    %c0_324 = arith.constant 0 : index
    %c0_325 = arith.constant 0 : index
    %657 = vector.load %arg2[%c139, %c0_324, %c0_325] : memref<275x4x512xf32, #tpu.memory_space<vmem>>, vector<1x4x512xf32>
    %658 = vector.shape_cast %657 : vector<1x4x512xf32> to vector<4x512xf32>
    %659 = arith.mulf %658, %644 : vector<4x512xf32>
    %660 = arith.addf %643, %659 : vector<4x512xf32>
    %661 = vector.extract_strided_slice %639 {offsets = [0, 87], sizes = [4, 512], strides = [1, 1]} : vector<4x768xf32> to vector<4x512xf32>
    %c140 = arith.constant 140 : index
    %c0_326 = arith.constant 0 : index
    %c0_327 = arith.constant 0 : index
    %662 = vector.load %arg2[%c140, %c0_326, %c0_327] : memref<275x4x512xf32, #tpu.memory_space<vmem>>, vector<1x4x512xf32>
    %663 = vector.shape_cast %662 : vector<1x4x512xf32> to vector<4x512xf32>
    %664 = arith.mulf %663, %661 : vector<4x512xf32>
    %665 = arith.addf %648, %664 : vector<4x512xf32>
    %c141 = arith.constant 141 : index
    %c0_328 = arith.constant 0 : index
    %c0_329 = arith.constant 0 : index
    %666 = vector.load %arg2[%c141, %c0_328, %c0_329] : memref<275x4x512xf32, #tpu.memory_space<vmem>>, vector<1x4x512xf32>
    %667 = vector.shape_cast %666 : vector<1x4x512xf32> to vector<4x512xf32>
    %668 = arith.mulf %667, %661 : vector<4x512xf32>
    %669 = arith.addf %652, %668 : vector<4x512xf32>
    %c142 = arith.constant 142 : index
    %c0_330 = arith.constant 0 : index
    %c0_331 = arith.constant 0 : index
    %670 = vector.load %arg2[%c142, %c0_330, %c0_331] : memref<275x4x512xf32, #tpu.memory_space<vmem>>, vector<1x4x512xf32>
    %671 = vector.shape_cast %670 : vector<1x4x512xf32> to vector<4x512xf32>
    %672 = arith.mulf %671, %661 : vector<4x512xf32>
    %673 = arith.addf %656, %672 : vector<4x512xf32>
    %c143 = arith.constant 143 : index
    %c0_332 = arith.constant 0 : index
    %c0_333 = arith.constant 0 : index
    %674 = vector.load %arg2[%c143, %c0_332, %c0_333] : memref<275x4x512xf32, #tpu.memory_space<vmem>>, vector<1x4x512xf32>
    %675 = vector.shape_cast %674 : vector<1x4x512xf32> to vector<4x512xf32>
    %676 = arith.mulf %675, %661 : vector<4x512xf32>
    %677 = arith.addf %660, %676 : vector<4x512xf32>
    %678 = vector.extract_strided_slice %639 {offsets = [0, 88], sizes = [4, 512], strides = [1, 1]} : vector<4x768xf32> to vector<4x512xf32>
    %c144 = arith.constant 144 : index
    %c0_334 = arith.constant 0 : index
    %c0_335 = arith.constant 0 : index
    %679 = vector.load %arg2[%c144, %c0_334, %c0_335] : memref<275x4x512xf32, #tpu.memory_space<vmem>>, vector<1x4x512xf32>
    %680 = vector.shape_cast %679 : vector<1x4x512xf32> to vector<4x512xf32>
    %681 = arith.mulf %680, %678 : vector<4x512xf32>
    %682 = arith.addf %665, %681 : vector<4x512xf32>
    %c145 = arith.constant 145 : index
    %c0_336 = arith.constant 0 : index
    %c0_337 = arith.constant 0 : index
    %683 = vector.load %arg2[%c145, %c0_336, %c0_337] : memref<275x4x512xf32, #tpu.memory_space<vmem>>, vector<1x4x512xf32>
    %684 = vector.shape_cast %683 : vector<1x4x512xf32> to vector<4x512xf32>
    %685 = arith.mulf %684, %678 : vector<4x512xf32>
    %686 = arith.addf %669, %685 : vector<4x512xf32>
    %c146 = arith.constant 146 : index
    %c0_338 = arith.constant 0 : index
    %c0_339 = arith.constant 0 : index
    %687 = vector.load %arg2[%c146, %c0_338, %c0_339] : memref<275x4x512xf32, #tpu.memory_space<vmem>>, vector<1x4x512xf32>
    %688 = vector.shape_cast %687 : vector<1x4x512xf32> to vector<4x512xf32>
    %689 = arith.mulf %688, %678 : vector<4x512xf32>
    %690 = arith.addf %673, %689 : vector<4x512xf32>
    %c147 = arith.constant 147 : index
    %c0_340 = arith.constant 0 : index
    %c0_341 = arith.constant 0 : index
    %691 = vector.load %arg2[%c147, %c0_340, %c0_341] : memref<275x4x512xf32, #tpu.memory_space<vmem>>, vector<1x4x512xf32>
    %692 = vector.shape_cast %691 : vector<1x4x512xf32> to vector<4x512xf32>
    %693 = arith.mulf %692, %678 : vector<4x512xf32>
    %694 = arith.addf %677, %693 : vector<4x512xf32>
    %695 = vector.extract_strided_slice %639 {offsets = [0, 89], sizes = [4, 512], strides = [1, 1]} : vector<4x768xf32> to vector<4x512xf32>
    %c148 = arith.constant 148 : index
    %c0_342 = arith.constant 0 : index
    %c0_343 = arith.constant 0 : index
    %696 = vector.load %arg2[%c148, %c0_342, %c0_343] : memref<275x4x512xf32, #tpu.memory_space<vmem>>, vector<1x4x512xf32>
    %697 = vector.shape_cast %696 : vector<1x4x512xf32> to vector<4x512xf32>
    %698 = arith.mulf %697, %695 : vector<4x512xf32>
    %699 = arith.addf %682, %698 : vector<4x512xf32>
    %c149 = arith.constant 149 : index
    %c0_344 = arith.constant 0 : index
    %c0_345 = arith.constant 0 : index
    %700 = vector.load %arg2[%c149, %c0_344, %c0_345] : memref<275x4x512xf32, #tpu.memory_space<vmem>>, vector<1x4x512xf32>
    %701 = vector.shape_cast %700 : vector<1x4x512xf32> to vector<4x512xf32>
    %702 = arith.mulf %701, %695 : vector<4x512xf32>
    %703 = arith.addf %686, %702 : vector<4x512xf32>
    %c150 = arith.constant 150 : index
    %c0_346 = arith.constant 0 : index
    %c0_347 = arith.constant 0 : index
    %704 = vector.load %arg2[%c150, %c0_346, %c0_347] : memref<275x4x512xf32, #tpu.memory_space<vmem>>, vector<1x4x512xf32>
    %705 = vector.shape_cast %704 : vector<1x4x512xf32> to vector<4x512xf32>
    %706 = arith.mulf %705, %695 : vector<4x512xf32>
    %707 = arith.addf %690, %706 : vector<4x512xf32>
    %c151 = arith.constant 151 : index
    %c0_348 = arith.constant 0 : index
    %c0_349 = arith.constant 0 : index
    %708 = vector.load %arg2[%c151, %c0_348, %c0_349] : memref<275x4x512xf32, #tpu.memory_space<vmem>>, vector<1x4x512xf32>
    %709 = vector.shape_cast %708 : vector<1x4x512xf32> to vector<4x512xf32>
    %710 = arith.mulf %709, %695 : vector<4x512xf32>
    %711 = arith.addf %694, %710 : vector<4x512xf32>
    %712 = vector.extract_strided_slice %639 {offsets = [0, 90], sizes = [4, 512], strides = [1, 1]} : vector<4x768xf32> to vector<4x512xf32>
    %c152 = arith.constant 152 : index
    %c0_350 = arith.constant 0 : index
    %c0_351 = arith.constant 0 : index
    %713 = vector.load %arg2[%c152, %c0_350, %c0_351] : memref<275x4x512xf32, #tpu.memory_space<vmem>>, vector<1x4x512xf32>
    %714 = vector.shape_cast %713 : vector<1x4x512xf32> to vector<4x512xf32>
    %715 = arith.mulf %714, %712 : vector<4x512xf32>
    %716 = arith.addf %699, %715 : vector<4x512xf32>
    %c153 = arith.constant 153 : index
    %c0_352 = arith.constant 0 : index
    %c0_353 = arith.constant 0 : index
    %717 = vector.load %arg2[%c153, %c0_352, %c0_353] : memref<275x4x512xf32, #tpu.memory_space<vmem>>, vector<1x4x512xf32>
    %718 = vector.shape_cast %717 : vector<1x4x512xf32> to vector<4x512xf32>
    %719 = arith.mulf %718, %712 : vector<4x512xf32>
    %720 = arith.addf %703, %719 : vector<4x512xf32>
    %c154 = arith.constant 154 : index
    %c0_354 = arith.constant 0 : index
    %c0_355 = arith.constant 0 : index
    %721 = vector.load %arg2[%c154, %c0_354, %c0_355] : memref<275x4x512xf32, #tpu.memory_space<vmem>>, vector<1x4x512xf32>
    %722 = vector.shape_cast %721 : vector<1x4x512xf32> to vector<4x512xf32>
    %723 = arith.mulf %722, %712 : vector<4x512xf32>
    %724 = arith.addf %707, %723 : vector<4x512xf32>
    %c155 = arith.constant 155 : index
    %c0_356 = arith.constant 0 : index
    %c0_357 = arith.constant 0 : index
    %725 = vector.load %arg2[%c155, %c0_356, %c0_357] : memref<275x4x512xf32, #tpu.memory_space<vmem>>, vector<1x4x512xf32>
    %726 = vector.shape_cast %725 : vector<1x4x512xf32> to vector<4x512xf32>
    %727 = arith.mulf %726, %712 : vector<4x512xf32>
    %728 = arith.addf %711, %727 : vector<4x512xf32>
    %729 = vector.extract_strided_slice %639 {offsets = [0, 106], sizes = [4, 512], strides = [1, 1]} : vector<4x768xf32> to vector<4x512xf32>
    %c156 = arith.constant 156 : index
    %c0_358 = arith.constant 0 : index
    %c0_359 = arith.constant 0 : index
    %730 = vector.load %arg2[%c156, %c0_358, %c0_359] : memref<275x4x512xf32, #tpu.memory_space<vmem>>, vector<1x4x512xf32>
    %731 = vector.shape_cast %730 : vector<1x4x512xf32> to vector<4x512xf32>
    %732 = arith.mulf %731, %729 : vector<4x512xf32>
    %733 = arith.addf %716, %732 : vector<4x512xf32>
    %c157 = arith.constant 157 : index
    %c0_360 = arith.constant 0 : index
    %c0_361 = arith.constant 0 : index
    %734 = vector.load %arg2[%c157, %c0_360, %c0_361] : memref<275x4x512xf32, #tpu.memory_space<vmem>>, vector<1x4x512xf32>
    %735 = vector.shape_cast %734 : vector<1x4x512xf32> to vector<4x512xf32>
    %736 = arith.mulf %735, %729 : vector<4x512xf32>
    %737 = arith.addf %720, %736 : vector<4x512xf32>
    %c158 = arith.constant 158 : index
    %c0_362 = arith.constant 0 : index
    %c0_363 = arith.constant 0 : index
    %738 = vector.load %arg2[%c158, %c0_362, %c0_363] : memref<275x4x512xf32, #tpu.memory_space<vmem>>, vector<1x4x512xf32>
    %739 = vector.shape_cast %738 : vector<1x4x512xf32> to vector<4x512xf32>
    %740 = arith.mulf %739, %729 : vector<4x512xf32>
    %741 = arith.addf %724, %740 : vector<4x512xf32>
    %c159 = arith.constant 159 : index
    %c0_364 = arith.constant 0 : index
    %c0_365 = arith.constant 0 : index
    %742 = vector.load %arg2[%c159, %c0_364, %c0_365] : memref<275x4x512xf32, #tpu.memory_space<vmem>>, vector<1x4x512xf32>
    %743 = vector.shape_cast %742 : vector<1x4x512xf32> to vector<4x512xf32>
    %744 = arith.mulf %743, %729 : vector<4x512xf32>
    %745 = arith.addf %728, %744 : vector<4x512xf32>
    %746 = vector.extract_strided_slice %639 {offsets = [0, 107], sizes = [4, 512], strides = [1, 1]} : vector<4x768xf32> to vector<4x512xf32>
    %c160 = arith.constant 160 : index
    %c0_366 = arith.constant 0 : index
    %c0_367 = arith.constant 0 : index
    %747 = vector.load %arg2[%c160, %c0_366, %c0_367] : memref<275x4x512xf32, #tpu.memory_space<vmem>>, vector<1x4x512xf32>
    %748 = vector.shape_cast %747 : vector<1x4x512xf32> to vector<4x512xf32>
    %749 = arith.mulf %748, %746 : vector<4x512xf32>
    %750 = arith.addf %733, %749 : vector<4x512xf32>
    %c161 = arith.constant 161 : index
    %c0_368 = arith.constant 0 : index
    %c0_369 = arith.constant 0 : index
    %751 = vector.load %arg2[%c161, %c0_368, %c0_369] : memref<275x4x512xf32, #tpu.memory_space<vmem>>, vector<1x4x512xf32>
    %752 = vector.shape_cast %751 : vector<1x4x512xf32> to vector<4x512xf32>
    %753 = arith.mulf %752, %746 : vector<4x512xf32>
    %754 = arith.addf %737, %753 : vector<4x512xf32>
    %c162 = arith.constant 162 : index
    %c0_370 = arith.constant 0 : index
    %c0_371 = arith.constant 0 : index
    %755 = vector.load %arg2[%c162, %c0_370, %c0_371] : memref<275x4x512xf32, #tpu.memory_space<vmem>>, vector<1x4x512xf32>
    %756 = vector.shape_cast %755 : vector<1x4x512xf32> to vector<4x512xf32>
    %757 = arith.mulf %756, %746 : vector<4x512xf32>
    %758 = arith.addf %741, %757 : vector<4x512xf32>
    %c163 = arith.constant 163 : index
    %c0_372 = arith.constant 0 : index
    %c0_373 = arith.constant 0 : index
    %759 = vector.load %arg2[%c163, %c0_372, %c0_373] : memref<275x4x512xf32, #tpu.memory_space<vmem>>, vector<1x4x512xf32>
    %760 = vector.shape_cast %759 : vector<1x4x512xf32> to vector<4x512xf32>
    %761 = arith.mulf %760, %746 : vector<4x512xf32>
    %762 = arith.addf %745, %761 : vector<4x512xf32>
    %763 = vector.extract_strided_slice %639 {offsets = [0, 108], sizes = [4, 512], strides = [1, 1]} : vector<4x768xf32> to vector<4x512xf32>
    %c164 = arith.constant 164 : index
    %c0_374 = arith.constant 0 : index
    %c0_375 = arith.constant 0 : index
    %764 = vector.load %arg2[%c164, %c0_374, %c0_375] : memref<275x4x512xf32, #tpu.memory_space<vmem>>, vector<1x4x512xf32>
    %765 = vector.shape_cast %764 : vector<1x4x512xf32> to vector<4x512xf32>
    %766 = arith.mulf %765, %763 : vector<4x512xf32>
    %767 = arith.addf %750, %766 : vector<4x512xf32>
    %c165 = arith.constant 165 : index
    %c0_376 = arith.constant 0 : index
    %c0_377 = arith.constant 0 : index
    %768 = vector.load %arg2[%c165, %c0_376, %c0_377] : memref<275x4x512xf32, #tpu.memory_space<vmem>>, vector<1x4x512xf32>
    %769 = vector.shape_cast %768 : vector<1x4x512xf32> to vector<4x512xf32>
    %770 = arith.mulf %769, %763 : vector<4x512xf32>
    %771 = arith.addf %754, %770 : vector<4x512xf32>
    %c166 = arith.constant 166 : index
    %c0_378 = arith.constant 0 : index
    %c0_379 = arith.constant 0 : index
    %772 = vector.load %arg2[%c166, %c0_378, %c0_379] : memref<275x4x512xf32, #tpu.memory_space<vmem>>, vector<1x4x512xf32>
    %773 = vector.shape_cast %772 : vector<1x4x512xf32> to vector<4x512xf32>
    %774 = arith.mulf %773, %763 : vector<4x512xf32>
    %775 = arith.addf %758, %774 : vector<4x512xf32>
    %c167 = arith.constant 167 : index
    %c0_380 = arith.constant 0 : index
    %c0_381 = arith.constant 0 : index
    %776 = vector.load %arg2[%c167, %c0_380, %c0_381] : memref<275x4x512xf32, #tpu.memory_space<vmem>>, vector<1x4x512xf32>
    %777 = vector.shape_cast %776 : vector<1x4x512xf32> to vector<4x512xf32>
    %778 = arith.mulf %777, %763 : vector<4x512xf32>
    %779 = arith.addf %762, %778 : vector<4x512xf32>
    %780 = vector.extract_strided_slice %639 {offsets = [0, 109], sizes = [4, 512], strides = [1, 1]} : vector<4x768xf32> to vector<4x512xf32>
    %c168 = arith.constant 168 : index
    %c0_382 = arith.constant 0 : index
    %c0_383 = arith.constant 0 : index
    %781 = vector.load %arg2[%c168, %c0_382, %c0_383] : memref<275x4x512xf32, #tpu.memory_space<vmem>>, vector<1x4x512xf32>
    %782 = vector.shape_cast %781 : vector<1x4x512xf32> to vector<4x512xf32>
    %783 = arith.mulf %782, %780 : vector<4x512xf32>
    %784 = arith.addf %767, %783 : vector<4x512xf32>
    %c169 = arith.constant 169 : index
    %c0_384 = arith.constant 0 : index
    %c0_385 = arith.constant 0 : index
    %785 = vector.load %arg2[%c169, %c0_384, %c0_385] : memref<275x4x512xf32, #tpu.memory_space<vmem>>, vector<1x4x512xf32>
    %786 = vector.shape_cast %785 : vector<1x4x512xf32> to vector<4x512xf32>
    %787 = arith.mulf %786, %780 : vector<4x512xf32>
    %788 = arith.addf %771, %787 : vector<4x512xf32>
    %c170_386 = arith.constant 170 : index
    %c0_387 = arith.constant 0 : index
    %c0_388 = arith.constant 0 : index
    %789 = vector.load %arg2[%c170_386, %c0_387, %c0_388] : memref<275x4x512xf32, #tpu.memory_space<vmem>>, vector<1x4x512xf32>
    %790 = vector.shape_cast %789 : vector<1x4x512xf32> to vector<4x512xf32>
    %791 = arith.mulf %790, %780 : vector<4x512xf32>
    %792 = arith.addf %775, %791 : vector<4x512xf32>
    %c171 = arith.constant 171 : index
    %c0_389 = arith.constant 0 : index
    %c0_390 = arith.constant 0 : index
    %793 = vector.load %arg2[%c171, %c0_389, %c0_390] : memref<275x4x512xf32, #tpu.memory_space<vmem>>, vector<1x4x512xf32>
    %794 = vector.shape_cast %793 : vector<1x4x512xf32> to vector<4x512xf32>
    %795 = arith.mulf %794, %780 : vector<4x512xf32>
    %796 = arith.addf %779, %795 : vector<4x512xf32>
    %797 = vector.extract_strided_slice %639 {offsets = [0, 110], sizes = [4, 512], strides = [1, 1]} : vector<4x768xf32> to vector<4x512xf32>
    %c172 = arith.constant 172 : index
    %c0_391 = arith.constant 0 : index
    %c0_392 = arith.constant 0 : index
    %798 = vector.load %arg2[%c172, %c0_391, %c0_392] : memref<275x4x512xf32, #tpu.memory_space<vmem>>, vector<1x4x512xf32>
    %799 = vector.shape_cast %798 : vector<1x4x512xf32> to vector<4x512xf32>
    %800 = arith.mulf %799, %797 : vector<4x512xf32>
    %801 = arith.addf %784, %800 : vector<4x512xf32>
    %c173 = arith.constant 173 : index
    %c0_393 = arith.constant 0 : index
    %c0_394 = arith.constant 0 : index
    %802 = vector.load %arg2[%c173, %c0_393, %c0_394] : memref<275x4x512xf32, #tpu.memory_space<vmem>>, vector<1x4x512xf32>
    %803 = vector.shape_cast %802 : vector<1x4x512xf32> to vector<4x512xf32>
    %804 = arith.mulf %803, %797 : vector<4x512xf32>
    %805 = arith.addf %788, %804 : vector<4x512xf32>
    %c174 = arith.constant 174 : index
    %c0_395 = arith.constant 0 : index
    %c0_396 = arith.constant 0 : index
    %806 = vector.load %arg2[%c174, %c0_395, %c0_396] : memref<275x4x512xf32, #tpu.memory_space<vmem>>, vector<1x4x512xf32>
    %807 = vector.shape_cast %806 : vector<1x4x512xf32> to vector<4x512xf32>
    %808 = arith.mulf %807, %797 : vector<4x512xf32>
    %809 = arith.addf %792, %808 : vector<4x512xf32>
    %c175 = arith.constant 175 : index
    %c0_397 = arith.constant 0 : index
    %c0_398 = arith.constant 0 : index
    %810 = vector.load %arg2[%c175, %c0_397, %c0_398] : memref<275x4x512xf32, #tpu.memory_space<vmem>>, vector<1x4x512xf32>
    %811 = vector.shape_cast %810 : vector<1x4x512xf32> to vector<4x512xf32>
    %812 = arith.mulf %811, %797 : vector<4x512xf32>
    %813 = arith.addf %796, %812 : vector<4x512xf32>
    %814 = vector.extract_strided_slice %639 {offsets = [0, 126], sizes = [4, 512], strides = [1, 1]} : vector<4x768xf32> to vector<4x512xf32>
    %c176 = arith.constant 176 : index
    %c0_399 = arith.constant 0 : index
    %c0_400 = arith.constant 0 : index
    %815 = vector.load %arg2[%c176, %c0_399, %c0_400] : memref<275x4x512xf32, #tpu.memory_space<vmem>>, vector<1x4x512xf32>
    %816 = vector.shape_cast %815 : vector<1x4x512xf32> to vector<4x512xf32>
    %817 = arith.mulf %816, %814 : vector<4x512xf32>
    %818 = arith.addf %801, %817 : vector<4x512xf32>
    %c177 = arith.constant 177 : index
    %c0_401 = arith.constant 0 : index
    %c0_402 = arith.constant 0 : index
    %819 = vector.load %arg2[%c177, %c0_401, %c0_402] : memref<275x4x512xf32, #tpu.memory_space<vmem>>, vector<1x4x512xf32>
    %820 = vector.shape_cast %819 : vector<1x4x512xf32> to vector<4x512xf32>
    %821 = arith.mulf %820, %814 : vector<4x512xf32>
    %822 = arith.addf %805, %821 : vector<4x512xf32>
    %c178 = arith.constant 178 : index
    %c0_403 = arith.constant 0 : index
    %c0_404 = arith.constant 0 : index
    %823 = vector.load %arg2[%c178, %c0_403, %c0_404] : memref<275x4x512xf32, #tpu.memory_space<vmem>>, vector<1x4x512xf32>
    %824 = vector.shape_cast %823 : vector<1x4x512xf32> to vector<4x512xf32>
    %825 = arith.mulf %824, %814 : vector<4x512xf32>
    %826 = arith.addf %809, %825 : vector<4x512xf32>
    %c179 = arith.constant 179 : index
    %c0_405 = arith.constant 0 : index
    %c0_406 = arith.constant 0 : index
    %827 = vector.load %arg2[%c179, %c0_405, %c0_406] : memref<275x4x512xf32, #tpu.memory_space<vmem>>, vector<1x4x512xf32>
    %828 = vector.shape_cast %827 : vector<1x4x512xf32> to vector<4x512xf32>
    %829 = arith.mulf %828, %814 : vector<4x512xf32>
    %830 = arith.addf %813, %829 : vector<4x512xf32>
    %831 = vector.extract_strided_slice %639 {offsets = [0, 127], sizes = [4, 512], strides = [1, 1]} : vector<4x768xf32> to vector<4x512xf32>
    %c180 = arith.constant 180 : index
    %c0_407 = arith.constant 0 : index
    %c0_408 = arith.constant 0 : index
    %832 = vector.load %arg2[%c180, %c0_407, %c0_408] : memref<275x4x512xf32, #tpu.memory_space<vmem>>, vector<1x4x512xf32>
    %833 = vector.shape_cast %832 : vector<1x4x512xf32> to vector<4x512xf32>
    %834 = arith.mulf %833, %831 : vector<4x512xf32>
    %835 = arith.addf %818, %834 : vector<4x512xf32>
    %c181 = arith.constant 181 : index
    %c0_409 = arith.constant 0 : index
    %c0_410 = arith.constant 0 : index
    %836 = vector.load %arg2[%c181, %c0_409, %c0_410] : memref<275x4x512xf32, #tpu.memory_space<vmem>>, vector<1x4x512xf32>
    %837 = vector.shape_cast %836 : vector<1x4x512xf32> to vector<4x512xf32>
    %838 = arith.mulf %837, %831 : vector<4x512xf32>
    %839 = arith.addf %822, %838 : vector<4x512xf32>
    %c182 = arith.constant 182 : index
    %c0_411 = arith.constant 0 : index
    %c0_412 = arith.constant 0 : index
    %840 = vector.load %arg2[%c182, %c0_411, %c0_412] : memref<275x4x512xf32, #tpu.memory_space<vmem>>, vector<1x4x512xf32>
    %841 = vector.shape_cast %840 : vector<1x4x512xf32> to vector<4x512xf32>
    %842 = arith.mulf %841, %831 : vector<4x512xf32>
    %843 = arith.addf %826, %842 : vector<4x512xf32>
    %c183 = arith.constant 183 : index
    %c0_413 = arith.constant 0 : index
    %c0_414 = arith.constant 0 : index
    %844 = vector.load %arg2[%c183, %c0_413, %c0_414] : memref<275x4x512xf32, #tpu.memory_space<vmem>>, vector<1x4x512xf32>
    %845 = vector.shape_cast %844 : vector<1x4x512xf32> to vector<4x512xf32>
    %846 = arith.mulf %845, %831 : vector<4x512xf32>
    %847 = arith.addf %830, %846 : vector<4x512xf32>
    %848 = vector.extract_strided_slice %639 {offsets = [0, 128], sizes = [4, 512], strides = [1, 1]} : vector<4x768xf32> to vector<4x512xf32>
    %c184 = arith.constant 184 : index
    %c0_415 = arith.constant 0 : index
    %c0_416 = arith.constant 0 : index
    %849 = vector.load %arg2[%c184, %c0_415, %c0_416] : memref<275x4x512xf32, #tpu.memory_space<vmem>>, vector<1x4x512xf32>
    %850 = vector.shape_cast %849 : vector<1x4x512xf32> to vector<4x512xf32>
    %851 = arith.mulf %850, %848 : vector<4x512xf32>
    %852 = arith.addf %835, %851 : vector<4x512xf32>
    %c185 = arith.constant 185 : index
    %c0_417 = arith.constant 0 : index
    %c0_418 = arith.constant 0 : index
    %853 = vector.load %arg2[%c185, %c0_417, %c0_418] : memref<275x4x512xf32, #tpu.memory_space<vmem>>, vector<1x4x512xf32>
    %854 = vector.shape_cast %853 : vector<1x4x512xf32> to vector<4x512xf32>
    %855 = arith.mulf %854, %848 : vector<4x512xf32>
    %856 = arith.addf %839, %855 : vector<4x512xf32>
    %c186 = arith.constant 186 : index
    %c0_419 = arith.constant 0 : index
    %c0_420 = arith.constant 0 : index
    %857 = vector.load %arg2[%c186, %c0_419, %c0_420] : memref<275x4x512xf32, #tpu.memory_space<vmem>>, vector<1x4x512xf32>
    %858 = vector.shape_cast %857 : vector<1x4x512xf32> to vector<4x512xf32>
    %859 = arith.mulf %858, %848 : vector<4x512xf32>
    %860 = arith.addf %843, %859 : vector<4x512xf32>
    %c187 = arith.constant 187 : index
    %c0_421 = arith.constant 0 : index
    %c0_422 = arith.constant 0 : index
    %861 = vector.load %arg2[%c187, %c0_421, %c0_422] : memref<275x4x512xf32, #tpu.memory_space<vmem>>, vector<1x4x512xf32>
    %862 = vector.shape_cast %861 : vector<1x4x512xf32> to vector<4x512xf32>
    %863 = arith.mulf %862, %848 : vector<4x512xf32>
    %864 = arith.addf %847, %863 : vector<4x512xf32>
    %865 = vector.extract_strided_slice %639 {offsets = [0, 129], sizes = [4, 512], strides = [1, 1]} : vector<4x768xf32> to vector<4x512xf32>
    %c188 = arith.constant 188 : index
    %c0_423 = arith.constant 0 : index
    %c0_424 = arith.constant 0 : index
    %866 = vector.load %arg2[%c188, %c0_423, %c0_424] : memref<275x4x512xf32, #tpu.memory_space<vmem>>, vector<1x4x512xf32>
    %867 = vector.shape_cast %866 : vector<1x4x512xf32> to vector<4x512xf32>
    %868 = arith.mulf %867, %865 : vector<4x512xf32>
    %869 = arith.addf %852, %868 : vector<4x512xf32>
    %c189 = arith.constant 189 : index
    %c0_425 = arith.constant 0 : index
    %c0_426 = arith.constant 0 : index
    %870 = vector.load %arg2[%c189, %c0_425, %c0_426] : memref<275x4x512xf32, #tpu.memory_space<vmem>>, vector<1x4x512xf32>
    %871 = vector.shape_cast %870 : vector<1x4x512xf32> to vector<4x512xf32>
    %872 = arith.mulf %871, %865 : vector<4x512xf32>
    %873 = arith.addf %856, %872 : vector<4x512xf32>
    %c190_427 = arith.constant 190 : index
    %c0_428 = arith.constant 0 : index
    %c0_429 = arith.constant 0 : index
    %874 = vector.load %arg2[%c190_427, %c0_428, %c0_429] : memref<275x4x512xf32, #tpu.memory_space<vmem>>, vector<1x4x512xf32>
    %875 = vector.shape_cast %874 : vector<1x4x512xf32> to vector<4x512xf32>
    %876 = arith.mulf %875, %865 : vector<4x512xf32>
    %877 = arith.addf %860, %876 : vector<4x512xf32>
    %c191 = arith.constant 191 : index
    %c0_430 = arith.constant 0 : index
    %c0_431 = arith.constant 0 : index
    %878 = vector.load %arg2[%c191, %c0_430, %c0_431] : memref<275x4x512xf32, #tpu.memory_space<vmem>>, vector<1x4x512xf32>
    %879 = vector.shape_cast %878 : vector<1x4x512xf32> to vector<4x512xf32>
    %880 = arith.mulf %879, %865 : vector<4x512xf32>
    %881 = arith.addf %864, %880 : vector<4x512xf32>
    %882 = vector.extract_strided_slice %639 {offsets = [0, 130], sizes = [4, 512], strides = [1, 1]} : vector<4x768xf32> to vector<4x512xf32>
    %c192 = arith.constant 192 : index
    %c0_432 = arith.constant 0 : index
    %c0_433 = arith.constant 0 : index
    %883 = vector.load %arg2[%c192, %c0_432, %c0_433] : memref<275x4x512xf32, #tpu.memory_space<vmem>>, vector<1x4x512xf32>
    %884 = vector.shape_cast %883 : vector<1x4x512xf32> to vector<4x512xf32>
    %885 = arith.mulf %884, %882 : vector<4x512xf32>
    %886 = arith.addf %869, %885 : vector<4x512xf32>
    %c193 = arith.constant 193 : index
    %c0_434 = arith.constant 0 : index
    %c0_435 = arith.constant 0 : index
    %887 = vector.load %arg2[%c193, %c0_434, %c0_435] : memref<275x4x512xf32, #tpu.memory_space<vmem>>, vector<1x4x512xf32>
    %888 = vector.shape_cast %887 : vector<1x4x512xf32> to vector<4x512xf32>
    %889 = arith.mulf %888, %882 : vector<4x512xf32>
    %890 = arith.addf %873, %889 : vector<4x512xf32>
    %c194 = arith.constant 194 : index
    %c0_436 = arith.constant 0 : index
    %c0_437 = arith.constant 0 : index
    %891 = vector.load %arg2[%c194, %c0_436, %c0_437] : memref<275x4x512xf32, #tpu.memory_space<vmem>>, vector<1x4x512xf32>
    %892 = vector.shape_cast %891 : vector<1x4x512xf32> to vector<4x512xf32>
    %893 = arith.mulf %892, %882 : vector<4x512xf32>
    %894 = arith.addf %877, %893 : vector<4x512xf32>
    %c195 = arith.constant 195 : index
    %c0_438 = arith.constant 0 : index
    %c0_439 = arith.constant 0 : index
    %895 = vector.load %arg2[%c195, %c0_438, %c0_439] : memref<275x4x512xf32, #tpu.memory_space<vmem>>, vector<1x4x512xf32>
    %896 = vector.shape_cast %895 : vector<1x4x512xf32> to vector<4x512xf32>
    %897 = arith.mulf %896, %882 : vector<4x512xf32>
    %898 = arith.addf %881, %897 : vector<4x512xf32>
    %899 = vector.extract_strided_slice %639 {offsets = [0, 146], sizes = [4, 512], strides = [1, 1]} : vector<4x768xf32> to vector<4x512xf32>
    %c196 = arith.constant 196 : index
    %c0_440 = arith.constant 0 : index
    %c0_441 = arith.constant 0 : index
    %900 = vector.load %arg2[%c196, %c0_440, %c0_441] : memref<275x4x512xf32, #tpu.memory_space<vmem>>, vector<1x4x512xf32>
    %901 = vector.shape_cast %900 : vector<1x4x512xf32> to vector<4x512xf32>
    %902 = arith.mulf %901, %899 : vector<4x512xf32>
    %903 = arith.addf %886, %902 : vector<4x512xf32>
    %c197 = arith.constant 197 : index
    %c0_442 = arith.constant 0 : index
    %c0_443 = arith.constant 0 : index
    %904 = vector.load %arg2[%c197, %c0_442, %c0_443] : memref<275x4x512xf32, #tpu.memory_space<vmem>>, vector<1x4x512xf32>
    %905 = vector.shape_cast %904 : vector<1x4x512xf32> to vector<4x512xf32>
    %906 = arith.mulf %905, %899 : vector<4x512xf32>
    %907 = arith.addf %890, %906 : vector<4x512xf32>
    %c198 = arith.constant 198 : index
    %c0_444 = arith.constant 0 : index
    %c0_445 = arith.constant 0 : index
    %908 = vector.load %arg2[%c198, %c0_444, %c0_445] : memref<275x4x512xf32, #tpu.memory_space<vmem>>, vector<1x4x512xf32>
    %909 = vector.shape_cast %908 : vector<1x4x512xf32> to vector<4x512xf32>
    %910 = arith.mulf %909, %899 : vector<4x512xf32>
    %911 = arith.addf %894, %910 : vector<4x512xf32>
    %c199 = arith.constant 199 : index
    %c0_446 = arith.constant 0 : index
    %c0_447 = arith.constant 0 : index
    %912 = vector.load %arg2[%c199, %c0_446, %c0_447] : memref<275x4x512xf32, #tpu.memory_space<vmem>>, vector<1x4x512xf32>
    %913 = vector.shape_cast %912 : vector<1x4x512xf32> to vector<4x512xf32>
    %914 = arith.mulf %913, %899 : vector<4x512xf32>
    %915 = arith.addf %898, %914 : vector<4x512xf32>
    %916 = vector.extract_strided_slice %639 {offsets = [0, 147], sizes = [4, 512], strides = [1, 1]} : vector<4x768xf32> to vector<4x512xf32>
    %c200 = arith.constant 200 : index
    %c0_448 = arith.constant 0 : index
    %c0_449 = arith.constant 0 : index
    %917 = vector.load %arg2[%c200, %c0_448, %c0_449] : memref<275x4x512xf32, #tpu.memory_space<vmem>>, vector<1x4x512xf32>
    %918 = vector.shape_cast %917 : vector<1x4x512xf32> to vector<4x512xf32>
    %919 = arith.mulf %918, %916 : vector<4x512xf32>
    %920 = arith.addf %903, %919 : vector<4x512xf32>
    %c201 = arith.constant 201 : index
    %c0_450 = arith.constant 0 : index
    %c0_451 = arith.constant 0 : index
    %921 = vector.load %arg2[%c201, %c0_450, %c0_451] : memref<275x4x512xf32, #tpu.memory_space<vmem>>, vector<1x4x512xf32>
    %922 = vector.shape_cast %921 : vector<1x4x512xf32> to vector<4x512xf32>
    %923 = arith.mulf %922, %916 : vector<4x512xf32>
    %924 = arith.addf %907, %923 : vector<4x512xf32>
    %c202 = arith.constant 202 : index
    %c0_452 = arith.constant 0 : index
    %c0_453 = arith.constant 0 : index
    %925 = vector.load %arg2[%c202, %c0_452, %c0_453] : memref<275x4x512xf32, #tpu.memory_space<vmem>>, vector<1x4x512xf32>
    %926 = vector.shape_cast %925 : vector<1x4x512xf32> to vector<4x512xf32>
    %927 = arith.mulf %926, %916 : vector<4x512xf32>
    %928 = arith.addf %911, %927 : vector<4x512xf32>
    %c203 = arith.constant 203 : index
    %c0_454 = arith.constant 0 : index
    %c0_455 = arith.constant 0 : index
    %929 = vector.load %arg2[%c203, %c0_454, %c0_455] : memref<275x4x512xf32, #tpu.memory_space<vmem>>, vector<1x4x512xf32>
    %930 = vector.shape_cast %929 : vector<1x4x512xf32> to vector<4x512xf32>
    %931 = arith.mulf %930, %916 : vector<4x512xf32>
    %932 = arith.addf %915, %931 : vector<4x512xf32>
    %933 = vector.extract_strided_slice %639 {offsets = [0, 148], sizes = [4, 512], strides = [1, 1]} : vector<4x768xf32> to vector<4x512xf32>
    %c204 = arith.constant 204 : index
    %c0_456 = arith.constant 0 : index
    %c0_457 = arith.constant 0 : index
    %934 = vector.load %arg2[%c204, %c0_456, %c0_457] : memref<275x4x512xf32, #tpu.memory_space<vmem>>, vector<1x4x512xf32>
    %935 = vector.shape_cast %934 : vector<1x4x512xf32> to vector<4x512xf32>
    %936 = arith.mulf %935, %933 : vector<4x512xf32>
    %937 = arith.addf %920, %936 : vector<4x512xf32>
    %c205 = arith.constant 205 : index
    %c0_458 = arith.constant 0 : index
    %c0_459 = arith.constant 0 : index
    %938 = vector.load %arg2[%c205, %c0_458, %c0_459] : memref<275x4x512xf32, #tpu.memory_space<vmem>>, vector<1x4x512xf32>
    %939 = vector.shape_cast %938 : vector<1x4x512xf32> to vector<4x512xf32>
    %940 = arith.mulf %939, %933 : vector<4x512xf32>
    %941 = arith.addf %924, %940 : vector<4x512xf32>
    %c206 = arith.constant 206 : index
    %c0_460 = arith.constant 0 : index
    %c0_461 = arith.constant 0 : index
    %942 = vector.load %arg2[%c206, %c0_460, %c0_461] : memref<275x4x512xf32, #tpu.memory_space<vmem>>, vector<1x4x512xf32>
    %943 = vector.shape_cast %942 : vector<1x4x512xf32> to vector<4x512xf32>
    %944 = arith.mulf %943, %933 : vector<4x512xf32>
    %945 = arith.addf %928, %944 : vector<4x512xf32>
    %c207 = arith.constant 207 : index
    %c0_462 = arith.constant 0 : index
    %c0_463 = arith.constant 0 : index
    %946 = vector.load %arg2[%c207, %c0_462, %c0_463] : memref<275x4x512xf32, #tpu.memory_space<vmem>>, vector<1x4x512xf32>
    %947 = vector.shape_cast %946 : vector<1x4x512xf32> to vector<4x512xf32>
    %948 = arith.mulf %947, %933 : vector<4x512xf32>
    %949 = arith.addf %932, %948 : vector<4x512xf32>
    %950 = vector.extract_strided_slice %639 {offsets = [0, 149], sizes = [4, 512], strides = [1, 1]} : vector<4x768xf32> to vector<4x512xf32>
    %c208 = arith.constant 208 : index
    %c0_464 = arith.constant 0 : index
    %c0_465 = arith.constant 0 : index
    %951 = vector.load %arg2[%c208, %c0_464, %c0_465] : memref<275x4x512xf32, #tpu.memory_space<vmem>>, vector<1x4x512xf32>
    %952 = vector.shape_cast %951 : vector<1x4x512xf32> to vector<4x512xf32>
    %953 = arith.mulf %952, %950 : vector<4x512xf32>
    %954 = arith.addf %937, %953 : vector<4x512xf32>
    %c209 = arith.constant 209 : index
    %c0_466 = arith.constant 0 : index
    %c0_467 = arith.constant 0 : index
    %955 = vector.load %arg2[%c209, %c0_466, %c0_467] : memref<275x4x512xf32, #tpu.memory_space<vmem>>, vector<1x4x512xf32>
    %956 = vector.shape_cast %955 : vector<1x4x512xf32> to vector<4x512xf32>
    %957 = arith.mulf %956, %950 : vector<4x512xf32>
    %958 = arith.addf %941, %957 : vector<4x512xf32>
    %c210_468 = arith.constant 210 : index
    %c0_469 = arith.constant 0 : index
    %c0_470 = arith.constant 0 : index
    %959 = vector.load %arg2[%c210_468, %c0_469, %c0_470] : memref<275x4x512xf32, #tpu.memory_space<vmem>>, vector<1x4x512xf32>
    %960 = vector.shape_cast %959 : vector<1x4x512xf32> to vector<4x512xf32>
    %961 = arith.mulf %960, %950 : vector<4x512xf32>
    %962 = arith.addf %945, %961 : vector<4x512xf32>
    %c211 = arith.constant 211 : index
    %c0_471 = arith.constant 0 : index
    %c0_472 = arith.constant 0 : index
    %963 = vector.load %arg2[%c211, %c0_471, %c0_472] : memref<275x4x512xf32, #tpu.memory_space<vmem>>, vector<1x4x512xf32>
    %964 = vector.shape_cast %963 : vector<1x4x512xf32> to vector<4x512xf32>
    %965 = arith.mulf %964, %950 : vector<4x512xf32>
    %966 = arith.addf %949, %965 : vector<4x512xf32>
    %967 = vector.extract_strided_slice %639 {offsets = [0, 150], sizes = [4, 512], strides = [1, 1]} : vector<4x768xf32> to vector<4x512xf32>
    %c212 = arith.constant 212 : index
    %c0_473 = arith.constant 0 : index
    %c0_474 = arith.constant 0 : index
    %968 = vector.load %arg2[%c212, %c0_473, %c0_474] : memref<275x4x512xf32, #tpu.memory_space<vmem>>, vector<1x4x512xf32>
    %969 = vector.shape_cast %968 : vector<1x4x512xf32> to vector<4x512xf32>
    %970 = arith.mulf %969, %967 : vector<4x512xf32>
    %971 = arith.addf %954, %970 : vector<4x512xf32>
    %c213 = arith.constant 213 : index
    %c0_475 = arith.constant 0 : index
    %c0_476 = arith.constant 0 : index
    %972 = vector.load %arg2[%c213, %c0_475, %c0_476] : memref<275x4x512xf32, #tpu.memory_space<vmem>>, vector<1x4x512xf32>
    %973 = vector.shape_cast %972 : vector<1x4x512xf32> to vector<4x512xf32>
    %974 = arith.mulf %973, %967 : vector<4x512xf32>
    %975 = arith.addf %958, %974 : vector<4x512xf32>
    %c214 = arith.constant 214 : index
    %c0_477 = arith.constant 0 : index
    %c0_478 = arith.constant 0 : index
    %976 = vector.load %arg2[%c214, %c0_477, %c0_478] : memref<275x4x512xf32, #tpu.memory_space<vmem>>, vector<1x4x512xf32>
    %977 = vector.shape_cast %976 : vector<1x4x512xf32> to vector<4x512xf32>
    %978 = arith.mulf %977, %967 : vector<4x512xf32>
    %979 = arith.addf %962, %978 : vector<4x512xf32>
    %c215 = arith.constant 215 : index
    %c0_479 = arith.constant 0 : index
    %c0_480 = arith.constant 0 : index
    %980 = vector.load %arg2[%c215, %c0_479, %c0_480] : memref<275x4x512xf32, #tpu.memory_space<vmem>>, vector<1x4x512xf32>
    %981 = vector.shape_cast %980 : vector<1x4x512xf32> to vector<4x512xf32>
    %982 = arith.mulf %981, %967 : vector<4x512xf32>
    %983 = arith.addf %966, %982 : vector<4x512xf32>
    %984 = vector.extract_strided_slice %639 {offsets = [0, 166], sizes = [4, 512], strides = [1, 1]} : vector<4x768xf32> to vector<4x512xf32>
    %c216 = arith.constant 216 : index
    %c0_481 = arith.constant 0 : index
    %c0_482 = arith.constant 0 : index
    %985 = vector.load %arg2[%c216, %c0_481, %c0_482] : memref<275x4x512xf32, #tpu.memory_space<vmem>>, vector<1x4x512xf32>
    %986 = vector.shape_cast %985 : vector<1x4x512xf32> to vector<4x512xf32>
    %987 = arith.mulf %986, %984 : vector<4x512xf32>
    %988 = arith.addf %971, %987 : vector<4x512xf32>
    %c217 = arith.constant 217 : index
    %c0_483 = arith.constant 0 : index
    %c0_484 = arith.constant 0 : index
    %989 = vector.load %arg2[%c217, %c0_483, %c0_484] : memref<275x4x512xf32, #tpu.memory_space<vmem>>, vector<1x4x512xf32>
    %990 = vector.shape_cast %989 : vector<1x4x512xf32> to vector<4x512xf32>
    %991 = arith.mulf %990, %984 : vector<4x512xf32>
    %992 = arith.addf %975, %991 : vector<4x512xf32>
    %c218 = arith.constant 218 : index
    %c0_485 = arith.constant 0 : index
    %c0_486 = arith.constant 0 : index
    %993 = vector.load %arg2[%c218, %c0_485, %c0_486] : memref<275x4x512xf32, #tpu.memory_space<vmem>>, vector<1x4x512xf32>
    %994 = vector.shape_cast %993 : vector<1x4x512xf32> to vector<4x512xf32>
    %995 = arith.mulf %994, %984 : vector<4x512xf32>
    %996 = arith.addf %979, %995 : vector<4x512xf32>
    %c219 = arith.constant 219 : index
    %c0_487 = arith.constant 0 : index
    %c0_488 = arith.constant 0 : index
    %997 = vector.load %arg2[%c219, %c0_487, %c0_488] : memref<275x4x512xf32, #tpu.memory_space<vmem>>, vector<1x4x512xf32>
    %998 = vector.shape_cast %997 : vector<1x4x512xf32> to vector<4x512xf32>
    %999 = arith.mulf %998, %984 : vector<4x512xf32>
    %1000 = arith.addf %983, %999 : vector<4x512xf32>
    %1001 = vector.extract_strided_slice %639 {offsets = [0, 167], sizes = [4, 512], strides = [1, 1]} : vector<4x768xf32> to vector<4x512xf32>
    %c220 = arith.constant 220 : index
    %c0_489 = arith.constant 0 : index
    %c0_490 = arith.constant 0 : index
    %1002 = vector.load %arg2[%c220, %c0_489, %c0_490] : memref<275x4x512xf32, #tpu.memory_space<vmem>>, vector<1x4x512xf32>
    %1003 = vector.shape_cast %1002 : vector<1x4x512xf32> to vector<4x512xf32>
    %1004 = arith.mulf %1003, %1001 : vector<4x512xf32>
    %1005 = arith.addf %988, %1004 : vector<4x512xf32>
    %c221 = arith.constant 221 : index
    %c0_491 = arith.constant 0 : index
    %c0_492 = arith.constant 0 : index
    %1006 = vector.load %arg2[%c221, %c0_491, %c0_492] : memref<275x4x512xf32, #tpu.memory_space<vmem>>, vector<1x4x512xf32>
    %1007 = vector.shape_cast %1006 : vector<1x4x512xf32> to vector<4x512xf32>
    %1008 = arith.mulf %1007, %1001 : vector<4x512xf32>
    %1009 = arith.addf %992, %1008 : vector<4x512xf32>
    %c222 = arith.constant 222 : index
    %c0_493 = arith.constant 0 : index
    %c0_494 = arith.constant 0 : index
    %1010 = vector.load %arg2[%c222, %c0_493, %c0_494] : memref<275x4x512xf32, #tpu.memory_space<vmem>>, vector<1x4x512xf32>
    %1011 = vector.shape_cast %1010 : vector<1x4x512xf32> to vector<4x512xf32>
    %1012 = arith.mulf %1011, %1001 : vector<4x512xf32>
    %1013 = arith.addf %996, %1012 : vector<4x512xf32>
    %c223 = arith.constant 223 : index
    %c0_495 = arith.constant 0 : index
    %c0_496 = arith.constant 0 : index
    %1014 = vector.load %arg2[%c223, %c0_495, %c0_496] : memref<275x4x512xf32, #tpu.memory_space<vmem>>, vector<1x4x512xf32>
    %1015 = vector.shape_cast %1014 : vector<1x4x512xf32> to vector<4x512xf32>
    %1016 = arith.mulf %1015, %1001 : vector<4x512xf32>
    %1017 = arith.addf %1000, %1016 : vector<4x512xf32>
    %1018 = vector.extract_strided_slice %639 {offsets = [0, 168], sizes = [4, 512], strides = [1, 1]} : vector<4x768xf32> to vector<4x512xf32>
    %c224 = arith.constant 224 : index
    %c0_497 = arith.constant 0 : index
    %c0_498 = arith.constant 0 : index
    %1019 = vector.load %arg2[%c224, %c0_497, %c0_498] : memref<275x4x512xf32, #tpu.memory_space<vmem>>, vector<1x4x512xf32>
    %1020 = vector.shape_cast %1019 : vector<1x4x512xf32> to vector<4x512xf32>
    %1021 = arith.mulf %1020, %1018 : vector<4x512xf32>
    %1022 = arith.addf %1005, %1021 : vector<4x512xf32>
    %c225 = arith.constant 225 : index
    %c0_499 = arith.constant 0 : index
    %c0_500 = arith.constant 0 : index
    %1023 = vector.load %arg2[%c225, %c0_499, %c0_500] : memref<275x4x512xf32, #tpu.memory_space<vmem>>, vector<1x4x512xf32>
    %1024 = vector.shape_cast %1023 : vector<1x4x512xf32> to vector<4x512xf32>
    %1025 = arith.mulf %1024, %1018 : vector<4x512xf32>
    %1026 = arith.addf %1009, %1025 : vector<4x512xf32>
    %c226 = arith.constant 226 : index
    %c0_501 = arith.constant 0 : index
    %c0_502 = arith.constant 0 : index
    %1027 = vector.load %arg2[%c226, %c0_501, %c0_502] : memref<275x4x512xf32, #tpu.memory_space<vmem>>, vector<1x4x512xf32>
    %1028 = vector.shape_cast %1027 : vector<1x4x512xf32> to vector<4x512xf32>
    %1029 = arith.mulf %1028, %1018 : vector<4x512xf32>
    %1030 = arith.addf %1013, %1029 : vector<4x512xf32>
    %c227 = arith.constant 227 : index
    %c0_503 = arith.constant 0 : index
    %c0_504 = arith.constant 0 : index
    %1031 = vector.load %arg2[%c227, %c0_503, %c0_504] : memref<275x4x512xf32, #tpu.memory_space<vmem>>, vector<1x4x512xf32>
    %1032 = vector.shape_cast %1031 : vector<1x4x512xf32> to vector<4x512xf32>
    %1033 = arith.mulf %1032, %1018 : vector<4x512xf32>
    %1034 = arith.addf %1017, %1033 : vector<4x512xf32>
    %1035 = vector.extract_strided_slice %639 {offsets = [0, 169], sizes = [4, 512], strides = [1, 1]} : vector<4x768xf32> to vector<4x512xf32>
    %c228 = arith.constant 228 : index
    %c0_505 = arith.constant 0 : index
    %c0_506 = arith.constant 0 : index
    %1036 = vector.load %arg2[%c228, %c0_505, %c0_506] : memref<275x4x512xf32, #tpu.memory_space<vmem>>, vector<1x4x512xf32>
    %1037 = vector.shape_cast %1036 : vector<1x4x512xf32> to vector<4x512xf32>
    %1038 = arith.mulf %1037, %1035 : vector<4x512xf32>
    %1039 = arith.addf %1022, %1038 : vector<4x512xf32>
    %c229 = arith.constant 229 : index
    %c0_507 = arith.constant 0 : index
    %c0_508 = arith.constant 0 : index
    %1040 = vector.load %arg2[%c229, %c0_507, %c0_508] : memref<275x4x512xf32, #tpu.memory_space<vmem>>, vector<1x4x512xf32>
    %1041 = vector.shape_cast %1040 : vector<1x4x512xf32> to vector<4x512xf32>
    %1042 = arith.mulf %1041, %1035 : vector<4x512xf32>
    %1043 = arith.addf %1026, %1042 : vector<4x512xf32>
    %c230_509 = arith.constant 230 : index
    %c0_510 = arith.constant 0 : index
    %c0_511 = arith.constant 0 : index
    %1044 = vector.load %arg2[%c230_509, %c0_510, %c0_511] : memref<275x4x512xf32, #tpu.memory_space<vmem>>, vector<1x4x512xf32>
    %1045 = vector.shape_cast %1044 : vector<1x4x512xf32> to vector<4x512xf32>
    %1046 = arith.mulf %1045, %1035 : vector<4x512xf32>
    %1047 = arith.addf %1030, %1046 : vector<4x512xf32>
    %c231 = arith.constant 231 : index
    %c0_512 = arith.constant 0 : index
    %c0_513 = arith.constant 0 : index
    %1048 = vector.load %arg2[%c231, %c0_512, %c0_513] : memref<275x4x512xf32, #tpu.memory_space<vmem>>, vector<1x4x512xf32>
    %1049 = vector.shape_cast %1048 : vector<1x4x512xf32> to vector<4x512xf32>
    %1050 = arith.mulf %1049, %1035 : vector<4x512xf32>
    %1051 = arith.addf %1034, %1050 : vector<4x512xf32>
    %1052 = vector.extract_strided_slice %639 {offsets = [0, 170], sizes = [4, 512], strides = [1, 1]} : vector<4x768xf32> to vector<4x512xf32>
    %c232 = arith.constant 232 : index
    %c0_514 = arith.constant 0 : index
    %c0_515 = arith.constant 0 : index
    %1053 = vector.load %arg2[%c232, %c0_514, %c0_515] : memref<275x4x512xf32, #tpu.memory_space<vmem>>, vector<1x4x512xf32>
    %1054 = vector.shape_cast %1053 : vector<1x4x512xf32> to vector<4x512xf32>
    %1055 = arith.mulf %1054, %1052 : vector<4x512xf32>
    %1056 = arith.addf %1039, %1055 : vector<4x512xf32>
    %c233 = arith.constant 233 : index
    %c0_516 = arith.constant 0 : index
    %c0_517 = arith.constant 0 : index
    %1057 = vector.load %arg2[%c233, %c0_516, %c0_517] : memref<275x4x512xf32, #tpu.memory_space<vmem>>, vector<1x4x512xf32>
    %1058 = vector.shape_cast %1057 : vector<1x4x512xf32> to vector<4x512xf32>
    %1059 = arith.mulf %1058, %1052 : vector<4x512xf32>
    %1060 = arith.addf %1043, %1059 : vector<4x512xf32>
    %c234 = arith.constant 234 : index
    %c0_518 = arith.constant 0 : index
    %c0_519 = arith.constant 0 : index
    %1061 = vector.load %arg2[%c234, %c0_518, %c0_519] : memref<275x4x512xf32, #tpu.memory_space<vmem>>, vector<1x4x512xf32>
    %1062 = vector.shape_cast %1061 : vector<1x4x512xf32> to vector<4x512xf32>
    %1063 = arith.mulf %1062, %1052 : vector<4x512xf32>
    %1064 = arith.addf %1047, %1063 : vector<4x512xf32>
    %c235 = arith.constant 235 : index
    %c0_520 = arith.constant 0 : index
    %c0_521 = arith.constant 0 : index
    %1065 = vector.load %arg2[%c235, %c0_520, %c0_521] : memref<275x4x512xf32, #tpu.memory_space<vmem>>, vector<1x4x512xf32>
    %1066 = vector.shape_cast %1065 : vector<1x4x512xf32> to vector<4x512xf32>
    %1067 = arith.mulf %1066, %1052 : vector<4x512xf32>
    %1068 = arith.addf %1051, %1067 : vector<4x512xf32>
    %1069 = vector.extract_strided_slice %639 {offsets = [0, 107], sizes = [4, 512], strides = [1, 1]} : vector<4x768xf32> to vector<4x512xf32>
    %c236 = arith.constant 236 : index
    %c0_522 = arith.constant 0 : index
    %c0_523 = arith.constant 0 : index
    %1070 = vector.load %arg2[%c236, %c0_522, %c0_523] : memref<275x4x512xf32, #tpu.memory_space<vmem>>, vector<1x4x512xf32>
    %1071 = vector.shape_cast %1070 : vector<1x4x512xf32> to vector<4x512xf32>
    %1072 = arith.mulf %1071, %1069 : vector<4x512xf32>
    %1073 = arith.addf %1056, %1072 : vector<4x512xf32>
    %c237 = arith.constant 237 : index
    %c0_524 = arith.constant 0 : index
    %c0_525 = arith.constant 0 : index
    %1074 = vector.load %arg2[%c237, %c0_524, %c0_525] : memref<275x4x512xf32, #tpu.memory_space<vmem>>, vector<1x4x512xf32>
    %1075 = vector.shape_cast %1074 : vector<1x4x512xf32> to vector<4x512xf32>
    %1076 = arith.mulf %1075, %1069 : vector<4x512xf32>
    %1077 = arith.addf %1060, %1076 : vector<4x512xf32>
    %c238 = arith.constant 238 : index
    %c0_526 = arith.constant 0 : index
    %c0_527 = arith.constant 0 : index
    %1078 = vector.load %arg2[%c238, %c0_526, %c0_527] : memref<275x4x512xf32, #tpu.memory_space<vmem>>, vector<1x4x512xf32>
    %1079 = vector.shape_cast %1078 : vector<1x4x512xf32> to vector<4x512xf32>
    %1080 = arith.mulf %1079, %1069 : vector<4x512xf32>
    %1081 = arith.addf %1064, %1080 : vector<4x512xf32>
    %c239 = arith.constant 239 : index
    %c0_528 = arith.constant 0 : index
    %c0_529 = arith.constant 0 : index
    %1082 = vector.load %arg2[%c239, %c0_528, %c0_529] : memref<275x4x512xf32, #tpu.memory_space<vmem>>, vector<1x4x512xf32>
    %1083 = vector.shape_cast %1082 : vector<1x4x512xf32> to vector<4x512xf32>
    %1084 = arith.mulf %1083, %1069 : vector<4x512xf32>
    %1085 = arith.addf %1068, %1084 : vector<4x512xf32>
    %1086 = vector.extract_strided_slice %639 {offsets = [0, 108], sizes = [4, 512], strides = [1, 1]} : vector<4x768xf32> to vector<4x512xf32>
    %c240 = arith.constant 240 : index
    %c0_530 = arith.constant 0 : index
    %c0_531 = arith.constant 0 : index
    %1087 = vector.load %arg2[%c240, %c0_530, %c0_531] : memref<275x4x512xf32, #tpu.memory_space<vmem>>, vector<1x4x512xf32>
    %1088 = vector.shape_cast %1087 : vector<1x4x512xf32> to vector<4x512xf32>
    %1089 = arith.mulf %1088, %1086 : vector<4x512xf32>
    %1090 = arith.addf %1073, %1089 : vector<4x512xf32>
    %c241 = arith.constant 241 : index
    %c0_532 = arith.constant 0 : index
    %c0_533 = arith.constant 0 : index
    %1091 = vector.load %arg2[%c241, %c0_532, %c0_533] : memref<275x4x512xf32, #tpu.memory_space<vmem>>, vector<1x4x512xf32>
    %1092 = vector.shape_cast %1091 : vector<1x4x512xf32> to vector<4x512xf32>
    %1093 = arith.mulf %1092, %1086 : vector<4x512xf32>
    %1094 = arith.addf %1077, %1093 : vector<4x512xf32>
    %c242 = arith.constant 242 : index
    %c0_534 = arith.constant 0 : index
    %c0_535 = arith.constant 0 : index
    %1095 = vector.load %arg2[%c242, %c0_534, %c0_535] : memref<275x4x512xf32, #tpu.memory_space<vmem>>, vector<1x4x512xf32>
    %1096 = vector.shape_cast %1095 : vector<1x4x512xf32> to vector<4x512xf32>
    %1097 = arith.mulf %1096, %1086 : vector<4x512xf32>
    %1098 = arith.addf %1081, %1097 : vector<4x512xf32>
    %c243 = arith.constant 243 : index
    %c0_536 = arith.constant 0 : index
    %c0_537 = arith.constant 0 : index
    %1099 = vector.load %arg2[%c243, %c0_536, %c0_537] : memref<275x4x512xf32, #tpu.memory_space<vmem>>, vector<1x4x512xf32>
    %1100 = vector.shape_cast %1099 : vector<1x4x512xf32> to vector<4x512xf32>
    %1101 = arith.mulf %1100, %1086 : vector<4x512xf32>
    %1102 = arith.addf %1085, %1101 : vector<4x512xf32>
    %1103 = vector.extract_strided_slice %639 {offsets = [0, 109], sizes = [4, 512], strides = [1, 1]} : vector<4x768xf32> to vector<4x512xf32>
    %c244 = arith.constant 244 : index
    %c0_538 = arith.constant 0 : index
    %c0_539 = arith.constant 0 : index
    %1104 = vector.load %arg2[%c244, %c0_538, %c0_539] : memref<275x4x512xf32, #tpu.memory_space<vmem>>, vector<1x4x512xf32>
    %1105 = vector.shape_cast %1104 : vector<1x4x512xf32> to vector<4x512xf32>
    %1106 = arith.mulf %1105, %1103 : vector<4x512xf32>
    %1107 = arith.addf %1090, %1106 : vector<4x512xf32>
    %c245 = arith.constant 245 : index
    %c0_540 = arith.constant 0 : index
    %c0_541 = arith.constant 0 : index
    %1108 = vector.load %arg2[%c245, %c0_540, %c0_541] : memref<275x4x512xf32, #tpu.memory_space<vmem>>, vector<1x4x512xf32>
    %1109 = vector.shape_cast %1108 : vector<1x4x512xf32> to vector<4x512xf32>
    %1110 = arith.mulf %1109, %1103 : vector<4x512xf32>
    %1111 = arith.addf %1094, %1110 : vector<4x512xf32>
    %c246 = arith.constant 246 : index
    %c0_542 = arith.constant 0 : index
    %c0_543 = arith.constant 0 : index
    %1112 = vector.load %arg2[%c246, %c0_542, %c0_543] : memref<275x4x512xf32, #tpu.memory_space<vmem>>, vector<1x4x512xf32>
    %1113 = vector.shape_cast %1112 : vector<1x4x512xf32> to vector<4x512xf32>
    %1114 = arith.mulf %1113, %1103 : vector<4x512xf32>
    %1115 = arith.addf %1098, %1114 : vector<4x512xf32>
    %c247 = arith.constant 247 : index
    %c0_544 = arith.constant 0 : index
    %c0_545 = arith.constant 0 : index
    %1116 = vector.load %arg2[%c247, %c0_544, %c0_545] : memref<275x4x512xf32, #tpu.memory_space<vmem>>, vector<1x4x512xf32>
    %1117 = vector.shape_cast %1116 : vector<1x4x512xf32> to vector<4x512xf32>
    %1118 = arith.mulf %1117, %1103 : vector<4x512xf32>
    %1119 = arith.addf %1102, %1118 : vector<4x512xf32>
    %1120 = vector.extract_strided_slice %639 {offsets = [0, 127], sizes = [4, 512], strides = [1, 1]} : vector<4x768xf32> to vector<4x512xf32>
    %c248 = arith.constant 248 : index
    %c0_546 = arith.constant 0 : index
    %c0_547 = arith.constant 0 : index
    %1121 = vector.load %arg2[%c248, %c0_546, %c0_547] : memref<275x4x512xf32, #tpu.memory_space<vmem>>, vector<1x4x512xf32>
    %1122 = vector.shape_cast %1121 : vector<1x4x512xf32> to vector<4x512xf32>
    %1123 = arith.mulf %1122, %1120 : vector<4x512xf32>
    %1124 = arith.addf %1107, %1123 : vector<4x512xf32>
    %c249 = arith.constant 249 : index
    %c0_548 = arith.constant 0 : index
    %c0_549 = arith.constant 0 : index
    %1125 = vector.load %arg2[%c249, %c0_548, %c0_549] : memref<275x4x512xf32, #tpu.memory_space<vmem>>, vector<1x4x512xf32>
    %1126 = vector.shape_cast %1125 : vector<1x4x512xf32> to vector<4x512xf32>
    %1127 = arith.mulf %1126, %1120 : vector<4x512xf32>
    %1128 = arith.addf %1111, %1127 : vector<4x512xf32>
    %c250_550 = arith.constant 250 : index
    %c0_551 = arith.constant 0 : index
    %c0_552 = arith.constant 0 : index
    %1129 = vector.load %arg2[%c250_550, %c0_551, %c0_552] : memref<275x4x512xf32, #tpu.memory_space<vmem>>, vector<1x4x512xf32>
    %1130 = vector.shape_cast %1129 : vector<1x4x512xf32> to vector<4x512xf32>
    %1131 = arith.mulf %1130, %1120 : vector<4x512xf32>
    %1132 = arith.addf %1115, %1131 : vector<4x512xf32>
    %c251 = arith.constant 251 : index
    %c0_553 = arith.constant 0 : index
    %c0_554 = arith.constant 0 : index
    %1133 = vector.load %arg2[%c251, %c0_553, %c0_554] : memref<275x4x512xf32, #tpu.memory_space<vmem>>, vector<1x4x512xf32>
    %1134 = vector.shape_cast %1133 : vector<1x4x512xf32> to vector<4x512xf32>
    %1135 = arith.mulf %1134, %1120 : vector<4x512xf32>
    %1136 = arith.addf %1119, %1135 : vector<4x512xf32>
    %1137 = vector.extract_strided_slice %639 {offsets = [0, 128], sizes = [4, 512], strides = [1, 1]} : vector<4x768xf32> to vector<4x512xf32>
    %c252 = arith.constant 252 : index
    %c0_555 = arith.constant 0 : index
    %c0_556 = arith.constant 0 : index
    %1138 = vector.load %arg2[%c252, %c0_555, %c0_556] : memref<275x4x512xf32, #tpu.memory_space<vmem>>, vector<1x4x512xf32>
    %1139 = vector.shape_cast %1138 : vector<1x4x512xf32> to vector<4x512xf32>
    %1140 = arith.mulf %1139, %1137 : vector<4x512xf32>
    %1141 = arith.addf %1124, %1140 : vector<4x512xf32>
    %c253 = arith.constant 253 : index
    %c0_557 = arith.constant 0 : index
    %c0_558 = arith.constant 0 : index
    %1142 = vector.load %arg2[%c253, %c0_557, %c0_558] : memref<275x4x512xf32, #tpu.memory_space<vmem>>, vector<1x4x512xf32>
    %1143 = vector.shape_cast %1142 : vector<1x4x512xf32> to vector<4x512xf32>
    %1144 = arith.mulf %1143, %1137 : vector<4x512xf32>
    %1145 = arith.addf %1128, %1144 : vector<4x512xf32>
    %c254 = arith.constant 254 : index
    %c0_559 = arith.constant 0 : index
    %c0_560 = arith.constant 0 : index
    %1146 = vector.load %arg2[%c254, %c0_559, %c0_560] : memref<275x4x512xf32, #tpu.memory_space<vmem>>, vector<1x4x512xf32>
    %1147 = vector.shape_cast %1146 : vector<1x4x512xf32> to vector<4x512xf32>
    %1148 = arith.mulf %1147, %1137 : vector<4x512xf32>
    %1149 = arith.addf %1132, %1148 : vector<4x512xf32>
    %c255 = arith.constant 255 : index
    %c0_561 = arith.constant 0 : index
    %c0_562 = arith.constant 0 : index
    %1150 = vector.load %arg2[%c255, %c0_561, %c0_562] : memref<275x4x512xf32, #tpu.memory_space<vmem>>, vector<1x4x512xf32>
    %1151 = vector.shape_cast %1150 : vector<1x4x512xf32> to vector<4x512xf32>
    %1152 = arith.mulf %1151, %1137 : vector<4x512xf32>
    %1153 = arith.addf %1136, %1152 : vector<4x512xf32>
    %1154 = vector.extract_strided_slice %639 {offsets = [0, 129], sizes = [4, 512], strides = [1, 1]} : vector<4x768xf32> to vector<4x512xf32>
    %c256 = arith.constant 256 : index
    %c0_563 = arith.constant 0 : index
    %c0_564 = arith.constant 0 : index
    %1155 = vector.load %arg2[%c256, %c0_563, %c0_564] : memref<275x4x512xf32, #tpu.memory_space<vmem>>, vector<1x4x512xf32>
    %1156 = vector.shape_cast %1155 : vector<1x4x512xf32> to vector<4x512xf32>
    %1157 = arith.mulf %1156, %1154 : vector<4x512xf32>
    %1158 = arith.addf %1141, %1157 : vector<4x512xf32>
    %c257 = arith.constant 257 : index
    %c0_565 = arith.constant 0 : index
    %c0_566 = arith.constant 0 : index
    %1159 = vector.load %arg2[%c257, %c0_565, %c0_566] : memref<275x4x512xf32, #tpu.memory_space<vmem>>, vector<1x4x512xf32>
    %1160 = vector.shape_cast %1159 : vector<1x4x512xf32> to vector<4x512xf32>
    %1161 = arith.mulf %1160, %1154 : vector<4x512xf32>
    %1162 = arith.addf %1145, %1161 : vector<4x512xf32>
    %c258 = arith.constant 258 : index
    %c0_567 = arith.constant 0 : index
    %c0_568 = arith.constant 0 : index
    %1163 = vector.load %arg2[%c258, %c0_567, %c0_568] : memref<275x4x512xf32, #tpu.memory_space<vmem>>, vector<1x4x512xf32>
    %1164 = vector.shape_cast %1163 : vector<1x4x512xf32> to vector<4x512xf32>
    %1165 = arith.mulf %1164, %1154 : vector<4x512xf32>
    %1166 = arith.addf %1149, %1165 : vector<4x512xf32>
    %c259 = arith.constant 259 : index
    %c0_569 = arith.constant 0 : index
    %c0_570 = arith.constant 0 : index
    %1167 = vector.load %arg2[%c259, %c0_569, %c0_570] : memref<275x4x512xf32, #tpu.memory_space<vmem>>, vector<1x4x512xf32>
    %1168 = vector.shape_cast %1167 : vector<1x4x512xf32> to vector<4x512xf32>
    %1169 = arith.mulf %1168, %1154 : vector<4x512xf32>
    %1170 = arith.addf %1153, %1169 : vector<4x512xf32>
    %1171 = vector.extract_strided_slice %639 {offsets = [0, 147], sizes = [4, 512], strides = [1, 1]} : vector<4x768xf32> to vector<4x512xf32>
    %c260 = arith.constant 260 : index
    %c0_571 = arith.constant 0 : index
    %c0_572 = arith.constant 0 : index
    %1172 = vector.load %arg2[%c260, %c0_571, %c0_572] : memref<275x4x512xf32, #tpu.memory_space<vmem>>, vector<1x4x512xf32>
    %1173 = vector.shape_cast %1172 : vector<1x4x512xf32> to vector<4x512xf32>
    %1174 = arith.mulf %1173, %1171 : vector<4x512xf32>
    %1175 = arith.addf %1158, %1174 : vector<4x512xf32>
    %c261 = arith.constant 261 : index
    %c0_573 = arith.constant 0 : index
    %c0_574 = arith.constant 0 : index
    %1176 = vector.load %arg2[%c261, %c0_573, %c0_574] : memref<275x4x512xf32, #tpu.memory_space<vmem>>, vector<1x4x512xf32>
    %1177 = vector.shape_cast %1176 : vector<1x4x512xf32> to vector<4x512xf32>
    %1178 = arith.mulf %1177, %1171 : vector<4x512xf32>
    %1179 = arith.addf %1162, %1178 : vector<4x512xf32>
    %c262 = arith.constant 262 : index
    %c0_575 = arith.constant 0 : index
    %c0_576 = arith.constant 0 : index
    %1180 = vector.load %arg2[%c262, %c0_575, %c0_576] : memref<275x4x512xf32, #tpu.memory_space<vmem>>, vector<1x4x512xf32>
    %1181 = vector.shape_cast %1180 : vector<1x4x512xf32> to vector<4x512xf32>
    %1182 = arith.mulf %1181, %1171 : vector<4x512xf32>
    %1183 = arith.addf %1166, %1182 : vector<4x512xf32>
    %c263 = arith.constant 263 : index
    %c0_577 = arith.constant 0 : index
    %c0_578 = arith.constant 0 : index
    %1184 = vector.load %arg2[%c263, %c0_577, %c0_578] : memref<275x4x512xf32, #tpu.memory_space<vmem>>, vector<1x4x512xf32>
    %1185 = vector.shape_cast %1184 : vector<1x4x512xf32> to vector<4x512xf32>
    %1186 = arith.mulf %1185, %1171 : vector<4x512xf32>
    %1187 = arith.addf %1170, %1186 : vector<4x512xf32>
    %1188 = vector.extract_strided_slice %639 {offsets = [0, 148], sizes = [4, 512], strides = [1, 1]} : vector<4x768xf32> to vector<4x512xf32>
    %c264 = arith.constant 264 : index
    %c0_579 = arith.constant 0 : index
    %c0_580 = arith.constant 0 : index
    %1189 = vector.load %arg2[%c264, %c0_579, %c0_580] : memref<275x4x512xf32, #tpu.memory_space<vmem>>, vector<1x4x512xf32>
    %1190 = vector.shape_cast %1189 : vector<1x4x512xf32> to vector<4x512xf32>
    %1191 = arith.mulf %1190, %1188 : vector<4x512xf32>
    %1192 = arith.addf %1175, %1191 : vector<4x512xf32>
    %c265 = arith.constant 265 : index
    %c0_581 = arith.constant 0 : index
    %c0_582 = arith.constant 0 : index
    %1193 = vector.load %arg2[%c265, %c0_581, %c0_582] : memref<275x4x512xf32, #tpu.memory_space<vmem>>, vector<1x4x512xf32>
    %1194 = vector.shape_cast %1193 : vector<1x4x512xf32> to vector<4x512xf32>
    %1195 = arith.mulf %1194, %1188 : vector<4x512xf32>
    %1196 = arith.addf %1179, %1195 : vector<4x512xf32>
    %c266 = arith.constant 266 : index
    %c0_583 = arith.constant 0 : index
    %c0_584 = arith.constant 0 : index
    %1197 = vector.load %arg2[%c266, %c0_583, %c0_584] : memref<275x4x512xf32, #tpu.memory_space<vmem>>, vector<1x4x512xf32>
    %1198 = vector.shape_cast %1197 : vector<1x4x512xf32> to vector<4x512xf32>
    %1199 = arith.mulf %1198, %1188 : vector<4x512xf32>
    %1200 = arith.addf %1183, %1199 : vector<4x512xf32>
    %c267 = arith.constant 267 : index
    %c0_585 = arith.constant 0 : index
    %c0_586 = arith.constant 0 : index
    %1201 = vector.load %arg2[%c267, %c0_585, %c0_586] : memref<275x4x512xf32, #tpu.memory_space<vmem>>, vector<1x4x512xf32>
    %1202 = vector.shape_cast %1201 : vector<1x4x512xf32> to vector<4x512xf32>
    %1203 = arith.mulf %1202, %1188 : vector<4x512xf32>
    %1204 = arith.addf %1187, %1203 : vector<4x512xf32>
    %1205 = vector.extract_strided_slice %639 {offsets = [0, 149], sizes = [4, 512], strides = [1, 1]} : vector<4x768xf32> to vector<4x512xf32>
    %c268 = arith.constant 268 : index
    %c0_587 = arith.constant 0 : index
    %c0_588 = arith.constant 0 : index
    %1206 = vector.load %arg2[%c268, %c0_587, %c0_588] : memref<275x4x512xf32, #tpu.memory_space<vmem>>, vector<1x4x512xf32>
    %1207 = vector.shape_cast %1206 : vector<1x4x512xf32> to vector<4x512xf32>
    %1208 = arith.mulf %1207, %1205 : vector<4x512xf32>
    %1209 = arith.addf %1192, %1208 : vector<4x512xf32>
    %c269 = arith.constant 269 : index
    %c0_589 = arith.constant 0 : index
    %c0_590 = arith.constant 0 : index
    %1210 = vector.load %arg2[%c269, %c0_589, %c0_590] : memref<275x4x512xf32, #tpu.memory_space<vmem>>, vector<1x4x512xf32>
    %1211 = vector.shape_cast %1210 : vector<1x4x512xf32> to vector<4x512xf32>
    %1212 = arith.mulf %1211, %1205 : vector<4x512xf32>
    %1213 = arith.addf %1196, %1212 : vector<4x512xf32>
    %c270_591 = arith.constant 270 : index
    %c0_592 = arith.constant 0 : index
    %c0_593 = arith.constant 0 : index
    %1214 = vector.load %arg2[%c270_591, %c0_592, %c0_593] : memref<275x4x512xf32, #tpu.memory_space<vmem>>, vector<1x4x512xf32>
    %1215 = vector.shape_cast %1214 : vector<1x4x512xf32> to vector<4x512xf32>
    %1216 = arith.mulf %1215, %1205 : vector<4x512xf32>
    %1217 = arith.addf %1200, %1216 : vector<4x512xf32>
    %c271 = arith.constant 271 : index
    %c0_594 = arith.constant 0 : index
    %c0_595 = arith.constant 0 : index
    %1218 = vector.load %arg2[%c271, %c0_594, %c0_595] : memref<275x4x512xf32, #tpu.memory_space<vmem>>, vector<1x4x512xf32>
    %1219 = vector.shape_cast %1218 : vector<1x4x512xf32> to vector<4x512xf32>
    %1220 = arith.mulf %1219, %1205 : vector<4x512xf32>
    %1221 = arith.addf %1204, %1220 : vector<4x512xf32>
    %cst_596 = arith.constant dense<0.000000e+00> : vector<512xf32>
    %1222 = vector.multi_reduction <add>, %1209, %cst_596 [0] : vector<4x512xf32> to vector<512xf32>
    %1223 = vector.shape_cast %1222 : vector<512xf32> to vector<1x512xf32>
    %cst_597 = arith.constant dense<0.000000e+00> : vector<512xf32>
    %1224 = vector.multi_reduction <add>, %1213, %cst_597 [0] : vector<4x512xf32> to vector<512xf32>
    %1225 = vector.shape_cast %1224 : vector<512xf32> to vector<1x512xf32>
    %cst_598 = arith.constant dense<0.000000e+00> : vector<512xf32>
    %1226 = vector.multi_reduction <add>, %1217, %cst_598 [0] : vector<4x512xf32> to vector<512xf32>
    %1227 = vector.shape_cast %1226 : vector<512xf32> to vector<1x512xf32>
    %cst_599 = arith.constant dense<0.000000e+00> : vector<512xf32>
    %1228 = vector.multi_reduction <add>, %1221, %cst_599 [0] : vector<4x512xf32> to vector<512xf32>
    %1229 = vector.shape_cast %1228 : vector<512xf32> to vector<1x512xf32>
    %1230 = tpu.concatenate %1223, %1225, %1227, %1229 in 0 : vector<1x512xf32>, vector<1x512xf32>, vector<1x512xf32>, vector<1x512xf32> -> vector<4x512xf32>
    %1231 = arith.addf %1230, %7 : vector<4x512xf32>
    %1232 = vector.extract_strided_slice %1231 {offsets = [0, 42], sizes = [4, 16], strides = [1, 1]} : vector<4x512xf32> to vector<4x16xf32>
    %1233 = vector.extract_strided_slice %1 {offsets = [0, 0], sizes = [4, 16], strides = [1, 1]} : vector<4x256xf32> to vector<4x16xf32>
    %1234 = arith.addf %1232, %1233 : vector<4x16xf32>
    %cst_600 = arith.constant 0.000000e+00 : f32
    %1235 = vector.broadcast %cst_600 : f32 to vector<4x16xf32>
    %1236 = arith.maximumf %1234, %1235 : vector<4x16xf32>
    %c0_601 = arith.constant 0 : index
    %c0_602 = arith.constant 0 : index
    %1237 = vector.load %arg4[%c0_601, %c0_602] : memref<4x768xf32, #tpu.memory_space<vmem>>, vector<4x16xf32>
    tpu.vector_store %arg4[%c0_601, %c0_602], %1236 {strides = array<i32>} : memref<4x768xf32, #tpu.memory_space<vmem>>, vector<4x16xf32>,
    %1238 = vector.extract_strided_slice %1231 {offsets = [0, 62], sizes = [4, 16], strides = [1, 1]} : vector<4x512xf32> to vector<4x16xf32>
    %1239 = vector.extract_strided_slice %1 {offsets = [0, 16], sizes = [4, 16], strides = [1, 1]} : vector<4x256xf32> to vector<4x16xf32>
    %1240 = arith.addf %1238, %1239 : vector<4x16xf32>
    %cst_603 = arith.constant 0.000000e+00 : f32
    %1241 = vector.broadcast %cst_603 : f32 to vector<4x16xf32>
    %1242 = arith.maximumf %1240, %1241 : vector<4x16xf32>
    %c0_604 = arith.constant 0 : index
    %c16_605 = arith.constant 16 : index
    %1243 = vector.load %arg4[%c0_604, %c16_605] : memref<4x768xf32, #tpu.memory_space<vmem>>, vector<4x16xf32>
    tpu.vector_store %arg4[%c0_604, %c16_605], %1242 {strides = array<i32>} : memref<4x768xf32, #tpu.memory_space<vmem>>, vector<4x16xf32>,
    %1244 = vector.extract_strided_slice %1231 {offsets = [0, 82], sizes = [4, 16], strides = [1, 1]} : vector<4x512xf32> to vector<4x16xf32>
    %1245 = vector.extract_strided_slice %1 {offsets = [0, 32], sizes = [4, 16], strides = [1, 1]} : vector<4x256xf32> to vector<4x16xf32>
    %1246 = arith.addf %1244, %1245 : vector<4x16xf32>
    %cst_606 = arith.constant 0.000000e+00 : f32
    %1247 = vector.broadcast %cst_606 : f32 to vector<4x16xf32>
    %1248 = arith.maximumf %1246, %1247 : vector<4x16xf32>
    %c0_607 = arith.constant 0 : index
    %c32_608 = arith.constant 32 : index
    %1249 = vector.load %arg4[%c0_607, %c32_608] : memref<4x768xf32, #tpu.memory_space<vmem>>, vector<4x16xf32>
    tpu.vector_store %arg4[%c0_607, %c32_608], %1248 {strides = array<i32>} : memref<4x768xf32, #tpu.memory_space<vmem>>, vector<4x16xf32>,
    %1250 = vector.extract_strided_slice %1231 {offsets = [0, 102], sizes = [4, 16], strides = [1, 1]} : vector<4x512xf32> to vector<4x16xf32>
    %1251 = vector.extract_strided_slice %1 {offsets = [0, 48], sizes = [4, 16], strides = [1, 1]} : vector<4x256xf32> to vector<4x16xf32>
    %1252 = arith.addf %1250, %1251 : vector<4x16xf32>
    %cst_609 = arith.constant 0.000000e+00 : f32
    %1253 = vector.broadcast %cst_609 : f32 to vector<4x16xf32>
    %1254 = arith.maximumf %1252, %1253 : vector<4x16xf32>
    %c0_610 = arith.constant 0 : index
    %c48_611 = arith.constant 48 : index
    %1255 = vector.load %arg4[%c0_610, %c48_611] : memref<4x768xf32, #tpu.memory_space<vmem>>, vector<4x16xf32>
    tpu.vector_store %arg4[%c0_610, %c48_611], %1254 {strides = array<i32>} : memref<4x768xf32, #tpu.memory_space<vmem>>, vector<4x16xf32>,
    %1256 = vector.extract_strided_slice %1231 {offsets = [0, 122], sizes = [4, 16], strides = [1, 1]} : vector<4x512xf32> to vector<4x16xf32>
    %1257 = vector.extract_strided_slice %1 {offsets = [0, 64], sizes = [4, 16], strides = [1, 1]} : vector<4x256xf32> to vector<4x16xf32>
    %1258 = arith.addf %1256, %1257 : vector<4x16xf32>
    %cst_612 = arith.constant 0.000000e+00 : f32
    %1259 = vector.broadcast %cst_612 : f32 to vector<4x16xf32>
    %1260 = arith.maximumf %1258, %1259 : vector<4x16xf32>
    %c0_613 = arith.constant 0 : index
    %c64_614 = arith.constant 64 : index
    %1261 = vector.load %arg4[%c0_613, %c64_614] : memref<4x768xf32, #tpu.memory_space<vmem>>, vector<4x16xf32>
    tpu.vector_store %arg4[%c0_613, %c64_614], %1260 {strides = array<i32>} : memref<4x768xf32, #tpu.memory_space<vmem>>, vector<4x16xf32>,
    %1262 = vector.extract_strided_slice %1231 {offsets = [0, 142], sizes = [4, 16], strides = [1, 1]} : vector<4x512xf32> to vector<4x16xf32>
    %1263 = vector.extract_strided_slice %1 {offsets = [0, 80], sizes = [4, 16], strides = [1, 1]} : vector<4x256xf32> to vector<4x16xf32>
    %1264 = arith.addf %1262, %1263 : vector<4x16xf32>
    %cst_615 = arith.constant 0.000000e+00 : f32
    %1265 = vector.broadcast %cst_615 : f32 to vector<4x16xf32>
    %1266 = arith.maximumf %1264, %1265 : vector<4x16xf32>
    %c0_616 = arith.constant 0 : index
    %c80_617 = arith.constant 80 : index
    %1267 = vector.load %arg4[%c0_616, %c80_617] : memref<4x768xf32, #tpu.memory_space<vmem>>, vector<4x16xf32>
    tpu.vector_store %arg4[%c0_616, %c80_617], %1266 {strides = array<i32>} : memref<4x768xf32, #tpu.memory_space<vmem>>, vector<4x16xf32>,
    %1268 = vector.extract_strided_slice %1231 {offsets = [0, 162], sizes = [4, 16], strides = [1, 1]} : vector<4x512xf32> to vector<4x16xf32>
    %1269 = vector.extract_strided_slice %1 {offsets = [0, 96], sizes = [4, 16], strides = [1, 1]} : vector<4x256xf32> to vector<4x16xf32>
    %1270 = arith.addf %1268, %1269 : vector<4x16xf32>
    %cst_618 = arith.constant 0.000000e+00 : f32
    %1271 = vector.broadcast %cst_618 : f32 to vector<4x16xf32>
    %1272 = arith.maximumf %1270, %1271 : vector<4x16xf32>
    %c0_619 = arith.constant 0 : index
    %c96_620 = arith.constant 96 : index
    %1273 = vector.load %arg4[%c0_619, %c96_620] : memref<4x768xf32, #tpu.memory_space<vmem>>, vector<4x16xf32>
    tpu.vector_store %arg4[%c0_619, %c96_620], %1272 {strides = array<i32>} : memref<4x768xf32, #tpu.memory_space<vmem>>, vector<4x16xf32>,
    %1274 = vector.extract_strided_slice %1231 {offsets = [0, 182], sizes = [4, 16], strides = [1, 1]} : vector<4x512xf32> to vector<4x16xf32>
    %1275 = vector.extract_strided_slice %1 {offsets = [0, 112], sizes = [4, 16], strides = [1, 1]} : vector<4x256xf32> to vector<4x16xf32>
    %1276 = arith.addf %1274, %1275 : vector<4x16xf32>
    %cst_621 = arith.constant 0.000000e+00 : f32
    %1277 = vector.broadcast %cst_621 : f32 to vector<4x16xf32>
    %1278 = arith.maximumf %1276, %1277 : vector<4x16xf32>
    %c0_622 = arith.constant 0 : index
    %c112_623 = arith.constant 112 : index
    %1279 = vector.load %arg4[%c0_622, %c112_623] : memref<4x768xf32, #tpu.memory_space<vmem>>, vector<4x16xf32>
    tpu.vector_store %arg4[%c0_622, %c112_623], %1278 {strides = array<i32>} : memref<4x768xf32, #tpu.memory_space<vmem>>, vector<4x16xf32>,
    %1280 = vector.extract_strided_slice %1231 {offsets = [0, 202], sizes = [4, 16], strides = [1, 1]} : vector<4x512xf32> to vector<4x16xf32>
    %1281 = vector.extract_strided_slice %1 {offsets = [0, 128], sizes = [4, 16], strides = [1, 1]} : vector<4x256xf32> to vector<4x16xf32>
    %1282 = arith.addf %1280, %1281 : vector<4x16xf32>
    %cst_624 = arith.constant 0.000000e+00 : f32
    %1283 = vector.broadcast %cst_624 : f32 to vector<4x16xf32>
    %1284 = arith.maximumf %1282, %1283 : vector<4x16xf32>
    %c0_625 = arith.constant 0 : index
    %c128_626 = arith.constant 128 : index
    %1285 = vector.load %arg4[%c0_625, %c128_626] : memref<4x768xf32, #tpu.memory_space<vmem>>, vector<4x16xf32>
    tpu.vector_store %arg4[%c0_625, %c128_626], %1284 {strides = array<i32>} : memref<4x768xf32, #tpu.memory_space<vmem>>, vector<4x16xf32>,
    %1286 = vector.extract_strided_slice %1231 {offsets = [0, 222], sizes = [4, 16], strides = [1, 1]} : vector<4x512xf32> to vector<4x16xf32>
    %1287 = vector.extract_strided_slice %1 {offsets = [0, 144], sizes = [4, 16], strides = [1, 1]} : vector<4x256xf32> to vector<4x16xf32>
    %1288 = arith.addf %1286, %1287 : vector<4x16xf32>
    %cst_627 = arith.constant 0.000000e+00 : f32
    %1289 = vector.broadcast %cst_627 : f32 to vector<4x16xf32>
    %1290 = arith.maximumf %1288, %1289 : vector<4x16xf32>
    %c0_628 = arith.constant 0 : index
    %c144_629 = arith.constant 144 : index
    %1291 = vector.load %arg4[%c0_628, %c144_629] : memref<4x768xf32, #tpu.memory_space<vmem>>, vector<4x16xf32>
    tpu.vector_store %arg4[%c0_628, %c144_629], %1290 {strides = array<i32>} : memref<4x768xf32, #tpu.memory_space<vmem>>, vector<4x16xf32>,
    %1292 = vector.extract_strided_slice %1231 {offsets = [0, 242], sizes = [4, 16], strides = [1, 1]} : vector<4x512xf32> to vector<4x16xf32>
    %1293 = vector.extract_strided_slice %1 {offsets = [0, 160], sizes = [4, 16], strides = [1, 1]} : vector<4x256xf32> to vector<4x16xf32>
    %1294 = arith.addf %1292, %1293 : vector<4x16xf32>
    %cst_630 = arith.constant 0.000000e+00 : f32
    %1295 = vector.broadcast %cst_630 : f32 to vector<4x16xf32>
    %1296 = arith.maximumf %1294, %1295 : vector<4x16xf32>
    %c0_631 = arith.constant 0 : index
    %c160_632 = arith.constant 160 : index
    %1297 = vector.load %arg4[%c0_631, %c160_632] : memref<4x768xf32, #tpu.memory_space<vmem>>, vector<4x16xf32>
    tpu.vector_store %arg4[%c0_631, %c160_632], %1296 {strides = array<i32>} : memref<4x768xf32, #tpu.memory_space<vmem>>, vector<4x16xf32>,
    %1298 = vector.extract_strided_slice %1231 {offsets = [0, 262], sizes = [4, 16], strides = [1, 1]} : vector<4x512xf32> to vector<4x16xf32>
    %1299 = vector.extract_strided_slice %1 {offsets = [0, 176], sizes = [4, 16], strides = [1, 1]} : vector<4x256xf32> to vector<4x16xf32>
    %1300 = arith.addf %1298, %1299 : vector<4x16xf32>
    %cst_633 = arith.constant 0.000000e+00 : f32
    %1301 = vector.broadcast %cst_633 : f32 to vector<4x16xf32>
    %1302 = arith.maximumf %1300, %1301 : vector<4x16xf32>
    %c0_634 = arith.constant 0 : index
    %c176_635 = arith.constant 176 : index
    %1303 = vector.load %arg4[%c0_634, %c176_635] : memref<4x768xf32, #tpu.memory_space<vmem>>, vector<4x16xf32>
    tpu.vector_store %arg4[%c0_634, %c176_635], %1302 {strides = array<i32>} : memref<4x768xf32, #tpu.memory_space<vmem>>, vector<4x16xf32>,
    %1304 = vector.extract_strided_slice %1231 {offsets = [0, 282], sizes = [4, 16], strides = [1, 1]} : vector<4x512xf32> to vector<4x16xf32>
    %1305 = vector.extract_strided_slice %1 {offsets = [0, 192], sizes = [4, 16], strides = [1, 1]} : vector<4x256xf32> to vector<4x16xf32>
    %1306 = arith.addf %1304, %1305 : vector<4x16xf32>
    %cst_636 = arith.constant 0.000000e+00 : f32
    %1307 = vector.broadcast %cst_636 : f32 to vector<4x16xf32>
    %1308 = arith.maximumf %1306, %1307 : vector<4x16xf32>
    %c0_637 = arith.constant 0 : index
    %c192_638 = arith.constant 192 : index
    %1309 = vector.load %arg4[%c0_637, %c192_638] : memref<4x768xf32, #tpu.memory_space<vmem>>, vector<4x16xf32>
    tpu.vector_store %arg4[%c0_637, %c192_638], %1308 {strides = array<i32>} : memref<4x768xf32, #tpu.memory_space<vmem>>, vector<4x16xf32>,
    %1310 = vector.extract_strided_slice %1231 {offsets = [0, 302], sizes = [4, 16], strides = [1, 1]} : vector<4x512xf32> to vector<4x16xf32>
    %1311 = vector.extract_strided_slice %1 {offsets = [0, 208], sizes = [4, 16], strides = [1, 1]} : vector<4x256xf32> to vector<4x16xf32>
    %1312 = arith.addf %1310, %1311 : vector<4x16xf32>
    %cst_639 = arith.constant 0.000000e+00 : f32
    %1313 = vector.broadcast %cst_639 : f32 to vector<4x16xf32>
    %1314 = arith.maximumf %1312, %1313 : vector<4x16xf32>
    %c0_640 = arith.constant 0 : index
    %c208_641 = arith.constant 208 : index
    %1315 = vector.load %arg4[%c0_640, %c208_641] : memref<4x768xf32, #tpu.memory_space<vmem>>, vector<4x16xf32>
    tpu.vector_store %arg4[%c0_640, %c208_641], %1314 {strides = array<i32>} : memref<4x768xf32, #tpu.memory_space<vmem>>, vector<4x16xf32>,
    %1316 = vector.extract_strided_slice %1231 {offsets = [0, 322], sizes = [4, 16], strides = [1, 1]} : vector<4x512xf32> to vector<4x16xf32>
    %1317 = vector.extract_strided_slice %1 {offsets = [0, 224], sizes = [4, 16], strides = [1, 1]} : vector<4x256xf32> to vector<4x16xf32>
    %1318 = arith.addf %1316, %1317 : vector<4x16xf32>
    %cst_642 = arith.constant 0.000000e+00 : f32
    %1319 = vector.broadcast %cst_642 : f32 to vector<4x16xf32>
    %1320 = arith.maximumf %1318, %1319 : vector<4x16xf32>
    %c0_643 = arith.constant 0 : index
    %c224_644 = arith.constant 224 : index
    %1321 = vector.load %arg4[%c0_643, %c224_644] : memref<4x768xf32, #tpu.memory_space<vmem>>, vector<4x16xf32>
    tpu.vector_store %arg4[%c0_643, %c224_644], %1320 {strides = array<i32>} : memref<4x768xf32, #tpu.memory_space<vmem>>, vector<4x16xf32>,
    %1322 = vector.extract_strided_slice %1231 {offsets = [0, 342], sizes = [4, 16], strides = [1, 1]} : vector<4x512xf32> to vector<4x16xf32>
    %1323 = vector.extract_strided_slice %1 {offsets = [0, 240], sizes = [4, 16], strides = [1, 1]} : vector<4x256xf32> to vector<4x16xf32>
    %1324 = arith.addf %1322, %1323 : vector<4x16xf32>
    %cst_645 = arith.constant 0.000000e+00 : f32
    %1325 = vector.broadcast %cst_645 : f32 to vector<4x16xf32>
    %1326 = arith.maximumf %1324, %1325 : vector<4x16xf32>
    %c0_646 = arith.constant 0 : index
    %c240_647 = arith.constant 240 : index
    %1327 = vector.load %arg4[%c0_646, %c240_647] : memref<4x768xf32, #tpu.memory_space<vmem>>, vector<4x16xf32>
    tpu.vector_store %arg4[%c0_646, %c240_647], %1326 {strides = array<i32>} : memref<4x768xf32, #tpu.memory_space<vmem>>, vector<4x16xf32>,
    %c0_648 = arith.constant 0 : index
    %c0_649 = arith.constant 0 : index
    %1328 = vector.load %arg4[%c0_648, %c0_649] : memref<4x768xf32, #tpu.memory_space<vmem>>, vector<4x256xf32>
    %c0_650 = arith.constant 0 : index
    %c0_651 = arith.constant 0 : index
    %c0_652 = arith.constant 0 : index
    %1329 = vector.load %arg3[%c0_650, %c0_651, %c0_652] : memref<1x4x256xf32, #tpu.memory_space<vmem>>, vector<1x4x256xf32>
    %1330 = vector.shape_cast %1329 : vector<1x4x256xf32> to vector<4x256xf32>
    %1331 = vector.shape_cast %1328 : vector<4x256xf32> to vector<1x4x256xf32>
    tpu.vector_store %arg3[%c0_650, %c0_651, %c0_652], %1331 {strides = array<i32>} : memref<1x4x256xf32, #tpu.memory_space<vmem>>, vector<1x4x256xf32>,
    return
  }
  func.func @transform_0(%arg0: i32) -> (i32, i32, i32) {
    %c0_i32 = arith.constant 0 : i32
    %c0_i32_0 = arith.constant 0 : i32
    %c0_i32_1 = arith.constant 0 : i32
    return %arg0, %c0_i32, %c0_i32_0 : i32, i32, i32
  }
  func.func @transform_1(%arg0: i32) -> (i32, i32, i32) {
    %c0_i32 = arith.constant 0 : i32
    %c0_i32_0 = arith.constant 0 : i32
    %c0_i32_1 = arith.constant 0 : i32
    %c0_i32_2 = arith.constant 0 : i32
    return %c0_i32, %c0_i32_0, %c0_i32_1 : i32, i32, i32
  }
  func.func @transform_2(%arg0: i32) -> (i32, i32, i32) {
    %c0_i32 = arith.constant 0 : i32
    %c0_i32_0 = arith.constant 0 : i32
    %c0_i32_1 = arith.constant 0 : i32
    return %arg0, %c0_i32, %c0_i32_0 : i32, i32, i32
  }
}

</mosaic_0001>

<llo_original>
// kernel: residual_block_forward.1
$region0: #{residual_block_forward.1}
  #allocation0 [shape = 'u32[]', space=smem, size = 0x4, offset = 0x4, fixed_abs, tag = 'smem constant byte address 0x4 - core index']
  #allocation1 [shape = 'u32[144,128]{1,0:T(1,128)}', space=vmem, size = 0x12000, scoped, tag = 'internal scratch']
  #allocation2 [shape = 'f32[4,768]{1,0:T(4,128)}', space=vmem, size = 0x3000, scoped, tag = 'scratch operand']
  %s0 = inlined_call_operand.vmem [shape: f32[2,4,256], index: 0, kind: input, shape index: {}]
  %s1 = inlined_call_operand.vmem [shape: f32[275,4,512], index: 1, kind: input, shape index: {}]
  %s2 = inlined_call_operand.vmem [shape: f32[2,4,256], index: 2, kind: output, shape index: {}]
  %s3 = sld [smem:[#allocation0]]
  $region41: #{residual_block_forward.1} parent=0
    _
  %s5 = ssub.s32 1, %s3
  %s6 = scalar_select 0, %s5, %s3
  loop: start=0, step=1, limit=4
  $region2: #{residual_block_forward.1} parent=0 // loop_pre_header
    _
  $region3: #{residual_block_forward.1} parent=0 // loop_header
    %s8 = sphi 0, %s12
    %p9 = scmp.ge.s32.totalorder %s8, 4
    %s18 = sphi 0, %s20
    %s21 = sphi 0, %s18
    %s22 = sphi 0, %s21
    %s38 = sphi 0, %s22
    %s42 = sphi 0, %s42
    %s44 = sphi 0, %s42
    %s45 = sphi 0, %s44
    %s59 = sphi 0, %s45
    %s65 = sphi 0, %s67
    %s68 = sphi 0, %s65
    %s69 = sphi 0, %s68
    %s85 = sphi 0, %s69
  $region4: #{residual_block_forward.1} parent=0 // loop_header_branch
    %11 = sbr.rel (%p9) target = $region8
  $region5: #{residual_block_forward.1} parent=0 // loop_body
    %s13 = ssub.s32 %s8, 1
    %s14 = ssub.s32 %s8, 2
    %s15 = sadd.s32 %s8, 1
    %s16 = ssub.s32 %s8, %s15
    %p17 = scmp.eq.s32.totalorder %s16, 0
    %s19 = sadd.s32 %s18, 1
    %s20 = scalar_select %p17, %s18, %s19
    %p23 = pneg %p17
    %p24 = scmp.eq.s32.totalorder %s8, 1
    %p25 = por %p23, %p24
    %p26 = scmp.ne.s32.totalorder %s18, %s21
    %p27 = scmp.eq.s32.totalorder %s8, 0
    %p28 = por %p26, %p27
    %p29 = scmp.ne.s32.totalorder %s18, %s21
    %p30 = scmp.eq.s32.totalorder %s13, 1
    %p31 = por %p29, %p30
    %p32 = scmp.ne.s32.totalorder %s21, %s22
    %p33 = scmp.eq.s32.totalorder %s13, 0
    %p34 = por %p32, %p33
    %p35 = scmp.ne.s32.totalorder %s21, %s22
    %p36 = scmp.eq.s32.totalorder %s14, 1
    %p37 = por %p35, %p36
    %p39 = scmp.ne.s32.totalorder %s22, %s38
    %p40 = scmp.eq.s32.totalorder %s14, 0
    %p41 = por %p39, %p40
    %s43 = sadd.s32 %s42, 1
    %p46 = scmp.eq.s32.totalorder %s8, 1
    %p47 = scmp.ne.s32.totalorder %s42, %s44
    %p48 = scmp.eq.s32.totalorder %s8, 0
    %p49 = por %p47, %p48
    %p50 = scmp.ne.s32.totalorder %s42, %s44
    %p51 = scmp.eq.s32.totalorder %s13, 1
    %p52 = por %p50, %p51
    %p53 = scmp.ne.s32.totalorder %s44, %s45
    %p54 = scmp.eq.s32.totalorder %s13, 0
    %p55 = por %p53, %p54
    %p56 = scmp.ne.s32.totalorder %s44, %s45
    %p57 = scmp.eq.s32.totalorder %s14, 1
    %p58 = por %p56, %p57
    %p60 = scmp.ne.s32.totalorder %s45, %s59
    %p61 = scmp.eq.s32.totalorder %s14, 0
    %p62 = por %p60, %p61
    %s63 = ssub.s32 %s8, %s15
    %p64 = scmp.eq.s32.totalorder %s63, 0
    %s66 = sadd.s32 %s65, 1
    %s67 = scalar_select %p64, %s65, %s66
    %p70 = pneg %p64
    %p71 = scmp.eq.s32.totalorder %s8, 1
    %p72 = por %p70, %p71
    %p73 = scmp.ne.s32.totalorder %s65, %s68
    %p74 = scmp.eq.s32.totalorder %s8, 0
    %p75 = por %p73, %p74
    %p76 = scmp.ne.s32.totalorder %s65, %s68
    %p77 = scmp.eq.s32.totalorder %s13, 1
    %p78 = por %p76, %p77
    %p79 = scmp.ne.s32.totalorder %s68, %s69
    %p80 = scmp.eq.s32.totalorder %s13, 0
    %p81 = por %p79, %p80
    %p82 = scmp.ne.s32.totalorder %s68, %s69
    %p83 = scmp.eq.s32.totalorder %s14, 1
    %p84 = por %p82, %p83
    %p86 = scmp.ne.s32.totalorder %s69, %s85
    %p87 = scmp.eq.s32.totalorder %s14, 0
    %p88 = por %p86, %p87
    %p89 = scmp.le.s32.totalorder 1, %s8
    %p90 = scmp.lt.s32.totalorder %s8, 3
    %p91 = pnand %p89, %p90
    %p92 = pneg %p91
    // Predicated region
    $region9: #{residual_block_forward.1} parent=5 // pred_check
      _
    $region10: #{residual_block_forward.1} parent=5 // pred_check_branch
      %94 = sbr.rel (%p91) target = $region12
    $region11: #{residual_block_forward.1} parent=5 // pred_region
      %s95 = ssub.s32 %s8, 1
      // Predicated region
      $region13: #{residual_block_forward.1} parent=11 // pred_check
        %p96 = pneg %p55
      $region14: #{residual_block_forward.1} parent=11 // pred_check_branch
        %98 = sbr.rel (%p96) target = $region16
      $region15: #{residual_block_forward.1} parent=11 // pred_region
        _
      $region16: #{residual_block_forward.1} parent=11 // pred_fallthru
        _
    $region12: #{residual_block_forward.1} parent=5 // pred_fallthru
      _
    %p99 = scmp.lt.s32.totalorder %s8, 2
    // Predicated region
    $region17: #{residual_block_forward.1} parent=5 // pred_check
      %p100 = pneg %p99
    $region18: #{residual_block_forward.1} parent=5 // pred_check_branch
      %102 = sbr.rel (%p100) target = $region20
    $region19: #{residual_block_forward.1} parent=5 // pred_region
      // Predicated region
      $region21: #{residual_block_forward.1} parent=19 // pred_check
        %p103 = pneg %p28
      $region22: #{residual_block_forward.1} parent=19 // pred_check_branch
        %105 = sbr.rel (%p103) target = $region24
      $region23: #{residual_block_forward.1} parent=19 // pred_region
        %p106 = scmp.lt.s32.totalorder %s8, 1
        %s107 = scalar_select %p106, %s8, 1
        %s108 = smul.addr %s107, 2
        %s109 = smul.addr %s108, 4
        %s110 = scalar_lea.vmem %s0, %s109
      $region24: #{residual_block_forward.1} parent=19 // pred_fallthru
        _
    $region20: #{residual_block_forward.1} parent=5 // pred_fallthru
      _
    %p111 = scmp.le.s32.totalorder 1, %s8
    %p112 = scmp.lt.s32.totalorder %s8, 3
    %p113 = pnand %p111, %p112
    %p114 = pneg %p113
    // Predicated region
    $region25: #{residual_block_forward.1} parent=5 // pred_check
      _
    $region26: #{residual_block_forward.1} parent=5 // pred_check_branch
      %116 = sbr.rel (%p113) target = $region28
    $region27: #{residual_block_forward.1} parent=5 // pred_region
      %s117 = ssub.s32 %s8, 1
      %p118 = scmp.lt.s32.totalorder %s13, 1
      %s119 = scalar_select %p118, %s13, 1
      %s120 = smul.addr %s119, 2
      %s121 = smul.addr %s120, 4
      %s122 = scalar_lea.vmem %s0, %s121
      %p123 = pneg %p34
      %p124 = pneg %p31
      %p125 = pneg %p55
      %p126 = pneg %p52
      %p127 = pneg %p81
      %p128 = pneg %p78
      %p129 = scmp.lt.s32.totalorder %s13, 1
      %s130 = scalar_select %p129, %s13, 1
      %s131 = smul.addr %s130, 2
      %s132 = smul.addr %s131, 4
      %s133 = scalar_lea.vmem %s2, %s132
      %p134 = scmp.lt.s32.totalorder %s13, 1
      %s135 = scalar_select %p134, %s13, 1
      %s136 = smul.addr %s135, 2
      %s137 = smul.addr %s136, 4
      %s138 = scalar_lea.vmem %s0, %s137
      %p139 = scmp.lt.s32.totalorder %s13, 1
      %s140 = scalar_select %p139, %s13, 1
      %s141 = smul.addr %s140, 2
      %s142 = smul.addr %s141, 4
      %s143 = scalar_lea.vmem %s2, %s142
      %v144 = vld [vmem:[%s138] sm:$0xff]
      %s145 = scalar_lea.vmem %s1, 4352
      %v146 = vld [vmem:[%s145] sm:$0xff]
      %v147 = vld [vmem:[%s145 + $0x8] sm:$0xff]
      %s148 = scalar_lea.vmem %s1, 4368
      %v149 = vld [vmem:[%s148] sm:$0xff]
      %v150 = vld [vmem:[%s148 + $0x8] sm:$0xff]
      %s151 = scalar_lea.vmem %s1, 4384
      %v152 = vld [vmem:[%s151] sm:$0xff]
      %v153 = vld [vmem:[%s151 + $0x8] sm:$0xff]
      %154 = vst [vmem:[#allocation2] sm:$0xff] 0.0
      %155 = vst [vmem:[#allocation2 + $0x8] sm:$0xff] 0.0
      %156 = vst [vmem:[#allocation2 + $0x10] sm:$0xff] 0.0
      %158 = vrot.lane.b32.xlu0 %v144, 42
      %v159 = vpop.permute.xlu0 %158
      %vm161 = vcmask 470352
      %162 = vst.msk [vmem:[#allocation2 + $0x4] sm:$0xf] %vm161, %v159
      %163 = vrot.lane.b32.xlu0 %v144, 46
      %v164 = vpop.permute.xlu0 %163
      %vm166 = vcmask 634352
      %167 = vst.msk [vmem:[#allocation2 + $0x4] sm:$0xf] %vm166, %v164
      %168 = vrot.lane.b32.xlu0 %v144, 50
      %v169 = vpop.permute.xlu0 %168
      %vm171 = vcmask 798352
      %172 = vst.msk [vmem:[#allocation2 + $0x4] sm:$0xf] %vm171, %v169
      %173 = vrot.lane.b32.xlu0 %v144, 54
      %v174 = vpop.permute.xlu0 %173
      %vm176 = vcmask 962352
      %177 = vst.msk [vmem:[#allocation2 + $0x4] sm:$0xf] %vm176, %v174
      %178 = vrot.lane.b32.xlu0 %v144, 58
      %v179 = vpop.permute.xlu0 %178
      %v180 = vrot.slane %v179, 4
      %vm181 = vcmask 474112
      %v182 = vsel %vm181, %v180, %v179
      %vm184 = vcmask 1044432
      %vm185 = vcmask 80900
      %vm186 = vmor %vm185, %vm184
      %187 = vst.msk [vmem:[#allocation2 + $0x4] sm:$0xff] %vm186, %v182
      %188 = vrot.lane.b32.xlu0 %v144, 62
      %v189 = vpop.permute.xlu0 %188
      %vm191 = vcmask 240752
      %192 = vst.msk [vmem:[#allocation2 + $0x8] sm:$0xf] %vm191, %v189
      %193 = vrot.lane.b32.xlu0 %v144, 66
      %v194 = vpop.permute.xlu0 %193
      %vm196 = vcmask 404752
      %197 = vst.msk [vmem:[#allocation2 + $0x8] sm:$0xf] %vm196, %v194
      %198 = vrot.lane.b32.xlu0 %v144, 70
      %v199 = vpop.permute.xlu0 %198
      %vm201 = vcmask 568752
      %202 = vst.msk [vmem:[#allocation2 + $0x8] sm:$0xf] %vm201, %v199
      %203 = vrot.lane.b32.xlu0 %v144, 74
      %v204 = vpop.permute.xlu0 %203
      %v205 = vrot.slane %v204, 4
      %vm206 = vcmask 605184
      %v207 = vsel %vm206, %v204, %v205
      %vm209 = vcmask 732752
      %210 = vst.msk [vmem:[#allocation2 + $0x8] sm:$0xf] %vm209, %v207
      %211 = vrot.lane.b32.xlu0 %v144, 78
      %v212 = vpop.permute.xlu0 %211
      %v213 = vrot.slane %v212, 4
      %vm214 = vcmask 637952
      %v215 = vsel %vm214, %v212, %v213
      %vm217 = vcmask 896752
      %218 = vst.msk [vmem:[#allocation2 + $0x8] sm:$0xf] %vm217, %v215
      %219 = vrot.lane.b32.xlu0 %v144, 82
      %v220 = vpop.permute.xlu0 %219
      %v221 = vrot.slane %v220, 4
      %vm222 = vcmask 670720
      %v223 = vsel %vm222, %v220, %v221
      %vm225 = vcmask 1044368
      %vm226 = vcmask 15364
      %vm227 = vmor %vm226, %vm225
      %228 = vst.msk [vmem:[#allocation2 + $0x8] sm:$0xff] %vm227, %v223
      %229 = vrot.lane.b32.xlu0 %v144, 86
      %v230 = vpop.permute.xlu0 %229
      %v231 = vrot.slane %v230, 4
      %vm233 = vcmask 175152
      %234 = vst.msk [vmem:[#allocation2 + $0xc] sm:$0xf] %vm233, %v231
      %235 = vrot.lane.b32.xlu0 %v144, 90
      %v236 = vpop.permute.xlu0 %235
      %v237 = vrot.slane %v236, 4
      %vm239 = vcmask 339152
      %240 = vst.msk [vmem:[#allocation2 + $0xc] sm:$0xf] %vm239, %v237
      %241 = vrot.lane.b32.xlu0 %v144, 94
      %v242 = vpop.permute.xlu0 %241
      %v243 = vrot.slane %v242, 4
      %vm245 = vcmask 503152
      %246 = vst.msk [vmem:[#allocation2 + $0xc] sm:$0xf] %vm245, %v243
      %247 = vrot.lane.b32.xlu0 %v144, 98
      %v248 = vpop.permute.xlu0 %247
      %v249 = vrot.slane %v248, 4
      %vm251 = vcmask 667152
      %252 = vst.msk [vmem:[#allocation2 + $0xc] sm:$0xf] %vm251, %v249
      %253 = vrot.lane.b32.xlu0 %v144, 102
      %v254 = vpop.permute.xlu0 %253
      %v255 = vrot.slane %v254, 4
      %vm257 = vcmask 831152
      %258 = vst.msk [vmem:[#allocation2 + $0xc] sm:$0xf] %vm257, %v255
      %v259 = vld [vmem:[#allocation2] sm:$0xff]
      %v260 = vld [vmem:[#allocation2 + $0x8] sm:$0xff]
      %v261 = vld [vmem:[#allocation2 + $0x10] sm:$0xff]
      %v262 = vld [vmem:[%s1] sm:$0xff]
      %v263 = vld [vmem:[%s1 + $0x8] sm:$0xff]
      %267 = vrot.lane.b32.xlu0 %v259, 42
      %v268 = vpop.permute.xlu0 %267
      %269 = vrot.lane.b32.xlu0 %v260, 42
      %v270 = vpop.permute.xlu0 %269
      %271 = vrot.lane.b32.xlu0 %v261, 42
      %v272 = vpop.permute.xlu0 %271
      %v273 = vrot.slane %v268, 4
      %v274 = vrot.slane %v270, 4
      %v275 = vrot.slane %v272, 4
      %vm276 = vcmask 1043456
      %v277 = vsel %vm276, %v273, %v274
      %vm278 = vcmask 343040
      %v279 = vsel %vm278, %v268, %v277
      %v280 = vsel %vm276, %v274, %v275
      %v281 = vsel %vm278, %v270, %v280
      %v284 = vmul.f32 %v262, %v279
      %v285 = vmul.f32 %v263, %v281
      %v286 = vadd.f32 %v284, 0.0
      %v287 = vadd.f32 %v285, 0.0
      %s288 = scalar_lea.vmem %s1, 16
      %v289 = vld [vmem:[%s288] sm:$0xff]
      %v290 = vld [vmem:[%s288 + $0x8] sm:$0xff]
      %v291 = vmul.f32 %v289, %v279
      %v292 = vmul.f32 %v290, %v281
      %v293 = vadd.f32 %v291, 0.0
      %v294 = vadd.f32 %v292, 0.0
      %s295 = scalar_lea.vmem %s1, 32
      %v296 = vld [vmem:[%s295] sm:$0xff]
      %v297 = vld [vmem:[%s295 + $0x8] sm:$0xff]
      %v298 = vmul.f32 %v296, %v279
      %v299 = vmul.f32 %v297, %v281
      %v300 = vadd.f32 %v298, 0.0
      %v301 = vadd.f32 %v299, 0.0
      %s302 = scalar_lea.vmem %s1, 48
      %v303 = vld [vmem:[%s302] sm:$0xff]
      %v304 = vld [vmem:[%s302 + $0x8] sm:$0xff]
      %v305 = vmul.f32 %v303, %v279
      %v306 = vmul.f32 %v304, %v281
      %v307 = vadd.f32 %v305, 0.0
      %v308 = vadd.f32 %v306, 0.0
      %s309 = scalar_lea.vmem %s1, 64
      %v310 = vld [vmem:[%s309] sm:$0xff]
      %v311 = vld [vmem:[%s309 + $0x8] sm:$0xff]
      %312 = vrot.lane.b32.xlu0 %v259, 41
      %v313 = vpop.permute.xlu0 %312
      %314 = vrot.lane.b32.xlu0 %v260, 41
      %v315 = vpop.permute.xlu0 %314
      %316 = vrot.lane.b32.xlu0 %v261, 41
      %v317 = vpop.permute.xlu0 %316
      %v318 = vrot.slane %v313, 4
      %v319 = vrot.slane %v315, 4
      %v320 = vrot.slane %v317, 4
      %v321 = vsel %vm276, %v318, %v319
      %vm322 = vcmask 334848
      %v323 = vsel %vm322, %v313, %v321
      %v324 = vsel %vm276, %v319, %v320
      %v325 = vsel %vm322, %v315, %v324
      %v328 = vmul.f32 %v310, %v323
      %v329 = vmul.f32 %v311, %v325
      %v330 = vadd.f32 %v286, %v328
      %v331 = vadd.f32 %v287, %v329
      %s332 = scalar_lea.vmem %s1, 80
      %v333 = vld [vmem:[%s332] sm:$0xff]
      %v334 = vld [vmem:[%s332 + $0x8] sm:$0xff]
      %v335 = vmul.f32 %v333, %v323
      %v336 = vmul.f32 %v334, %v325
      %v337 = vadd.f32 %v293, %v335
      %v338 = vadd.f32 %v294, %v336
      %s339 = scalar_lea.vmem %s1, 96
      %v340 = vld [vmem:[%s339] sm:$0xff]
      %v341 = vld [vmem:[%s339 + $0x8] sm:$0xff]
      %v342 = vmul.f32 %v340, %v323
      %v343 = vmul.f32 %v341, %v325
      %v344 = vadd.f32 %v300, %v342
      %v345 = vadd.f32 %v301, %v343
      %s346 = scalar_lea.vmem %s1, 112
      %v347 = vld [vmem:[%s346] sm:$0xff]
      %v348 = vld [vmem:[%s346 + $0x8] sm:$0xff]
      %v349 = vmul.f32 %v347, %v323
      %v350 = vmul.f32 %v348, %v325
      %v351 = vadd.f32 %v307, %v349
      %v352 = vadd.f32 %v308, %v350
      %s353 = scalar_lea.vmem %s1, 128
      %v354 = vld [vmem:[%s353] sm:$0xff]
      %v355 = vld [vmem:[%s353 + $0x8] sm:$0xff]
      %356 = vrot.lane.b32.xlu0 %v259, 40
      %v357 = vpop.permute.xlu0 %356
      %358 = vrot.lane.b32.xlu0 %v260, 40
      %v359 = vpop.permute.xlu0 %358
      %360 = vrot.lane.b32.xlu0 %v261, 40
      %v361 = vpop.permute.xlu0 %360
      %v362 = vrot.slane %v357, 4
      %v363 = vrot.slane %v359, 4
      %v364 = vrot.slane %v361, 4
      %v365 = vsel %vm276, %v362, %v363
      %vm366 = vcmask 326656
      %v367 = vsel %vm366, %v357, %v365
      %v368 = vsel %vm276, %v363, %v364
      %v369 = vsel %vm366, %v359, %v368
      %v372 = vmul.f32 %v354, %v367
      %v373 = vmul.f32 %v355, %v369
      %v374 = vadd.f32 %v330, %v372
      %v375 = vadd.f32 %v331, %v373
      %s376 = scalar_lea.vmem %s1, 144
      %v377 = vld [vmem:[%s376] sm:$0xff]
      %v378 = vld [vmem:[%s376 + $0x8] sm:$0xff]
      %v379 = vmul.f32 %v377, %v367
      %v380 = vmul.f32 %v378, %v369
      %v381 = vadd.f32 %v337, %v379
      %v382 = vadd.f32 %v338, %v380
      %s383 = scalar_lea.vmem %s1, 160
      %v384 = vld [vmem:[%s383] sm:$0xff]
      %v385 = vld [vmem:[%s383 + $0x8] sm:$0xff]
      %v386 = vmul.f32 %v384, %v367
      %v387 = vmul.f32 %v385, %v369
      %v388 = vadd.f32 %v344, %v386
      %v389 = vadd.f32 %v345, %v387
      %s390 = scalar_lea.vmem %s1, 176
      %v391 = vld [vmem:[%s390] sm:$0xff]
      %v392 = vld [vmem:[%s390 + $0x8] sm:$0xff]
      %v393 = vmul.f32 %v391, %v367
      %v394 = vmul.f32 %v392, %v369
      %v395 = vadd.f32 %v351, %v393
      %v396 = vadd.f32 %v352, %v394
      %s397 = scalar_lea.vmem %s1, 192
      %v398 = vld [vmem:[%s397] sm:$0xff]
      %v399 = vld [vmem:[%s397 + $0x8] sm:$0xff]
      %400 = vrot.lane.b32.xlu0 %v259, 39
      %v401 = vpop.permute.xlu0 %400
      %402 = vrot.lane.b32.xlu0 %v260, 39
      %v403 = vpop.permute.xlu0 %402
      %404 = vrot.lane.b32.xlu0 %v261, 39
      %v405 = vpop.permute.xlu0 %404
      %v406 = vrot.slane %v401, 4
      %v407 = vrot.slane %v403, 4
      %v408 = vrot.slane %v405, 4
      %v409 = vsel %vm276, %v406, %v407
      %vm410 = vcmask 318464
      %v411 = vsel %vm410, %v401, %v409
      %v412 = vsel %vm276, %v407, %v408
      %v413 = vsel %vm410, %v403, %v412
      %v416 = vmul.f32 %v398, %v411
      %v417 = vmul.f32 %v399, %v413
      %v418 = vadd.f32 %v374, %v416
      %v419 = vadd.f32 %v375, %v417
      %s420 = scalar_lea.vmem %s1, 208
      %v421 = vld [vmem:[%s420] sm:$0xff]
      %v422 = vld [vmem:[%s420 + $0x8] sm:$0xff]
      %v423 = vmul.f32 %v421, %v411
      %v424 = vmul.f32 %v422, %v413
      %v425 = vadd.f32 %v381, %v423
      %v426 = vadd.f32 %v382, %v424
      %s427 = scalar_lea.vmem %s1, 224
      %v428 = vld [vmem:[%s427] sm:$0xff]
      %v429 = vld [vmem:[%s427 + $0x8] sm:$0xff]
      %v430 = vmul.f32 %v428, %v411
      %v431 = vmul.f32 %v429, %v413
      %v432 = vadd.f32 %v388, %v430
      %v433 = vadd.f32 %v389, %v431
      %s434 = scalar_lea.vmem %s1, 240
      %v435 = vld [vmem:[%s434] sm:$0xff]
      %v436 = vld [vmem:[%s434 + $0x8] sm:$0xff]
      %v437 = vmul.f32 %v435, %v411
      %v438 = vmul.f32 %v436, %v413
      %v439 = vadd.f32 %v395, %v437
      %v440 = vadd.f32 %v396, %v438
      %s441 = scalar_lea.vmem %s1, 256
      %v442 = vld [vmem:[%s441] sm:$0xff]
      %v443 = vld [vmem:[%s441 + $0x8] sm:$0xff]
      %444 = vrot.lane.b32.xlu0 %v259, 38
      %v445 = vpop.permute.xlu0 %444
      %446 = vrot.lane.b32.xlu0 %v260, 38
      %v447 = vpop.permute.xlu0 %446
      %448 = vrot.lane.b32.xlu0 %v261, 38
      %v449 = vpop.permute.xlu0 %448
      %v450 = vrot.slane %v445, 4
      %v451 = vrot.slane %v447, 4
      %v452 = vrot.slane %v449, 4
      %v453 = vsel %vm276, %v450, %v451
      %vm454 = vcmask 310272
      %v455 = vsel %vm454, %v445, %v453
      %v456 = vsel %vm276, %v451, %v452
      %v457 = vsel %vm454, %v447, %v456
      %v460 = vmul.f32 %v442, %v455
      %v461 = vmul.f32 %v443, %v457
      %v462 = vadd.f32 %v418, %v460
      %v463 = vadd.f32 %v419, %v461
      %s464 = scalar_lea.vmem %s1, 272
      %v465 = vld [vmem:[%s464] sm:$0xff]
      %v466 = vld [vmem:[%s464 + $0x8] sm:$0xff]
      %v467 = vmul.f32 %v465, %v455
      %v468 = vmul.f32 %v466, %v457
      %v469 = vadd.f32 %v425, %v467
      %v470 = vadd.f32 %v426, %v468
      %s471 = scalar_lea.vmem %s1, 288
      %v472 = vld [vmem:[%s471] sm:$0xff]
      %v473 = vld [vmem:[%s471 + $0x8] sm:$0xff]
      %v474 = vmul.f32 %v472, %v455
      %v475 = vmul.f32 %v473, %v457
      %v476 = vadd.f32 %v432, %v474
      %v477 = vadd.f32 %v433, %v475
      %s478 = scalar_lea.vmem %s1, 304
      %v479 = vld [vmem:[%s478] sm:$0xff]
      %v480 = vld [vmem:[%s478 + $0x8] sm:$0xff]
      %v481 = vmul.f32 %v479, %v455
      %v482 = vmul.f32 %v480, %v457
      %v483 = vadd.f32 %v439, %v481
      %v484 = vadd.f32 %v440, %v482
      %s485 = scalar_lea.vmem %s1, 320
      %v486 = vld [vmem:[%s485] sm:$0xff]
      %v487 = vld [vmem:[%s485 + $0x8] sm:$0xff]
      %488 = vrot.lane.b32.xlu0 %v259, 22
      %v489 = vpop.permute.xlu0 %488
      %490 = vrot.lane.b32.xlu0 %v260, 22
      %v491 = vpop.permute.xlu0 %490
      %492 = vrot.lane.b32.xlu0 %v261, 22
      %v493 = vpop.permute.xlu0 %492
      %v494 = vrot.slane %v489, 4
      %v495 = vrot.slane %v491, 4
      %v496 = vrot.slane %v493, 4
      %v497 = vsel %vm276, %v494, %v495
      %vm498 = vcmask 179200
      %v499 = vsel %vm498, %v489, %v497
      %v500 = vsel %vm276, %v495, %v496
      %v501 = vsel %vm498, %v491, %v500
      %v504 = vmul.f32 %v486, %v499
      %v505 = vmul.f32 %v487, %v501
      %v506 = vadd.f32 %v462, %v504
      %v507 = vadd.f32 %v463, %v505
      %s508 = scalar_lea.vmem %s1, 336
      %v509 = vld [vmem:[%s508] sm:$0xff]
      %v510 = vld [vmem:[%s508 + $0x8] sm:$0xff]
      %v511 = vmul.f32 %v509, %v499
      %v512 = vmul.f32 %v510, %v501
      %v513 = vadd.f32 %v469, %v511
      %v514 = vadd.f32 %v470, %v512
      %s515 = scalar_lea.vmem %s1, 352
      %v516 = vld [vmem:[%s515] sm:$0xff]
      %v517 = vld [vmem:[%s515 + $0x8] sm:$0xff]
      %v518 = vmul.f32 %v516, %v499
      %v519 = vmul.f32 %v517, %v501
      %v520 = vadd.f32 %v476, %v518
      %v521 = vadd.f32 %v477, %v519
      %s522 = scalar_lea.vmem %s1, 368
      %v523 = vld [vmem:[%s522] sm:$0xff]
      %v524 = vld [vmem:[%s522 + $0x8] sm:$0xff]
      %v525 = vmul.f32 %v523, %v499
      %v526 = vmul.f32 %v524, %v501
      %v527 = vadd.f32 %v483, %v525
      %v528 = vadd.f32 %v484, %v526
      %s529 = scalar_lea.vmem %s1, 384
      %v530 = vld [vmem:[%s529] sm:$0xff]
      %v531 = vld [vmem:[%s529 + $0x8] sm:$0xff]
      %532 = vrot.lane.b32.xlu0 %v259, 21
      %v533 = vpop.permute.xlu0 %532
      %534 = vrot.lane.b32.xlu0 %v260, 21
      %v535 = vpop.permute.xlu0 %534
      %536 = vrot.lane.b32.xlu0 %v261, 21
      %v537 = vpop.permute.xlu0 %536
      %v538 = vrot.slane %v533, 4
      %v539 = vrot.slane %v535, 4
      %v540 = vrot.slane %v537, 4
      %v541 = vsel %vm276, %v538, %v539
      %vm542 = vcmask 171008
      %v543 = vsel %vm542, %v533, %v541
      %v544 = vsel %vm276, %v539, %v540
      %v545 = vsel %vm542, %v535, %v544
      %v548 = vmul.f32 %v530, %v543
      %v549 = vmul.f32 %v531, %v545
      %v550 = vadd.f32 %v506, %v548
      %v551 = vadd.f32 %v507, %v549
      %s552 = scalar_lea.vmem %s1, 400
      %v553 = vld [vmem:[%s552] sm:$0xff]
      %v554 = vld [vmem:[%s552 + $0x8] sm:$0xff]
      %v555 = vmul.f32 %v553, %v543
      %v556 = vmul.f32 %v554, %v545
      %v557 = vadd.f32 %v513, %v555
      %v558 = vadd.f32 %v514, %v556
      %s559 = scalar_lea.vmem %s1, 416
      %v560 = vld [vmem:[%s559] sm:$0xff]
      %v561 = vld [vmem:[%s559 + $0x8] sm:$0xff]
      %v562 = vmul.f32 %v560, %v543
      %v563 = vmul.f32 %v561, %v545
      %v564 = vadd.f32 %v520, %v562
      %v565 = vadd.f32 %v521, %v563
      %s566 = scalar_lea.vmem %s1, 432
      %v567 = vld [vmem:[%s566] sm:$0xff]
      %v568 = vld [vmem:[%s566 + $0x8] sm:$0xff]
      %v569 = vmul.f32 %v567, %v543
      %v570 = vmul.f32 %v568, %v545
      %v571 = vadd.f32 %v527, %v569
      %v572 = vadd.f32 %v528, %v570
      %s573 = scalar_lea.vmem %s1, 448
      %v574 = vld [vmem:[%s573] sm:$0xff]
      %v575 = vld [vmem:[%s573 + $0x8] sm:$0xff]
      %576 = vrot.lane.b32.xlu0 %v259, 20
      %v577 = vpop.permute.xlu0 %576
      %578 = vrot.lane.b32.xlu0 %v260, 20
      %v579 = vpop.permute.xlu0 %578
      %580 = vrot.lane.b32.xlu0 %v261, 20
      %v581 = vpop.permute.xlu0 %580
      %v582 = vrot.slane %v577, 4
      %v583 = vrot.slane %v579, 4
      %v584 = vrot.slane %v581, 4
      %v585 = vsel %vm276, %v582, %v583
      %vm586 = vcmask 162816
      %v587 = vsel %vm586, %v577, %v585
      %v588 = vsel %vm276, %v583, %v584
      %v589 = vsel %vm586, %v579, %v588
      %v592 = vmul.f32 %v574, %v587
      %v593 = vmul.f32 %v575, %v589
      %v594 = vadd.f32 %v550, %v592
      %v595 = vadd.f32 %v551, %v593
      %s596 = scalar_lea.vmem %s1, 464
      %v597 = vld [vmem:[%s596] sm:$0xff]
      %v598 = vld [vmem:[%s596 + $0x8] sm:$0xff]
      %v599 = vmul.f32 %v597, %v587
      %v600 = vmul.f32 %v598, %v589
      %v601 = vadd.f32 %v557, %v599
      %v602 = vadd.f32 %v558, %v600
      %s603 = scalar_lea.vmem %s1, 480
      %v604 = vld [vmem:[%s603] sm:$0xff]
      %v605 = vld [vmem:[%s603 + $0x8] sm:$0xff]
      %v606 = vmul.f32 %v604, %v587
      %v607 = vmul.f32 %v605, %v589
      %v608 = vadd.f32 %v564, %v606
      %v609 = vadd.f32 %v565, %v607
      %s610 = scalar_lea.vmem %s1, 496
      %v611 = vld [vmem:[%s610] sm:$0xff]
      %v612 = vld [vmem:[%s610 + $0x8] sm:$0xff]
      %v613 = vmul.f32 %v611, %v587
      %v614 = vmul.f32 %v612, %v589
      %v615 = vadd.f32 %v571, %v613
      %v616 = vadd.f32 %v572, %v614
      %s617 = scalar_lea.vmem %s1, 512
      %v618 = vld [vmem:[%s617] sm:$0xff]
      %v619 = vld [vmem:[%s617 + $0x8] sm:$0xff]
      %620 = vrot.lane.b32.xlu0 %v259, 19
      %v621 = vpop.permute.xlu0 %620
      %622 = vrot.lane.b32.xlu0 %v260, 19
      %v623 = vpop.permute.xlu0 %622
      %624 = vrot.lane.b32.xlu0 %v261, 19
      %v625 = vpop.permute.xlu0 %624
      %v626 = vrot.slane %v621, 4
      %v627 = vrot.slane %v623, 4
      %v628 = vrot.slane %v625, 4
      %v629 = vsel %vm276, %v626, %v627
      %vm630 = vcmask 154624
      %v631 = vsel %vm630, %v621, %v629
      %v632 = vsel %vm276, %v627, %v628
      %v633 = vsel %vm630, %v623, %v632
      %v636 = vmul.f32 %v618, %v631
      %v637 = vmul.f32 %v619, %v633
      %v638 = vadd.f32 %v594, %v636
      %v639 = vadd.f32 %v595, %v637
      %s640 = scalar_lea.vmem %s1, 528
      %v641 = vld [vmem:[%s640] sm:$0xff]
      %v642 = vld [vmem:[%s640 + $0x8] sm:$0xff]
      %v643 = vmul.f32 %v641, %v631
      %v644 = vmul.f32 %v642, %v633
      %v645 = vadd.f32 %v601, %v643
      %v646 = vadd.f32 %v602, %v644
      %s647 = scalar_lea.vmem %s1, 544
      %v648 = vld [vmem:[%s647] sm:$0xff]
      %v649 = vld [vmem:[%s647 + $0x8] sm:$0xff]
      %v650 = vmul.f32 %v648, %v631
      %v651 = vmul.f32 %v649, %v633
      %v652 = vadd.f32 %v608, %v650
      %v653 = vadd.f32 %v609, %v651
      %s654 = scalar_lea.vmem %s1, 560
      %v655 = vld [vmem:[%s654] sm:$0xff]
      %v656 = vld [vmem:[%s654 + $0x8] sm:$0xff]
      %v657 = vmul.f32 %v655, %v631
      %v658 = vmul.f32 %v656, %v633
      %v659 = vadd.f32 %v615, %v657
      %v660 = vadd.f32 %v616, %v658
      %s661 = scalar_lea.vmem %s1, 576
      %v662 = vld [vmem:[%s661] sm:$0xff]
      %v663 = vld [vmem:[%s661 + $0x8] sm:$0xff]
      %664 = vrot.lane.b32.xlu0 %v259, 18
      %v665 = vpop.permute.xlu0 %664
      %666 = vrot.lane.b32.xlu0 %v260, 18
      %v667 = vpop.permute.xlu0 %666
      %668 = vrot.lane.b32.xlu0 %v261, 18
      %v669 = vpop.permute.xlu0 %668
      %v670 = vrot.slane %v665, 4
      %v671 = vrot.slane %v667, 4
      %v672 = vrot.slane %v669, 4
      %v673 = vsel %vm276, %v670, %v671
      %vm674 = vcmask 146432
      %v675 = vsel %vm674, %v665, %v673
      %v676 = vsel %vm276, %v671, %v672
      %v677 = vsel %vm674, %v667, %v676
      %v680 = vmul.f32 %v662, %v675
      %v681 = vmul.f32 %v663, %v677
      %v682 = vadd.f32 %v638, %v680
      %v683 = vadd.f32 %v639, %v681
      %s684 = scalar_lea.vmem %s1, 592
      %v685 = vld [vmem:[%s684] sm:$0xff]
      %v686 = vld [vmem:[%s684 + $0x8] sm:$0xff]
      %v687 = vmul.f32 %v685, %v675
      %v688 = vmul.f32 %v686, %v677
      %v689 = vadd.f32 %v645, %v687
      %v690 = vadd.f32 %v646, %v688
      %s691 = scalar_lea.vmem %s1, 608
      %v692 = vld [vmem:[%s691] sm:$0xff]
      %v693 = vld [vmem:[%s691 + $0x8] sm:$0xff]
      %v694 = vmul.f32 %v692, %v675
      %v695 = vmul.f32 %v693, %v677
      %v696 = vadd.f32 %v652, %v694
      %v697 = vadd.f32 %v653, %v695
      %s698 = scalar_lea.vmem %s1, 624
      %v699 = vld [vmem:[%s698] sm:$0xff]
      %v700 = vld [vmem:[%s698 + $0x8] sm:$0xff]
      %v701 = vmul.f32 %v699, %v675
      %v702 = vmul.f32 %v700, %v677
      %v703 = vadd.f32 %v659, %v701
      %v704 = vadd.f32 %v660, %v702
      %s705 = scalar_lea.vmem %s1, 640
      %v706 = vld [vmem:[%s705] sm:$0xff]
      %v707 = vld [vmem:[%s705 + $0x8] sm:$0xff]
      %708 = vrot.lane.b32.xlu0 %v259, 2
      %v709 = vpop.permute.xlu0 %708
      %710 = vrot.lane.b32.xlu0 %v260, 2
      %v711 = vpop.permute.xlu0 %710
      %712 = vrot.lane.b32.xlu0 %v261, 2
      %v713 = vpop.permute.xlu0 %712
      %v714 = vrot.slane %v709, 4
      %v715 = vrot.slane %v711, 4
      %v716 = vrot.slane %v713, 4
      %v717 = vsel %vm276, %v714, %v715
      %vm718 = vcmask 15360
      %v719 = vsel %vm718, %v709, %v717
      %v720 = vsel %vm276, %v715, %v716
      %v721 = vsel %vm718, %v711, %v720
      %v724 = vmul.f32 %v706, %v719
      %v725 = vmul.f32 %v707, %v721
      %v726 = vadd.f32 %v682, %v724
      %v727 = vadd.f32 %v683, %v725
      %s728 = scalar_lea.vmem %s1, 656
      %v729 = vld [vmem:[%s728] sm:$0xff]
      %v730 = vld [vmem:[%s728 + $0x8] sm:$0xff]
      %v731 = vmul.f32 %v729, %v719
      %v732 = vmul.f32 %v730, %v721
      %v733 = vadd.f32 %v689, %v731
      %v734 = vadd.f32 %v690, %v732
      %s735 = scalar_lea.vmem %s1, 672
      %v736 = vld [vmem:[%s735] sm:$0xff]
      %v737 = vld [vmem:[%s735 + $0x8] sm:$0xff]
      %v738 = vmul.f32 %v736, %v719
      %v739 = vmul.f32 %v737, %v721
      %v740 = vadd.f32 %v696, %v738
      %v741 = vadd.f32 %v697, %v739
      %s742 = scalar_lea.vmem %s1, 688
      %v743 = vld [vmem:[%s742] sm:$0xff]
      %v744 = vld [vmem:[%s742 + $0x8] sm:$0xff]
      %v745 = vmul.f32 %v743, %v719
      %v746 = vmul.f32 %v744, %v721
      %v747 = vadd.f32 %v703, %v745
      %v748 = vadd.f32 %v704, %v746
      %s749 = scalar_lea.vmem %s1, 704
      %v750 = vld [vmem:[%s749] sm:$0xff]
      %v751 = vld [vmem:[%s749 + $0x8] sm:$0xff]
      %752 = vrot.lane.b32.xlu0 %v259, 1
      %v753 = vpop.permute.xlu0 %752
      %754 = vrot.lane.b32.xlu0 %v260, 1
      %v755 = vpop.permute.xlu0 %754
      %756 = vrot.lane.b32.xlu0 %v261, 1
      %v757 = vpop.permute.xlu0 %756
      %v758 = vrot.slane %v753, 4
      %v759 = vrot.slane %v755, 4
      %v760 = vrot.slane %v757, 4
      %v761 = vsel %vm276, %v758, %v759
      %vm762 = vcmask 7168
      %v763 = vsel %vm762, %v753, %v761
      %v764 = vsel %vm276, %v759, %v760
      %v765 = vsel %vm762, %v755, %v764
      %v768 = vmul.f32 %v750, %v763
      %v769 = vmul.f32 %v751, %v765
      %v770 = vadd.f32 %v726, %v768
      %v771 = vadd.f32 %v727, %v769
      %s772 = scalar_lea.vmem %s1, 720
      %v773 = vld [vmem:[%s772] sm:$0xff]
      %v774 = vld [vmem:[%s772 + $0x8] sm:$0xff]
      %v775 = vmul.f32 %v773, %v763
      %v776 = vmul.f32 %v774, %v765
      %v777 = vadd.f32 %v733, %v775
      %v778 = vadd.f32 %v734, %v776
      %s779 = scalar_lea.vmem %s1, 736
      %v780 = vld [vmem:[%s779] sm:$0xff]
      %v781 = vld [vmem:[%s779 + $0x8] sm:$0xff]
      %v782 = vmul.f32 %v780, %v763
      %v783 = vmul.f32 %v781, %v765
      %v784 = vadd.f32 %v740, %v782
      %v785 = vadd.f32 %v741, %v783
      %s786 = scalar_lea.vmem %s1, 752
      %v787 = vld [vmem:[%s786] sm:$0xff]
      %v788 = vld [vmem:[%s786 + $0x8] sm:$0xff]
      %v789 = vmul.f32 %v787, %v763
      %v790 = vmul.f32 %v788, %v765
      %v791 = vadd.f32 %v747, %v789
      %v792 = vadd.f32 %v748, %v790
      %s793 = scalar_lea.vmem %s1, 768
      %v794 = vld [vmem:[%s793] sm:$0xff]
      %v795 = vld [vmem:[%s793 + $0x8] sm:$0xff]
      %v796 = vrot.slane %v259, 4
      %v797 = vrot.slane %v260, 4
      %v798 = vrot.slane %v261, 4
      %v799 = vsel %vm276, %v796, %v797
      %v800 = vsel %vm276, %v797, %v798
      %v803 = vmul.f32 %v794, %v799
      %v804 = vmul.f32 %v795, %v800
      %v805 = vadd.f32 %v770, %v803
      %v806 = vadd.f32 %v771, %v804
      %s807 = scalar_lea.vmem %s1, 784
      %v808 = vld [vmem:[%s807] sm:$0xff]
      %v809 = vld [vmem:[%s807 + $0x8] sm:$0xff]
      %v810 = vmul.f32 %v808, %v799
      %v811 = vmul.f32 %v809, %v800
      %v812 = vadd.f32 %v777, %v810
      %v813 = vadd.f32 %v778, %v811
      %s814 = scalar_lea.vmem %s1, 800
      %v815 = vld [vmem:[%s814] sm:$0xff]
      %v816 = vld [vmem:[%s814 + $0x8] sm:$0xff]
      %v817 = vmul.f32 %v815, %v799
      %v818 = vmul.f32 %v816, %v800
      %v819 = vadd.f32 %v784, %v817
      %v820 = vadd.f32 %v785, %v818
      %s821 = scalar_lea.vmem %s1, 816
      %v822 = vld [vmem:[%s821] sm:$0xff]
      %v823 = vld [vmem:[%s821 + $0x8] sm:$0xff]
      %v824 = vmul.f32 %v822, %v799
      %v825 = vmul.f32 %v823, %v800
      %v826 = vadd.f32 %v791, %v824
      %v827 = vadd.f32 %v792, %v825
      %s828 = scalar_lea.vmem %s1, 832
      %v829 = vld [vmem:[%s828] sm:$0xff]
      %v830 = vld [vmem:[%s828 + $0x8] sm:$0xff]
      %831 = vrot.lane.b32.xlu0 %v259, 127
      %v832 = vpop.permute.xlu0 %831
      %833 = vrot.lane.b32.xlu0 %v260, 127
      %v834 = vpop.permute.xlu0 %833
      %835 = vrot.lane.b32.xlu0 %v261, 127
      %v836 = vpop.permute.xlu0 %835
      %v837 = vrot.slane %v832, 4
      %v838 = vrot.slane %v834, 4
      %v839 = vrot.slane %v836, 4
      %v840 = vsel %vm276, %v837, %v838
      %vm841 = vcmask 1039360
      %v842 = vsel %vm841, %v840, %v834
      %v843 = vsel %vm276, %v838, %v839
      %v844 = vsel %vm841, %v843, %v836
      %v847 = vmul.f32 %v829, %v842
      %v848 = vmul.f32 %v830, %v844
      %v849 = vadd.f32 %v805, %v847
      %v850 = vadd.f32 %v806, %v848
      %s851 = scalar_lea.vmem %s1, 848
      %v852 = vld [vmem:[%s851] sm:$0xff]
      %v853 = vld [vmem:[%s851 + $0x8] sm:$0xff]
      %v854 = vmul.f32 %v852, %v842
      %v855 = vmul.f32 %v853, %v844
      %v856 = vadd.f32 %v812, %v854
      %v857 = vadd.f32 %v813, %v855
      %s858 = scalar_lea.vmem %s1, 864
      %v859 = vld [vmem:[%s858] sm:$0xff]
      %v860 = vld [vmem:[%s858 + $0x8] sm:$0xff]
      %v861 = vmul.f32 %v859, %v842
      %v862 = vmul.f32 %v860, %v844
      %v863 = vadd.f32 %v819, %v861
      %v864 = vadd.f32 %v820, %v862
      %s865 = scalar_lea.vmem %s1, 880
      %v866 = vld [vmem:[%s865] sm:$0xff]
      %v867 = vld [vmem:[%s865 + $0x8] sm:$0xff]
      %v868 = vmul.f32 %v866, %v842
      %v869 = vmul.f32 %v867, %v844
      %v870 = vadd.f32 %v826, %v868
      %v871 = vadd.f32 %v827, %v869
      %s872 = scalar_lea.vmem %s1, 896
      %v873 = vld [vmem:[%s872] sm:$0xff]
      %v874 = vld [vmem:[%s872 + $0x8] sm:$0xff]
      %875 = vrot.lane.b32.xlu0 %v259, 126
      %v876 = vpop.permute.xlu0 %875
      %877 = vrot.lane.b32.xlu0 %v260, 126
      %v878 = vpop.permute.xlu0 %877
      %879 = vrot.lane.b32.xlu0 %v261, 126
      %v880 = vpop.permute.xlu0 %879
      %v881 = vrot.slane %v876, 4
      %v882 = vrot.slane %v878, 4
      %v883 = vrot.slane %v880, 4
      %v884 = vsel %vm276, %v881, %v882
      %vm885 = vcmask 1031168
      %v886 = vsel %vm885, %v884, %v878
      %v887 = vsel %vm276, %v882, %v883
      %v888 = vsel %vm885, %v887, %v880
      %v891 = vmul.f32 %v873, %v886
      %v892 = vmul.f32 %v874, %v888
      %v893 = vadd.f32 %v849, %v891
      %v894 = vadd.f32 %v850, %v892
      %s895 = scalar_lea.vmem %s1, 912
      %v896 = vld [vmem:[%s895] sm:$0xff]
      %v897 = vld [vmem:[%s895 + $0x8] sm:$0xff]
      %v898 = vmul.f32 %v896, %v886
      %v899 = vmul.f32 %v897, %v888
      %v900 = vadd.f32 %v856, %v898
      %v901 = vadd.f32 %v857, %v899
      %s902 = scalar_lea.vmem %s1, 928
      %v903 = vld [vmem:[%s902] sm:$0xff]
      %v904 = vld [vmem:[%s902 + $0x8] sm:$0xff]
      %v905 = vmul.f32 %v903, %v886
      %v906 = vmul.f32 %v904, %v888
      %v907 = vadd.f32 %v863, %v905
      %v908 = vadd.f32 %v864, %v906
      %s909 = scalar_lea.vmem %s1, 944
      %v910 = vld [vmem:[%s909] sm:$0xff]
      %v911 = vld [vmem:[%s909 + $0x8] sm:$0xff]
      %v912 = vmul.f32 %v910, %v886
      %v913 = vmul.f32 %v911, %v888
      %v914 = vadd.f32 %v870, %v912
      %v915 = vadd.f32 %v871, %v913
      %s916 = scalar_lea.vmem %s1, 960
      %v917 = vld [vmem:[%s916] sm:$0xff]
      %v918 = vld [vmem:[%s916 + $0x8] sm:$0xff]
      %919 = vrot.lane.b32.xlu0 %v259, 110
      %v920 = vpop.permute.xlu0 %919
      %921 = vrot.lane.b32.xlu0 %v260, 110
      %v922 = vpop.permute.xlu0 %921
      %923 = vrot.lane.b32.xlu0 %v261, 110
      %v924 = vpop.permute.xlu0 %923
      %v925 = vrot.slane %v920, 4
      %v926 = vrot.slane %v922, 4
      %v927 = vrot.slane %v924, 4
      %v928 = vsel %vm276, %v925, %v926
      %vm929 = vcmask 900096
      %v930 = vsel %vm929, %v928, %v922
      %v931 = vsel %vm276, %v926, %v927
      %v932 = vsel %vm929, %v931, %v924
      %v935 = vmul.f32 %v917, %v930
      %v936 = vmul.f32 %v918, %v932
      %v937 = vadd.f32 %v893, %v935
      %v938 = vadd.f32 %v894, %v936
      %s939 = scalar_lea.vmem %s1, 976
      %v940 = vld [vmem:[%s939] sm:$0xff]
      %v941 = vld [vmem:[%s939 + $0x8] sm:$0xff]
      %v942 = vmul.f32 %v940, %v930
      %v943 = vmul.f32 %v941, %v932
      %v944 = vadd.f32 %v900, %v942
      %v945 = vadd.f32 %v901, %v943
      %s946 = scalar_lea.vmem %s1, 992
      %v947 = vld [vmem:[%s946] sm:$0xff]
      %v948 = vld [vmem:[%s946 + $0x8] sm:$0xff]
      %v949 = vmul.f32 %v947, %v930
      %v950 = vmul.f32 %v948, %v932
      %v951 = vadd.f32 %v907, %v949
      %v952 = vadd.f32 %v908, %v950
      %s953 = scalar_lea.vmem %s1, 1008
      %v954 = vld [vmem:[%s953] sm:$0xff]
      %v955 = vld [vmem:[%s953 + $0x8] sm:$0xff]
      %v956 = vmul.f32 %v954, %v930
      %v957 = vmul.f32 %v955, %v932
      %v958 = vadd.f32 %v914, %v956
      %v959 = vadd.f32 %v915, %v957
      %s960 = scalar_lea.vmem %s1, 1024
      %v961 = vld [vmem:[%s960] sm:$0xff]
      %v962 = vld [vmem:[%s960 + $0x8] sm:$0xff]
      %963 = vrot.lane.b32.xlu0 %v259, 109
      %v964 = vpop.permute.xlu0 %963
      %965 = vrot.lane.b32.xlu0 %v260, 109
      %v966 = vpop.permute.xlu0 %965
      %967 = vrot.lane.b32.xlu0 %v261, 109
      %v968 = vpop.permute.xlu0 %967
      %v969 = vrot.slane %v964, 4
      %v970 = vrot.slane %v966, 4
      %v971 = vrot.slane %v968, 4
      %v972 = vsel %vm276, %v969, %v970
      %vm973 = vcmask 891904
      %v974 = vsel %vm973, %v972, %v966
      %v975 = vsel %vm276, %v970, %v971
      %v976 = vsel %vm973, %v975, %v968
      %v979 = vmul.f32 %v961, %v974
      %v980 = vmul.f32 %v962, %v976
      %v981 = vadd.f32 %v937, %v979
      %v982 = vadd.f32 %v938, %v980
      %s983 = scalar_lea.vmem %s1, 1040
      %v984 = vld [vmem:[%s983] sm:$0xff]
      %v985 = vld [vmem:[%s983 + $0x8] sm:$0xff]
      %v986 = vmul.f32 %v984, %v974
      %v987 = vmul.f32 %v985, %v976
      %v988 = vadd.f32 %v944, %v986
      %v989 = vadd.f32 %v945, %v987
      %s990 = scalar_lea.vmem %s1, 1056
      %v991 = vld [vmem:[%s990] sm:$0xff]
      %v992 = vld [vmem:[%s990 + $0x8] sm:$0xff]
      %v993 = vmul.f32 %v991, %v974
      %v994 = vmul.f32 %v992, %v976
      %v995 = vadd.f32 %v951, %v993
      %v996 = vadd.f32 %v952, %v994
      %s997 = scalar_lea.vmem %s1, 1072
      %v998 = vld [vmem:[%s997] sm:$0xff]
      %v999 = vld [vmem:[%s997 + $0x8] sm:$0xff]
      %v1000 = vmul.f32 %v998, %v974
      %v1001 = vmul.f32 %v999, %v976
      %v1002 = vadd.f32 %v958, %v1000
      %v1003 = vadd.f32 %v959, %v1001
      %s1004 = scalar_lea.vmem %s1, 1088
      %v1005 = vld [vmem:[%s1004] sm:$0xff]
      %v1006 = vld [vmem:[%s1004 + $0x8] sm:$0xff]
      %1007 = vrot.lane.b32.xlu0 %v259, 108
      %v1008 = vpop.permute.xlu0 %1007
      %1009 = vrot.lane.b32.xlu0 %v260, 108
      %v1010 = vpop.permute.xlu0 %1009
      %1011 = vrot.lane.b32.xlu0 %v261, 108
      %v1012 = vpop.permute.xlu0 %1011
      %v1013 = vrot.slane %v1008, 4
      %v1014 = vrot.slane %v1010, 4
      %v1015 = vrot.slane %v1012, 4
      %v1016 = vsel %vm276, %v1013, %v1014
      %vm1017 = vcmask 883712
      %v1018 = vsel %vm1017, %v1016, %v1010
      %v1019 = vsel %vm276, %v1014, %v1015
      %v1020 = vsel %vm1017, %v1019, %v1012
      %v1023 = vmul.f32 %v1005, %v1018
      %v1024 = vmul.f32 %v1006, %v1020
      %v1025 = vadd.f32 %v981, %v1023
      %v1026 = vadd.f32 %v982, %v1024
      %s1027 = scalar_lea.vmem %s1, 1104
      %v1028 = vld [vmem:[%s1027] sm:$0xff]
      %v1029 = vld [vmem:[%s1027 + $0x8] sm:$0xff]
      %v1030 = vmul.f32 %v1028, %v1018
      %v1031 = vmul.f32 %v1029, %v1020
      %v1032 = vadd.f32 %v988, %v1030
      %v1033 = vadd.f32 %v989, %v1031
      %s1034 = scalar_lea.vmem %s1, 1120
      %v1035 = vld [vmem:[%s1034] sm:$0xff]
      %v1036 = vld [vmem:[%s1034 + $0x8] sm:$0xff]
      %v1037 = vmul.f32 %v1035, %v1018
      %v1038 = vmul.f32 %v1036, %v1020
      %v1039 = vadd.f32 %v995, %v1037
      %v1040 = vadd.f32 %v996, %v1038
      %s1041 = scalar_lea.vmem %s1, 1136
      %v1042 = vld [vmem:[%s1041] sm:$0xff]
      %v1043 = vld [vmem:[%s1041 + $0x8] sm:$0xff]
      %v1044 = vmul.f32 %v1042, %v1018
      %v1045 = vmul.f32 %v1043, %v1020
      %v1046 = vadd.f32 %v1002, %v1044
      %v1047 = vadd.f32 %v1003, %v1045
      %s1048 = scalar_lea.vmem %s1, 1152
      %v1049 = vld [vmem:[%s1048] sm:$0xff]
      %v1050 = vld [vmem:[%s1048 + $0x8] sm:$0xff]
      %1051 = vrot.lane.b32.xlu0 %v259, 107
      %v1052 = vpop.permute.xlu0 %1051
      %1053 = vrot.lane.b32.xlu0 %v260, 107
      %v1054 = vpop.permute.xlu0 %1053
      %1055 = vrot.lane.b32.xlu0 %v261, 107
      %v1056 = vpop.permute.xlu0 %1055
      %v1057 = vrot.slane %v1052, 4
      %v1058 = vrot.slane %v1054, 4
      %v1059 = vrot.slane %v1056, 4
      %v1060 = vsel %vm276, %v1057, %v1058
      %vm1061 = vcmask 875520
      %v1062 = vsel %vm1061, %v1060, %v1054
      %v1063 = vsel %vm276, %v1058, %v1059
      %v1064 = vsel %vm1061, %v1063, %v1056
      %v1067 = vmul.f32 %v1049, %v1062
      %v1068 = vmul.f32 %v1050, %v1064
      %v1069 = vadd.f32 %v1025, %v1067
      %v1070 = vadd.f32 %v1026, %v1068
      %s1071 = scalar_lea.vmem %s1, 1168
      %v1072 = vld [vmem:[%s1071] sm:$0xff]
      %v1073 = vld [vmem:[%s1071 + $0x8] sm:$0xff]
      %v1074 = vmul.f32 %v1072, %v1062
      %v1075 = vmul.f32 %v1073, %v1064
      %v1076 = vadd.f32 %v1032, %v1074
      %v1077 = vadd.f32 %v1033, %v1075
      %s1078 = scalar_lea.vmem %s1, 1184
      %v1079 = vld [vmem:[%s1078] sm:$0xff]
      %v1080 = vld [vmem:[%s1078 + $0x8] sm:$0xff]
      %v1081 = vmul.f32 %v1079, %v1062
      %v1082 = vmul.f32 %v1080, %v1064
      %v1083 = vadd.f32 %v1039, %v1081
      %v1084 = vadd.f32 %v1040, %v1082
      %s1085 = scalar_lea.vmem %s1, 1200
      %v1086 = vld [vmem:[%s1085] sm:$0xff]
      %v1087 = vld [vmem:[%s1085 + $0x8] sm:$0xff]
      %v1088 = vmul.f32 %v1086, %v1062
      %v1089 = vmul.f32 %v1087, %v1064
      %v1090 = vadd.f32 %v1046, %v1088
      %v1091 = vadd.f32 %v1047, %v1089
      %s1092 = scalar_lea.vmem %s1, 1216
      %v1093 = vld [vmem:[%s1092] sm:$0xff]
      %v1094 = vld [vmem:[%s1092 + $0x8] sm:$0xff]
      %1095 = vrot.lane.b32.xlu0 %v259, 106
      %v1096 = vpop.permute.xlu0 %1095
      %1097 = vrot.lane.b32.xlu0 %v260, 106
      %v1098 = vpop.permute.xlu0 %1097
      %1099 = vrot.lane.b32.xlu0 %v261, 106
      %v1100 = vpop.permute.xlu0 %1099
      %v1101 = vrot.slane %v1096, 4
      %v1102 = vrot.slane %v1098, 4
      %v1103 = vrot.slane %v1100, 4
      %v1104 = vsel %vm276, %v1101, %v1102
      %vm1105 = vcmask 867328
      %v1106 = vsel %vm1105, %v1104, %v1098
      %v1107 = vsel %vm276, %v1102, %v1103
      %v1108 = vsel %vm1105, %v1107, %v1100
      %v1111 = vmul.f32 %v1093, %v1106
      %v1112 = vmul.f32 %v1094, %v1108
      %v1113 = vadd.f32 %v1069, %v1111
      %v1114 = vadd.f32 %v1070, %v1112
      %s1115 = scalar_lea.vmem %s1, 1232
      %v1116 = vld [vmem:[%s1115] sm:$0xff]
      %v1117 = vld [vmem:[%s1115 + $0x8] sm:$0xff]
      %v1118 = vmul.f32 %v1116, %v1106
      %v1119 = vmul.f32 %v1117, %v1108
      %v1120 = vadd.f32 %v1076, %v1118
      %v1121 = vadd.f32 %v1077, %v1119
      %s1122 = scalar_lea.vmem %s1, 1248
      %v1123 = vld [vmem:[%s1122] sm:$0xff]
      %v1124 = vld [vmem:[%s1122 + $0x8] sm:$0xff]
      %v1125 = vmul.f32 %v1123, %v1106
      %v1126 = vmul.f32 %v1124, %v1108
      %v1127 = vadd.f32 %v1083, %v1125
      %v1128 = vadd.f32 %v1084, %v1126
      %s1129 = scalar_lea.vmem %s1, 1264
      %v1130 = vld [vmem:[%s1129] sm:$0xff]
      %v1131 = vld [vmem:[%s1129 + $0x8] sm:$0xff]
      %v1132 = vmul.f32 %v1130, %v1106
      %v1133 = vmul.f32 %v1131, %v1108
      %v1134 = vadd.f32 %v1090, %v1132
      %v1135 = vadd.f32 %v1091, %v1133
      %s1136 = scalar_lea.vmem %s1, 1280
      %v1137 = vld [vmem:[%s1136] sm:$0xff]
      %v1138 = vld [vmem:[%s1136 + $0x8] sm:$0xff]
      %1139 = vrot.lane.b32.xlu0 %v259, 90
      %v1140 = vpop.permute.xlu0 %1139
      %1141 = vrot.lane.b32.xlu0 %v260, 90
      %v1142 = vpop.permute.xlu0 %1141
      %1143 = vrot.lane.b32.xlu0 %v261, 90
      %v1144 = vpop.permute.xlu0 %1143
      %v1145 = vrot.slane %v1140, 4
      %v1146 = vrot.slane %v1142, 4
      %v1147 = vrot.slane %v1144, 4
      %v1148 = vsel %vm276, %v1145, %v1146
      %vm1149 = vcmask 736256
      %v1150 = vsel %vm1149, %v1148, %v1142
      %v1151 = vsel %vm276, %v1146, %v1147
      %v1152 = vsel %vm1149, %v1151, %v1144
      %v1155 = vmul.f32 %v1137, %v1150
      %v1156 = vmul.f32 %v1138, %v1152
      %v1157 = vadd.f32 %v1113, %v1155
      %v1158 = vadd.f32 %v1114, %v1156
      %s1159 = scalar_lea.vmem %s1, 1296
      %v1160 = vld [vmem:[%s1159] sm:$0xff]
      %v1161 = vld [vmem:[%s1159 + $0x8] sm:$0xff]
      %v1162 = vmul.f32 %v1160, %v1150
      %v1163 = vmul.f32 %v1161, %v1152
      %v1164 = vadd.f32 %v1120, %v1162
      %v1165 = vadd.f32 %v1121, %v1163
      %s1166 = scalar_lea.vmem %s1, 1312
      %v1167 = vld [vmem:[%s1166] sm:$0xff]
      %v1168 = vld [vmem:[%s1166 + $0x8] sm:$0xff]
      %v1169 = vmul.f32 %v1167, %v1150
      %v1170 = vmul.f32 %v1168, %v1152
      %v1171 = vadd.f32 %v1127, %v1169
      %v1172 = vadd.f32 %v1128, %v1170
      %s1173 = scalar_lea.vmem %s1, 1328
      %v1174 = vld [vmem:[%s1173] sm:$0xff]
      %v1175 = vld [vmem:[%s1173 + $0x8] sm:$0xff]
      %v1176 = vmul.f32 %v1174, %v1150
      %v1177 = vmul.f32 %v1175, %v1152
      %v1178 = vadd.f32 %v1134, %v1176
      %v1179 = vadd.f32 %v1135, %v1177
      %s1180 = scalar_lea.vmem %s1, 1344
      %v1181 = vld [vmem:[%s1180] sm:$0xff]
      %v1182 = vld [vmem:[%s1180 + $0x8] sm:$0xff]
      %1183 = vrot.lane.b32.xlu0 %v259, 89
      %v1184 = vpop.permute.xlu0 %1183
      %1185 = vrot.lane.b32.xlu0 %v260, 89
      %v1186 = vpop.permute.xlu0 %1185
      %1187 = vrot.lane.b32.xlu0 %v261, 89
      %v1188 = vpop.permute.xlu0 %1187
      %v1189 = vrot.slane %v1184, 4
      %v1190 = vrot.slane %v1186, 4
      %v1191 = vrot.slane %v1188, 4
      %v1192 = vsel %vm276, %v1189, %v1190
      %vm1193 = vcmask 728064
      %v1194 = vsel %vm1193, %v1192, %v1186
      %v1195 = vsel %vm276, %v1190, %v1191
      %v1196 = vsel %vm1193, %v1195, %v1188
      %v1199 = vmul.f32 %v1181, %v1194
      %v1200 = vmul.f32 %v1182, %v1196
      %v1201 = vadd.f32 %v1157, %v1199
      %v1202 = vadd.f32 %v1158, %v1200
      %s1203 = scalar_lea.vmem %s1, 1360
      %v1204 = vld [vmem:[%s1203] sm:$0xff]
      %v1205 = vld [vmem:[%s1203 + $0x8] sm:$0xff]
      %v1206 = vmul.f32 %v1204, %v1194
      %v1207 = vmul.f32 %v1205, %v1196
      %v1208 = vadd.f32 %v1164, %v1206
      %v1209 = vadd.f32 %v1165, %v1207
      %s1210 = scalar_lea.vmem %s1, 1376
      %v1211 = vld [vmem:[%s1210] sm:$0xff]
      %v1212 = vld [vmem:[%s1210 + $0x8] sm:$0xff]
      %v1213 = vmul.f32 %v1211, %v1194
      %v1214 = vmul.f32 %v1212, %v1196
      %v1215 = vadd.f32 %v1171, %v1213
      %v1216 = vadd.f32 %v1172, %v1214
      %s1217 = scalar_lea.vmem %s1, 1392
      %v1218 = vld [vmem:[%s1217] sm:$0xff]
      %v1219 = vld [vmem:[%s1217 + $0x8] sm:$0xff]
      %v1220 = vmul.f32 %v1218, %v1194
      %v1221 = vmul.f32 %v1219, %v1196
      %v1222 = vadd.f32 %v1178, %v1220
      %v1223 = vadd.f32 %v1179, %v1221
      %s1224 = scalar_lea.vmem %s1, 1408
      %v1225 = vld [vmem:[%s1224] sm:$0xff]
      %v1226 = vld [vmem:[%s1224 + $0x8] sm:$0xff]
      %1227 = vrot.lane.b32.xlu0 %v259, 88
      %v1228 = vpop.permute.xlu0 %1227
      %1229 = vrot.lane.b32.xlu0 %v260, 88
      %v1230 = vpop.permute.xlu0 %1229
      %1231 = vrot.lane.b32.xlu0 %v261, 88
      %v1232 = vpop.permute.xlu0 %1231
      %v1233 = vrot.slane %v1228, 4
      %v1234 = vrot.slane %v1230, 4
      %v1235 = vrot.slane %v1232, 4
      %v1236 = vsel %vm276, %v1233, %v1234
      %vm1237 = vcmask 719872
      %v1238 = vsel %vm1237, %v1236, %v1230
      %v1239 = vsel %vm276, %v1234, %v1235
      %v1240 = vsel %vm1237, %v1239, %v1232
      %v1243 = vmul.f32 %v1225, %v1238
      %v1244 = vmul.f32 %v1226, %v1240
      %v1245 = vadd.f32 %v1201, %v1243
      %v1246 = vadd.f32 %v1202, %v1244
      %s1247 = scalar_lea.vmem %s1, 1424
      %v1248 = vld [vmem:[%s1247] sm:$0xff]
      %v1249 = vld [vmem:[%s1247 + $0x8] sm:$0xff]
      %v1250 = vmul.f32 %v1248, %v1238
      %v1251 = vmul.f32 %v1249, %v1240
      %v1252 = vadd.f32 %v1208, %v1250
      %v1253 = vadd.f32 %v1209, %v1251
      %s1254 = scalar_lea.vmem %s1, 1440
      %v1255 = vld [vmem:[%s1254] sm:$0xff]
      %v1256 = vld [vmem:[%s1254 + $0x8] sm:$0xff]
      %v1257 = vmul.f32 %v1255, %v1238
      %v1258 = vmul.f32 %v1256, %v1240
      %v1259 = vadd.f32 %v1215, %v1257
      %v1260 = vadd.f32 %v1216, %v1258
      %s1261 = scalar_lea.vmem %s1, 1456
      %v1262 = vld [vmem:[%s1261] sm:$0xff]
      %v1263 = vld [vmem:[%s1261 + $0x8] sm:$0xff]
      %v1264 = vmul.f32 %v1262, %v1238
      %v1265 = vmul.f32 %v1263, %v1240
      %v1266 = vadd.f32 %v1222, %v1264
      %v1267 = vadd.f32 %v1223, %v1265
      %s1268 = scalar_lea.vmem %s1, 1472
      %v1269 = vld [vmem:[%s1268] sm:$0xff]
      %v1270 = vld [vmem:[%s1268 + $0x8] sm:$0xff]
      %1271 = vrot.lane.b32.xlu0 %v259, 87
      %v1272 = vpop.permute.xlu0 %1271
      %1273 = vrot.lane.b32.xlu0 %v260, 87
      %v1274 = vpop.permute.xlu0 %1273
      %1275 = vrot.lane.b32.xlu0 %v261, 87
      %v1276 = vpop.permute.xlu0 %1275
      %v1277 = vrot.slane %v1272, 4
      %v1278 = vrot.slane %v1274, 4
      %v1279 = vrot.slane %v1276, 4
      %v1280 = vsel %vm276, %v1277, %v1278
      %vm1281 = vcmask 711680
      %v1282 = vsel %vm1281, %v1280, %v1274
      %v1283 = vsel %vm276, %v1278, %v1279
      %v1284 = vsel %vm1281, %v1283, %v1276
      %v1287 = vmul.f32 %v1269, %v1282
      %v1288 = vmul.f32 %v1270, %v1284
      %v1289 = vadd.f32 %v1245, %v1287
      %v1290 = vadd.f32 %v1246, %v1288
      %s1291 = scalar_lea.vmem %s1, 1488
      %v1292 = vld [vmem:[%s1291] sm:$0xff]
      %v1293 = vld [vmem:[%s1291 + $0x8] sm:$0xff]
      %v1294 = vmul.f32 %v1292, %v1282
      %v1295 = vmul.f32 %v1293, %v1284
      %v1296 = vadd.f32 %v1252, %v1294
      %v1297 = vadd.f32 %v1253, %v1295
      %s1298 = scalar_lea.vmem %s1, 1504
      %v1299 = vld [vmem:[%s1298] sm:$0xff]
      %v1300 = vld [vmem:[%s1298 + $0x8] sm:$0xff]
      %v1301 = vmul.f32 %v1299, %v1282
      %v1302 = vmul.f32 %v1300, %v1284
      %v1303 = vadd.f32 %v1259, %v1301
      %v1304 = vadd.f32 %v1260, %v1302
      %s1305 = scalar_lea.vmem %s1, 1520
      %v1306 = vld [vmem:[%s1305] sm:$0xff]
      %v1307 = vld [vmem:[%s1305 + $0x8] sm:$0xff]
      %v1308 = vmul.f32 %v1306, %v1282
      %v1309 = vmul.f32 %v1307, %v1284
      %v1310 = vadd.f32 %v1266, %v1308
      %v1311 = vadd.f32 %v1267, %v1309
      %s1312 = scalar_lea.vmem %s1, 1536
      %v1313 = vld [vmem:[%s1312] sm:$0xff]
      %v1314 = vld [vmem:[%s1312 + $0x8] sm:$0xff]
      %1315 = vrot.lane.b32.xlu0 %v259, 86
      %v1316 = vpop.permute.xlu0 %1315
      %1317 = vrot.lane.b32.xlu0 %v260, 86
      %v1318 = vpop.permute.xlu0 %1317
      %1319 = vrot.lane.b32.xlu0 %v261, 86
      %v1320 = vpop.permute.xlu0 %1319
      %v1321 = vrot.slane %v1316, 4
      %v1322 = vrot.slane %v1318, 4
      %v1323 = vrot.slane %v1320, 4
      %v1324 = vsel %vm276, %v1321, %v1322
      %vm1325 = vcmask 703488
      %v1326 = vsel %vm1325, %v1324, %v1318
      %v1327 = vsel %vm276, %v1322, %v1323
      %v1328 = vsel %vm1325, %v1327, %v1320
      %v1331 = vmul.f32 %v1313, %v1326
      %v1332 = vmul.f32 %v1314, %v1328
      %v1333 = vadd.f32 %v1289, %v1331
      %v1334 = vadd.f32 %v1290, %v1332
      %s1335 = scalar_lea.vmem %s1, 1552
      %v1336 = vld [vmem:[%s1335] sm:$0xff]
      %v1337 = vld [vmem:[%s1335 + $0x8] sm:$0xff]
      %v1338 = vmul.f32 %v1336, %v1326
      %v1339 = vmul.f32 %v1337, %v1328
      %v1340 = vadd.f32 %v1296, %v1338
      %v1341 = vadd.f32 %v1297, %v1339
      %s1342 = scalar_lea.vmem %s1, 1568
      %v1343 = vld [vmem:[%s1342] sm:$0xff]
      %v1344 = vld [vmem:[%s1342 + $0x8] sm:$0xff]
      %v1345 = vmul.f32 %v1343, %v1326
      %v1346 = vmul.f32 %v1344, %v1328
      %v1347 = vadd.f32 %v1303, %v1345
      %v1348 = vadd.f32 %v1304, %v1346
      %s1349 = scalar_lea.vmem %s1, 1584
      %v1350 = vld [vmem:[%s1349] sm:$0xff]
      %v1351 = vld [vmem:[%s1349 + $0x8] sm:$0xff]
      %v1352 = vmul.f32 %v1350, %v1326
      %v1353 = vmul.f32 %v1351, %v1328
      %v1354 = vadd.f32 %v1310, %v1352
      %v1355 = vadd.f32 %v1311, %v1353
      %s1356 = scalar_lea.vmem %s1, 1600
      %v1357 = vld [vmem:[%s1356] sm:$0xff]
      %v1358 = vld [vmem:[%s1356 + $0x8] sm:$0xff]
      %v1359 = vmul.f32 %v1357, %v543
      %v1360 = vmul.f32 %v1358, %v545
      %v1361 = vadd.f32 %v1333, %v1359
      %v1362 = vadd.f32 %v1334, %v1360
      %s1363 = scalar_lea.vmem %s1, 1616
      %v1364 = vld [vmem:[%s1363] sm:$0xff]
      %v1365 = vld [vmem:[%s1363 + $0x8] sm:$0xff]
      %v1366 = vmul.f32 %v1364, %v543
      %v1367 = vmul.f32 %v1365, %v545
      %v1368 = vadd.f32 %v1340, %v1366
      %v1369 = vadd.f32 %v1341, %v1367
      %s1370 = scalar_lea.vmem %s1, 1632
      %v1371 = vld [vmem:[%s1370] sm:$0xff]
      %v1372 = vld [vmem:[%s1370 + $0x8] sm:$0xff]
      %v1373 = vmul.f32 %v1371, %v543
      %v1374 = vmul.f32 %v1372, %v545
      %v1375 = vadd.f32 %v1347, %v1373
      %v1376 = vadd.f32 %v1348, %v1374
      %s1377 = scalar_lea.vmem %s1, 1648
      %v1378 = vld [vmem:[%s1377] sm:$0xff]
      %v1379 = vld [vmem:[%s1377 + $0x8] sm:$0xff]
      %v1380 = vmul.f32 %v1378, %v543
      %v1381 = vmul.f32 %v1379, %v545
      %v1382 = vadd.f32 %v1354, %v1380
      %v1383 = vadd.f32 %v1355, %v1381
      %s1384 = scalar_lea.vmem %s1, 1664
      %v1385 = vld [vmem:[%s1384] sm:$0xff]
      %v1386 = vld [vmem:[%s1384 + $0x8] sm:$0xff]
      %v1387 = vmul.f32 %v1385, %v587
      %v1388 = vmul.f32 %v1386, %v589
      %v1389 = vadd.f32 %v1361, %v1387
      %v1390 = vadd.f32 %v1362, %v1388
      %s1391 = scalar_lea.vmem %s1, 1680
      %v1392 = vld [vmem:[%s1391] sm:$0xff]
      %v1393 = vld [vmem:[%s1391 + $0x8] sm:$0xff]
      %v1394 = vmul.f32 %v1392, %v587
      %v1395 = vmul.f32 %v1393, %v589
      %v1396 = vadd.f32 %v1368, %v1394
      %v1397 = vadd.f32 %v1369, %v1395
      %s1398 = scalar_lea.vmem %s1, 1696
      %v1399 = vld [vmem:[%s1398] sm:$0xff]
      %v1400 = vld [vmem:[%s1398 + $0x8] sm:$0xff]
      %v1401 = vmul.f32 %v1399, %v587
      %v1402 = vmul.f32 %v1400, %v589
      %v1403 = vadd.f32 %v1375, %v1401
      %v1404 = vadd.f32 %v1376, %v1402
      %s1405 = scalar_lea.vmem %s1, 1712
      %v1406 = vld [vmem:[%s1405] sm:$0xff]
      %v1407 = vld [vmem:[%s1405 + $0x8] sm:$0xff]
      %v1408 = vmul.f32 %v1406, %v587
      %v1409 = vmul.f32 %v1407, %v589
      %v1410 = vadd.f32 %v1382, %v1408
      %v1411 = vadd.f32 %v1383, %v1409
      %s1412 = scalar_lea.vmem %s1, 1728
      %v1413 = vld [vmem:[%s1412] sm:$0xff]
      %v1414 = vld [vmem:[%s1412 + $0x8] sm:$0xff]
      %v1415 = vmul.f32 %v1413, %v631
      %v1416 = vmul.f32 %v1414, %v633
      %v1417 = vadd.f32 %v1389, %v1415
      %v1418 = vadd.f32 %v1390, %v1416
      %s1419 = scalar_lea.vmem %s1, 1744
      %v1420 = vld [vmem:[%s1419] sm:$0xff]
      %v1421 = vld [vmem:[%s1419 + $0x8] sm:$0xff]
      %v1422 = vmul.f32 %v1420, %v631
      %v1423 = vmul.f32 %v1421, %v633
      %v1424 = vadd.f32 %v1396, %v1422
      %v1425 = vadd.f32 %v1397, %v1423
      %s1426 = scalar_lea.vmem %s1, 1760
      %v1427 = vld [vmem:[%s1426] sm:$0xff]
      %v1428 = vld [vmem:[%s1426 + $0x8] sm:$0xff]
      %v1429 = vmul.f32 %v1427, %v631
      %v1430 = vmul.f32 %v1428, %v633
      %v1431 = vadd.f32 %v1403, %v1429
      %v1432 = vadd.f32 %v1404, %v1430
      %s1433 = scalar_lea.vmem %s1, 1776
      %v1434 = vld [vmem:[%s1433] sm:$0xff]
      %v1435 = vld [vmem:[%s1433 + $0x8] sm:$0xff]
      %v1436 = vmul.f32 %v1434, %v631
      %v1437 = vmul.f32 %v1435, %v633
      %v1438 = vadd.f32 %v1410, %v1436
      %v1439 = vadd.f32 %v1411, %v1437
      %s1440 = scalar_lea.vmem %s1, 1792
      %v1441 = vld [vmem:[%s1440] sm:$0xff]
      %v1442 = vld [vmem:[%s1440 + $0x8] sm:$0xff]
      %v1443 = vmul.f32 %v1441, %v763
      %v1444 = vmul.f32 %v1442, %v765
      %v1445 = vadd.f32 %v1417, %v1443
      %v1446 = vadd.f32 %v1418, %v1444
      %s1447 = scalar_lea.vmem %s1, 1808
      %v1448 = vld [vmem:[%s1447] sm:$0xff]
      %v1449 = vld [vmem:[%s1447 + $0x8] sm:$0xff]
      %v1450 = vmul.f32 %v1448, %v763
      %v1451 = vmul.f32 %v1449, %v765
      %v1452 = vadd.f32 %v1424, %v1450
      %v1453 = vadd.f32 %v1425, %v1451
      %s1454 = scalar_lea.vmem %s1, 1824
      %v1455 = vld [vmem:[%s1454] sm:$0xff]
      %v1456 = vld [vmem:[%s1454 + $0x8] sm:$0xff]
      %v1457 = vmul.f32 %v1455, %v763
      %v1458 = vmul.f32 %v1456, %v765
      %v1459 = vadd.f32 %v1431, %v1457
      %v1460 = vadd.f32 %v1432, %v1458
      %s1461 = scalar_lea.vmem %s1, 1840
      %v1462 = vld [vmem:[%s1461] sm:$0xff]
      %v1463 = vld [vmem:[%s1461 + $0x8] sm:$0xff]
      %v1464 = vmul.f32 %v1462, %v763
      %v1465 = vmul.f32 %v1463, %v765
      %v1466 = vadd.f32 %v1438, %v1464
      %v1467 = vadd.f32 %v1439, %v1465
      %s1468 = scalar_lea.vmem %s1, 1856
      %v1469 = vld [vmem:[%s1468] sm:$0xff]
      %v1470 = vld [vmem:[%s1468 + $0x8] sm:$0xff]
      %v1471 = vmul.f32 %v1469, %v799
      %v1472 = vmul.f32 %v1470, %v800
      %v1473 = vadd.f32 %v1445, %v1471
      %v1474 = vadd.f32 %v1446, %v1472
      %s1475 = scalar_lea.vmem %s1, 1872
      %v1476 = vld [vmem:[%s1475] sm:$0xff]
      %v1477 = vld [vmem:[%s1475 + $0x8] sm:$0xff]
      %v1478 = vmul.f32 %v1476, %v799
      %v1479 = vmul.f32 %v1477, %v800
      %v1480 = vadd.f32 %v1452, %v1478
      %v1481 = vadd.f32 %v1453, %v1479
      %s1482 = scalar_lea.vmem %s1, 1888
      %v1483 = vld [vmem:[%s1482] sm:$0xff]
      %v1484 = vld [vmem:[%s1482 + $0x8] sm:$0xff]
      %v1485 = vmul.f32 %v1483, %v799
      %v1486 = vmul.f32 %v1484, %v800
      %v1487 = vadd.f32 %v1459, %v1485
      %v1488 = vadd.f32 %v1460, %v1486
      %s1489 = scalar_lea.vmem %s1, 1904
      %v1490 = vld [vmem:[%s1489] sm:$0xff]
      %v1491 = vld [vmem:[%s1489 + $0x8] sm:$0xff]
      %v1492 = vmul.f32 %v1490, %v799
      %v1493 = vmul.f32 %v1491, %v800
      %v1494 = vadd.f32 %v1466, %v1492
      %v1495 = vadd.f32 %v1467, %v1493
      %s1496 = scalar_lea.vmem %s1, 1920
      %v1497 = vld [vmem:[%s1496] sm:$0xff]
      %v1498 = vld [vmem:[%s1496 + $0x8] sm:$0xff]
      %v1499 = vmul.f32 %v1497, %v842
      %v1500 = vmul.f32 %v1498, %v844
      %v1501 = vadd.f32 %v1473, %v1499
      %v1502 = vadd.f32 %v1474, %v1500
      %s1503 = scalar_lea.vmem %s1, 1936
      %v1504 = vld [vmem:[%s1503] sm:$0xff]
      %v1505 = vld [vmem:[%s1503 + $0x8] sm:$0xff]
      %v1506 = vmul.f32 %v1504, %v842
      %v1507 = vmul.f32 %v1505, %v844
      %v1508 = vadd.f32 %v1480, %v1506
      %v1509 = vadd.f32 %v1481, %v1507
      %s1510 = scalar_lea.vmem %s1, 1952
      %v1511 = vld [vmem:[%s1510] sm:$0xff]
      %v1512 = vld [vmem:[%s1510 + $0x8] sm:$0xff]
      %v1513 = vmul.f32 %v1511, %v842
      %v1514 = vmul.f32 %v1512, %v844
      %v1515 = vadd.f32 %v1487, %v1513
      %v1516 = vadd.f32 %v1488, %v1514
      %s1517 = scalar_lea.vmem %s1, 1968
      %v1518 = vld [vmem:[%s1517] sm:$0xff]
      %v1519 = vld [vmem:[%s1517 + $0x8] sm:$0xff]
      %v1520 = vmul.f32 %v1518, %v842
      %v1521 = vmul.f32 %v1519, %v844
      %v1522 = vadd.f32 %v1494, %v1520
      %v1523 = vadd.f32 %v1495, %v1521
      %s1524 = scalar_lea.vmem %s1, 1984
      %v1525 = vld [vmem:[%s1524] sm:$0xff]
      %v1526 = vld [vmem:[%s1524 + $0x8] sm:$0xff]
      %v1527 = vmul.f32 %v1525, %v974
      %v1528 = vmul.f32 %v1526, %v976
      %v1529 = vadd.f32 %v1501, %v1527
      %v1530 = vadd.f32 %v1502, %v1528
      %s1531 = scalar_lea.vmem %s1, 2000
      %v1532 = vld [vmem:[%s1531] sm:$0xff]
      %v1533 = vld [vmem:[%s1531 + $0x8] sm:$0xff]
      %v1534 = vmul.f32 %v1532, %v974
      %v1535 = vmul.f32 %v1533, %v976
      %v1536 = vadd.f32 %v1508, %v1534
      %v1537 = vadd.f32 %v1509, %v1535
      %s1538 = scalar_lea.vmem %s1, 2016
      %v1539 = vld [vmem:[%s1538] sm:$0xff]
      %v1540 = vld [vmem:[%s1538 + $0x8] sm:$0xff]
      %v1541 = vmul.f32 %v1539, %v974
      %v1542 = vmul.f32 %v1540, %v976
      %v1543 = vadd.f32 %v1515, %v1541
      %v1544 = vadd.f32 %v1516, %v1542
      %s1545 = scalar_lea.vmem %s1, 2032
      %v1546 = vld [vmem:[%s1545] sm:$0xff]
      %v1547 = vld [vmem:[%s1545 + $0x8] sm:$0xff]
      %v1548 = vmul.f32 %v1546, %v974
      %v1549 = vmul.f32 %v1547, %v976
      %v1550 = vadd.f32 %v1522, %v1548
      %v1551 = vadd.f32 %v1523, %v1549
      %s1552 = scalar_lea.vmem %s1, 2048
      %v1553 = vld [vmem:[%s1552] sm:$0xff]
      %v1554 = vld [vmem:[%s1552 + $0x8] sm:$0xff]
      %v1555 = vmul.f32 %v1553, %v1018
      %v1556 = vmul.f32 %v1554, %v1020
      %v1557 = vadd.f32 %v1529, %v1555
      %v1558 = vadd.f32 %v1530, %v1556
      %s1559 = scalar_lea.vmem %s1, 2064
      %v1560 = vld [vmem:[%s1559] sm:$0xff]
      %v1561 = vld [vmem:[%s1559 + $0x8] sm:$0xff]
      %v1562 = vmul.f32 %v1560, %v1018
      %v1563 = vmul.f32 %v1561, %v1020
      %v1564 = vadd.f32 %v1536, %v1562
      %v1565 = vadd.f32 %v1537, %v1563
      %s1566 = scalar_lea.vmem %s1, 2080
      %v1567 = vld [vmem:[%s1566] sm:$0xff]
      %v1568 = vld [vmem:[%s1566 + $0x8] sm:$0xff]
      %v1569 = vmul.f32 %v1567, %v1018
      %v1570 = vmul.f32 %v1568, %v1020
      %v1571 = vadd.f32 %v1543, %v1569
      %v1572 = vadd.f32 %v1544, %v1570
      %s1573 = scalar_lea.vmem %s1, 2096
      %v1574 = vld [vmem:[%s1573] sm:$0xff]
      %v1575 = vld [vmem:[%s1573 + $0x8] sm:$0xff]
      %v1576 = vmul.f32 %v1574, %v1018
      %v1577 = vmul.f32 %v1575, %v1020
      %v1578 = vadd.f32 %v1550, %v1576
      %v1579 = vadd.f32 %v1551, %v1577
      %s1580 = scalar_lea.vmem %s1, 2112
      %v1581 = vld [vmem:[%s1580] sm:$0xff]
      %v1582 = vld [vmem:[%s1580 + $0x8] sm:$0xff]
      %v1583 = vmul.f32 %v1581, %v1062
      %v1584 = vmul.f32 %v1582, %v1064
      %v1585 = vadd.f32 %v1557, %v1583
      %v1586 = vadd.f32 %v1558, %v1584
      %s1587 = scalar_lea.vmem %s1, 2128
      %v1588 = vld [vmem:[%s1587] sm:$0xff]
      %v1589 = vld [vmem:[%s1587 + $0x8] sm:$0xff]
      %v1590 = vmul.f32 %v1588, %v1062
      %v1591 = vmul.f32 %v1589, %v1064
      %v1592 = vadd.f32 %v1564, %v1590
      %v1593 = vadd.f32 %v1565, %v1591
      %s1594 = scalar_lea.vmem %s1, 2144
      %v1595 = vld [vmem:[%s1594] sm:$0xff]
      %v1596 = vld [vmem:[%s1594 + $0x8] sm:$0xff]
      %v1597 = vmul.f32 %v1595, %v1062
      %v1598 = vmul.f32 %v1596, %v1064
      %v1599 = vadd.f32 %v1571, %v1597
      %v1600 = vadd.f32 %v1572, %v1598
      %s1601 = scalar_lea.vmem %s1, 2160
      %v1602 = vld [vmem:[%s1601] sm:$0xff]
      %v1603 = vld [vmem:[%s1601 + $0x8] sm:$0xff]
      %v1604 = vmul.f32 %v1602, %v1062
      %v1605 = vmul.f32 %v1603, %v1064
      %v1606 = vadd.f32 %v1578, %v1604
      %v1607 = vadd.f32 %v1579, %v1605
      %v1610 = vcombine.high %v1585, %v1585
      %v1611 = vcombine.high %v1586, %v1586
      %v1614 = vsel %vm276, %v1585, 0.0
      %v1615 = vrot.slane %v1614, 4
      %v1616 = vadd.f32 %v1614, %v1615
      %v1617 = vrot.slane %v1616, 2
      %v1618 = vadd.f32 %v1616, %v1617
      %v1619 = vrot.slane %v1618, 1
      %v1620 = vadd.f32 %v1618, %v1619
      %v1621 = vsel %vm276, %v1610, 0.0
      %v1622 = vrot.slane %v1621, 4
      %v1623 = vadd.f32 %v1621, %v1622
      %v1624 = vrot.slane %v1623, 2
      %v1625 = vadd.f32 %v1623, %v1624
      %v1626 = vrot.slane %v1625, 1
      %v1627 = vadd.f32 %v1625, %v1626
      %v1628 = vsel %vm276, %v1586, 0.0
      %v1629 = vrot.slane %v1628, 4
      %v1630 = vadd.f32 %v1628, %v1629
      %v1631 = vrot.slane %v1630, 2
      %v1632 = vadd.f32 %v1630, %v1631
      %v1633 = vrot.slane %v1632, 1
      %v1634 = vadd.f32 %v1632, %v1633
      %v1635 = vsel %vm276, %v1611, 0.0
      %v1636 = vrot.slane %v1635, 4
      %v1637 = vadd.f32 %v1635, %v1636
      %v1638 = vrot.slane %v1637, 2
      %v1639 = vadd.f32 %v1637, %v1638
      %v1640 = vrot.slane %v1639, 1
      %v1641 = vadd.f32 %v1639, %v1640
      %v1644 = vcombine.high %v1592, %v1592
      %v1645 = vcombine.high %v1593, %v1593
      %v1648 = vsel %vm276, %v1592, 0.0
      %v1649 = vrot.slane %v1648, 4
      %v1650 = vadd.f32 %v1648, %v1649
      %v1651 = vrot.slane %v1650, 2
      %v1652 = vadd.f32 %v1650, %v1651
      %v1653 = vrot.slane %v1652, 1
      %v1654 = vadd.f32 %v1652, %v1653
      %v1655 = vsel %vm276, %v1644, 0.0
      %v1656 = vrot.slane %v1655, 4
      %v1657 = vadd.f32 %v1655, %v1656
      %v1658 = vrot.slane %v1657, 2
      %v1659 = vadd.f32 %v1657, %v1658
      %v1660 = vrot.slane %v1659, 1
      %v1661 = vadd.f32 %v1659, %v1660
      %v1662 = vsel %vm276, %v1593, 0.0
      %v1663 = vrot.slane %v1662, 4
      %v1664 = vadd.f32 %v1662, %v1663
      %v1665 = vrot.slane %v1664, 2
      %v1666 = vadd.f32 %v1664, %v1665
      %v1667 = vrot.slane %v1666, 1
      %v1668 = vadd.f32 %v1666, %v1667
      %v1669 = vsel %vm276, %v1645, 0.0
      %v1670 = vrot.slane %v1669, 4
      %v1671 = vadd.f32 %v1669, %v1670
      %v1672 = vrot.slane %v1671, 2
      %v1673 = vadd.f32 %v1671, %v1672
      %v1674 = vrot.slane %v1673, 1
      %v1675 = vadd.f32 %v1673, %v1674
      %v1678 = vcombine.high %v1599, %v1599
      %v1679 = vcombine.high %v1600, %v1600
      %v1682 = vsel %vm276, %v1599, 0.0
      %v1683 = vrot.slane %v1682, 4
      %v1684 = vadd.f32 %v1682, %v1683
      %v1685 = vrot.slane %v1684, 2
      %v1686 = vadd.f32 %v1684, %v1685
      %v1687 = vrot.slane %v1686, 1
      %v1688 = vadd.f32 %v1686, %v1687
      %v1689 = vsel %vm276, %v1678, 0.0
      %v1690 = vrot.slane %v1689, 4
      %v1691 = vadd.f32 %v1689, %v1690
      %v1692 = vrot.slane %v1691, 2
      %v1693 = vadd.f32 %v1691, %v1692
      %v1694 = vrot.slane %v1693, 1
      %v1695 = vadd.f32 %v1693, %v1694
      %v1696 = vsel %vm276, %v1600, 0.0
      %v1697 = vrot.slane %v1696, 4
      %v1698 = vadd.f32 %v1696, %v1697
      %v1699 = vrot.slane %v1698, 2
      %v1700 = vadd.f32 %v1698, %v1699
      %v1701 = vrot.slane %v1700, 1
      %v1702 = vadd.f32 %v1700, %v1701
      %v1703 = vsel %vm276, %v1679, 0.0
      %v1704 = vrot.slane %v1703, 4
      %v1705 = vadd.f32 %v1703, %v1704
      %v1706 = vrot.slane %v1705, 2
      %v1707 = vadd.f32 %v1705, %v1706
      %v1708 = vrot.slane %v1707, 1
      %v1709 = vadd.f32 %v1707, %v1708
      %v1712 = vcombine.high %v1606, %v1606
      %v1713 = vcombine.high %v1607, %v1607
      %v1716 = vsel %vm276, %v1606, 0.0
      %v1717 = vrot.slane %v1716, 4
      %v1718 = vadd.f32 %v1716, %v1717
      %v1719 = vrot.slane %v1718, 2
      %v1720 = vadd.f32 %v1718, %v1719
      %v1721 = vrot.slane %v1720, 1
      %v1722 = vadd.f32 %v1720, %v1721
      %v1723 = vsel %vm276, %v1712, 0.0
      %v1724 = vrot.slane %v1723, 4
      %v1725 = vadd.f32 %v1723, %v1724
      %v1726 = vrot.slane %v1725, 2
      %v1727 = vadd.f32 %v1725, %v1726
      %v1728 = vrot.slane %v1727, 1
      %v1729 = vadd.f32 %v1727, %v1728
      %v1730 = vsel %vm276, %v1607, 0.0
      %v1731 = vrot.slane %v1730, 4
      %v1732 = vadd.f32 %v1730, %v1731
      %v1733 = vrot.slane %v1732, 2
      %v1734 = vadd.f32 %v1732, %v1733
      %v1735 = vrot.slane %v1734, 1
      %v1736 = vadd.f32 %v1734, %v1735
      %v1737 = vsel %vm276, %v1713, 0.0
      %v1738 = vrot.slane %v1737, 4
      %v1739 = vadd.f32 %v1737, %v1738
      %v1740 = vrot.slane %v1739, 2
      %v1741 = vadd.f32 %v1739, %v1740
      %v1742 = vrot.slane %v1741, 1
      %v1743 = vadd.f32 %v1741, %v1742
      %vm1744 = vcmask 1040384
      %v1745 = vsel %vm1744, %v1620, %v1654
      %v1746 = vsel %vm1744, %v1627, %v1661
      %v1747 = vsel %vm1744, %v1634, %v1668
      %v1748 = vsel %vm1744, %v1641, %v1675
      %vm1749 = vcmask 1041408
      %v1750 = vsel %vm1749, %v1745, %v1688
      %v1751 = vsel %vm1749, %v1746, %v1695
      %v1752 = vsel %vm1749, %v1747, %v1702
      %v1753 = vsel %vm1749, %v1748, %v1709
      %vm1754 = vcmask 1042432
      %v1755 = vsel %vm1754, %v1750, %v1722
      %v1756 = vsel %vm1754, %v1751, %v1729
      %v1757 = vsel %vm1754, %v1752, %v1736
      %v1758 = vsel %vm1754, %v1753, %v1743
      %v1761 = vcombine.high %v149, %v149
      %v1762 = vcombine.high %v150, %v150
      %v1765 = vadd.f32 %v1755, %v149
      %v1766 = vadd.f32 %v1756, %v1761
      %v1767 = vadd.f32 %v1757, %v150
      %v1768 = vadd.f32 %v1758, %v1762
      %v1769 = vmax.f32 %v1765, 0.0
      %v1770 = vmax.f32 %v1766, 0.0
      %v1771 = vmax.f32 %v1767, 0.0
      %v1772 = vmax.f32 %v1768, 0.0
      %v1775 = vcombine.high %v146, %v146
      %v1776 = vcombine.high %v147, %v147
      %v1779 = vmul.f32 %v1769, %v146
      %v1780 = vmul.f32 %v1770, %v1775
      %v1781 = vmul.f32 %v1771, %v147
      %v1782 = vmul.f32 %v1772, %v1776
      %v1787 = vcombine.low %v1779, %v1780
      %v1788 = vcombine.low %v1781, %v1782
      %1791 = vst [vmem:[#allocation2 + $0x4] sm:$0xff] %v1787
      %1792 = vst [vmem:[#allocation2 + $0xc] sm:$0xff] %v1788
      %v1793 = vld [vmem:[#allocation2] sm:$0xff]
      %v1794 = vld [vmem:[#allocation2 + $0x8] sm:$0xff]
      %v1795 = vld [vmem:[#allocation2 + $0x10] sm:$0xff]
      %s1796 = scalar_lea.vmem %s1, 2176
      %v1797 = vld [vmem:[%s1796] sm:$0xff]
      %v1798 = vld [vmem:[%s1796 + $0x8] sm:$0xff]
      %1802 = vrot.lane.b32.xlu0 %v1793, 42
      %v1803 = vpop.permute.xlu0 %1802
      %1804 = vrot.lane.b32.xlu0 %v1794, 42
      %v1805 = vpop.permute.xlu0 %1804
      %1806 = vrot.lane.b32.xlu0 %v1795, 42
      %v1807 = vpop.permute.xlu0 %1806
      %v1808 = vrot.slane %v1803, 4
      %v1809 = vrot.slane %v1805, 4
      %v1810 = vrot.slane %v1807, 4
      %v1811 = vsel %vm276, %v1808, %v1809
      %v1812 = vsel %vm278, %v1803, %v1811
      %v1813 = vsel %vm276, %v1809, %v1810
      %v1814 = vsel %vm278, %v1805, %v1813
      %v1817 = vmul.f32 %v1797, %v1812
      %v1818 = vmul.f32 %v1798, %v1814
      %v1819 = vadd.f32 %v1817, 0.0
      %v1820 = vadd.f32 %v1818, 0.0
      %s1821 = scalar_lea.vmem %s1, 2192
      %v1822 = vld [vmem:[%s1821] sm:$0xff]
      %v1823 = vld [vmem:[%s1821 + $0x8] sm:$0xff]
      %v1824 = vmul.f32 %v1822, %v1812
      %v1825 = vmul.f32 %v1823, %v1814
      %v1826 = vadd.f32 %v1824, 0.0
      %v1827 = vadd.f32 %v1825, 0.0
      %s1828 = scalar_lea.vmem %s1, 2208
      %v1829 = vld [vmem:[%s1828] sm:$0xff]
      %v1830 = vld [vmem:[%s1828 + $0x8] sm:$0xff]
      %v1831 = vmul.f32 %v1829, %v1812
      %v1832 = vmul.f32 %v1830, %v1814
      %v1833 = vadd.f32 %v1831, 0.0
      %v1834 = vadd.f32 %v1832, 0.0
      %s1835 = scalar_lea.vmem %s1, 2224
      %v1836 = vld [vmem:[%s1835] sm:$0xff]
      %v1837 = vld [vmem:[%s1835 + $0x8] sm:$0xff]
      %v1838 = vmul.f32 %v1836, %v1812
      %v1839 = vmul.f32 %v1837, %v1814
      %v1840 = vadd.f32 %v1838, 0.0
      %v1841 = vadd.f32 %v1839, 0.0
      %s1842 = scalar_lea.vmem %s1, 2240
      %v1843 = vld [vmem:[%s1842] sm:$0xff]
      %v1844 = vld [vmem:[%s1842 + $0x8] sm:$0xff]
      %1845 = vrot.lane.b32.xlu0 %v1793, 41
      %v1846 = vpop.permute.xlu0 %1845
      %1847 = vrot.lane.b32.xlu0 %v1794, 41
      %v1848 = vpop.permute.xlu0 %1847
      %1849 = vrot.lane.b32.xlu0 %v1795, 41
      %v1850 = vpop.permute.xlu0 %1849
      %v1851 = vrot.slane %v1846, 4
      %v1852 = vrot.slane %v1848, 4
      %v1853 = vrot.slane %v1850, 4
      %v1854 = vsel %vm276, %v1851, %v1852
      %v1855 = vsel %vm322, %v1846, %v1854
      %v1856 = vsel %vm276, %v1852, %v1853
      %v1857 = vsel %vm322, %v1848, %v1856
      %v1860 = vmul.f32 %v1843, %v1855
      %v1861 = vmul.f32 %v1844, %v1857
      %v1862 = vadd.f32 %v1819, %v1860
      %v1863 = vadd.f32 %v1820, %v1861
      %s1864 = scalar_lea.vmem %s1, 2256
      %v1865 = vld [vmem:[%s1864] sm:$0xff]
      %v1866 = vld [vmem:[%s1864 + $0x8] sm:$0xff]
      %v1867 = vmul.f32 %v1865, %v1855
      %v1868 = vmul.f32 %v1866, %v1857
      %v1869 = vadd.f32 %v1826, %v1867
      %v1870 = vadd.f32 %v1827, %v1868
      %s1871 = scalar_lea.vmem %s1, 2272
      %v1872 = vld [vmem:[%s1871] sm:$0xff]
      %v1873 = vld [vmem:[%s1871 + $0x8] sm:$0xff]
      %v1874 = vmul.f32 %v1872, %v1855
      %v1875 = vmul.f32 %v1873, %v1857
      %v1876 = vadd.f32 %v1833, %v1874
      %v1877 = vadd.f32 %v1834, %v1875
      %s1878 = scalar_lea.vmem %s1, 2288
      %v1879 = vld [vmem:[%s1878] sm:$0xff]
      %v1880 = vld [vmem:[%s1878 + $0x8] sm:$0xff]
      %v1881 = vmul.f32 %v1879, %v1855
      %v1882 = vmul.f32 %v1880, %v1857
      %v1883 = vadd.f32 %v1840, %v1881
      %v1884 = vadd.f32 %v1841, %v1882
      %s1885 = scalar_lea.vmem %s1, 2304
      %v1886 = vld [vmem:[%s1885] sm:$0xff]
      %v1887 = vld [vmem:[%s1885 + $0x8] sm:$0xff]
      %1888 = vrot.lane.b32.xlu0 %v1793, 40
      %v1889 = vpop.permute.xlu0 %1888
      %1890 = vrot.lane.b32.xlu0 %v1794, 40
      %v1891 = vpop.permute.xlu0 %1890
      %1892 = vrot.lane.b32.xlu0 %v1795, 40
      %v1893 = vpop.permute.xlu0 %1892
      %v1894 = vrot.slane %v1889, 4
      %v1895 = vrot.slane %v1891, 4
      %v1896 = vrot.slane %v1893, 4
      %v1897 = vsel %vm276, %v1894, %v1895
      %v1898 = vsel %vm366, %v1889, %v1897
      %v1899 = vsel %vm276, %v1895, %v1896
      %v1900 = vsel %vm366, %v1891, %v1899
      %v1903 = vmul.f32 %v1886, %v1898
      %v1904 = vmul.f32 %v1887, %v1900
      %v1905 = vadd.f32 %v1862, %v1903
      %v1906 = vadd.f32 %v1863, %v1904
      %s1907 = scalar_lea.vmem %s1, 2320
      %v1908 = vld [vmem:[%s1907] sm:$0xff]
      %v1909 = vld [vmem:[%s1907 + $0x8] sm:$0xff]
      %v1910 = vmul.f32 %v1908, %v1898
      %v1911 = vmul.f32 %v1909, %v1900
      %v1912 = vadd.f32 %v1869, %v1910
      %v1913 = vadd.f32 %v1870, %v1911
      %s1914 = scalar_lea.vmem %s1, 2336
      %v1915 = vld [vmem:[%s1914] sm:$0xff]
      %v1916 = vld [vmem:[%s1914 + $0x8] sm:$0xff]
      %v1917 = vmul.f32 %v1915, %v1898
      %v1918 = vmul.f32 %v1916, %v1900
      %v1919 = vadd.f32 %v1876, %v1917
      %v1920 = vadd.f32 %v1877, %v1918
      %s1921 = scalar_lea.vmem %s1, 2352
      %v1922 = vld [vmem:[%s1921] sm:$0xff]
      %v1923 = vld [vmem:[%s1921 + $0x8] sm:$0xff]
      %v1924 = vmul.f32 %v1922, %v1898
      %v1925 = vmul.f32 %v1923, %v1900
      %v1926 = vadd.f32 %v1883, %v1924
      %v1927 = vadd.f32 %v1884, %v1925
      %s1928 = scalar_lea.vmem %s1, 2368
      %v1929 = vld [vmem:[%s1928] sm:$0xff]
      %v1930 = vld [vmem:[%s1928 + $0x8] sm:$0xff]
      %1931 = vrot.lane.b32.xlu0 %v1793, 39
      %v1932 = vpop.permute.xlu0 %1931
      %1933 = vrot.lane.b32.xlu0 %v1794, 39
      %v1934 = vpop.permute.xlu0 %1933
      %1935 = vrot.lane.b32.xlu0 %v1795, 39
      %v1936 = vpop.permute.xlu0 %1935
      %v1937 = vrot.slane %v1932, 4
      %v1938 = vrot.slane %v1934, 4
      %v1939 = vrot.slane %v1936, 4
      %v1940 = vsel %vm276, %v1937, %v1938
      %v1941 = vsel %vm410, %v1932, %v1940
      %v1942 = vsel %vm276, %v1938, %v1939
      %v1943 = vsel %vm410, %v1934, %v1942
      %v1946 = vmul.f32 %v1929, %v1941
      %v1947 = vmul.f32 %v1930, %v1943
      %v1948 = vadd.f32 %v1905, %v1946
      %v1949 = vadd.f32 %v1906, %v1947
      %s1950 = scalar_lea.vmem %s1, 2384
      %v1951 = vld [vmem:[%s1950] sm:$0xff]
      %v1952 = vld [vmem:[%s1950 + $0x8] sm:$0xff]
      %v1953 = vmul.f32 %v1951, %v1941
      %v1954 = vmul.f32 %v1952, %v1943
      %v1955 = vadd.f32 %v1912, %v1953
      %v1956 = vadd.f32 %v1913, %v1954
      %s1957 = scalar_lea.vmem %s1, 2400
      %v1958 = vld [vmem:[%s1957] sm:$0xff]
      %v1959 = vld [vmem:[%s1957 + $0x8] sm:$0xff]
      %v1960 = vmul.f32 %v1958, %v1941
      %v1961 = vmul.f32 %v1959, %v1943
      %v1962 = vadd.f32 %v1919, %v1960
      %v1963 = vadd.f32 %v1920, %v1961
      %s1964 = scalar_lea.vmem %s1, 2416
      %v1965 = vld [vmem:[%s1964] sm:$0xff]
      %v1966 = vld [vmem:[%s1964 + $0x8] sm:$0xff]
      %v1967 = vmul.f32 %v1965, %v1941
      %v1968 = vmul.f32 %v1966, %v1943
      %v1969 = vadd.f32 %v1926, %v1967
      %v1970 = vadd.f32 %v1927, %v1968
      %s1971 = scalar_lea.vmem %s1, 2432
      %v1972 = vld [vmem:[%s1971] sm:$0xff]
      %v1973 = vld [vmem:[%s1971 + $0x8] sm:$0xff]
      %1974 = vrot.lane.b32.xlu0 %v1793, 38
      %v1975 = vpop.permute.xlu0 %1974
      %1976 = vrot.lane.b32.xlu0 %v1794, 38
      %v1977 = vpop.permute.xlu0 %1976
      %1978 = vrot.lane.b32.xlu0 %v1795, 38
      %v1979 = vpop.permute.xlu0 %1978
      %v1980 = vrot.slane %v1975, 4
      %v1981 = vrot.slane %v1977, 4
      %v1982 = vrot.slane %v1979, 4
      %v1983 = vsel %vm276, %v1980, %v1981
      %v1984 = vsel %vm454, %v1975, %v1983
      %v1985 = vsel %vm276, %v1981, %v1982
      %v1986 = vsel %vm454, %v1977, %v1985
      %v1989 = vmul.f32 %v1972, %v1984
      %v1990 = vmul.f32 %v1973, %v1986
      %v1991 = vadd.f32 %v1948, %v1989
      %v1992 = vadd.f32 %v1949, %v1990
      %s1993 = scalar_lea.vmem %s1, 2448
      %v1994 = vld [vmem:[%s1993] sm:$0xff]
      %v1995 = vld [vmem:[%s1993 + $0x8] sm:$0xff]
      %v1996 = vmul.f32 %v1994, %v1984
      %v1997 = vmul.f32 %v1995, %v1986
      %v1998 = vadd.f32 %v1955, %v1996
      %v1999 = vadd.f32 %v1956, %v1997
      %s2000 = scalar_lea.vmem %s1, 2464
      %v2001 = vld [vmem:[%s2000] sm:$0xff]
      %v2002 = vld [vmem:[%s2000 + $0x8] sm:$0xff]
      %v2003 = vmul.f32 %v2001, %v1984
      %v2004 = vmul.f32 %v2002, %v1986
      %v2005 = vadd.f32 %v1962, %v2003
      %v2006 = vadd.f32 %v1963, %v2004
      %s2007 = scalar_lea.vmem %s1, 2480
      %v2008 = vld [vmem:[%s2007] sm:$0xff]
      %v2009 = vld [vmem:[%s2007 + $0x8] sm:$0xff]
      %v2010 = vmul.f32 %v2008, %v1984
      %v2011 = vmul.f32 %v2009, %v1986
      %v2012 = vadd.f32 %v1969, %v2010
      %v2013 = vadd.f32 %v1970, %v2011
      %s2014 = scalar_lea.vmem %s1, 2496
      %v2015 = vld [vmem:[%s2014] sm:$0xff]
      %v2016 = vld [vmem:[%s2014 + $0x8] sm:$0xff]
      %2017 = vrot.lane.b32.xlu0 %v1793, 22
      %v2018 = vpop.permute.xlu0 %2017
      %2019 = vrot.lane.b32.xlu0 %v1794, 22
      %v2020 = vpop.permute.xlu0 %2019
      %2021 = vrot.lane.b32.xlu0 %v1795, 22
      %v2022 = vpop.permute.xlu0 %2021
      %v2023 = vrot.slane %v2018, 4
      %v2024 = vrot.slane %v2020, 4
      %v2025 = vrot.slane %v2022, 4
      %v2026 = vsel %vm276, %v2023, %v2024
      %v2027 = vsel %vm498, %v2018, %v2026
      %v2028 = vsel %vm276, %v2024, %v2025
      %v2029 = vsel %vm498, %v2020, %v2028
      %v2032 = vmul.f32 %v2015, %v2027
      %v2033 = vmul.f32 %v2016, %v2029
      %v2034 = vadd.f32 %v1991, %v2032
      %v2035 = vadd.f32 %v1992, %v2033
      %s2036 = scalar_lea.vmem %s1, 2512
      %v2037 = vld [vmem:[%s2036] sm:$0xff]
      %v2038 = vld [vmem:[%s2036 + $0x8] sm:$0xff]
      %v2039 = vmul.f32 %v2037, %v2027
      %v2040 = vmul.f32 %v2038, %v2029
      %v2041 = vadd.f32 %v1998, %v2039
      %v2042 = vadd.f32 %v1999, %v2040
      %s2043 = scalar_lea.vmem %s1, 2528
      %v2044 = vld [vmem:[%s2043] sm:$0xff]
      %v2045 = vld [vmem:[%s2043 + $0x8] sm:$0xff]
      %v2046 = vmul.f32 %v2044, %v2027
      %v2047 = vmul.f32 %v2045, %v2029
      %v2048 = vadd.f32 %v2005, %v2046
      %v2049 = vadd.f32 %v2006, %v2047
      %s2050 = scalar_lea.vmem %s1, 2544
      %v2051 = vld [vmem:[%s2050] sm:$0xff]
      %v2052 = vld [vmem:[%s2050 + $0x8] sm:$0xff]
      %v2053 = vmul.f32 %v2051, %v2027
      %v2054 = vmul.f32 %v2052, %v2029
      %v2055 = vadd.f32 %v2012, %v2053
      %v2056 = vadd.f32 %v2013, %v2054
      %s2057 = scalar_lea.vmem %s1, 2560
      %v2058 = vld [vmem:[%s2057] sm:$0xff]
      %v2059 = vld [vmem:[%s2057 + $0x8] sm:$0xff]
      %2060 = vrot.lane.b32.xlu0 %v1793, 21
      %v2061 = vpop.permute.xlu0 %2060
      %2062 = vrot.lane.b32.xlu0 %v1794, 21
      %v2063 = vpop.permute.xlu0 %2062
      %2064 = vrot.lane.b32.xlu0 %v1795, 21
      %v2065 = vpop.permute.xlu0 %2064
      %v2066 = vrot.slane %v2061, 4
      %v2067 = vrot.slane %v2063, 4
      %v2068 = vrot.slane %v2065, 4
      %v2069 = vsel %vm276, %v2066, %v2067
      %v2070 = vsel %vm542, %v2061, %v2069
      %v2071 = vsel %vm276, %v2067, %v2068
      %v2072 = vsel %vm542, %v2063, %v2071
      %v2075 = vmul.f32 %v2058, %v2070
      %v2076 = vmul.f32 %v2059, %v2072
      %v2077 = vadd.f32 %v2034, %v2075
      %v2078 = vadd.f32 %v2035, %v2076
      %s2079 = scalar_lea.vmem %s1, 2576
      %v2080 = vld [vmem:[%s2079] sm:$0xff]
      %v2081 = vld [vmem:[%s2079 + $0x8] sm:$0xff]
      %v2082 = vmul.f32 %v2080, %v2070
      %v2083 = vmul.f32 %v2081, %v2072
      %v2084 = vadd.f32 %v2041, %v2082
      %v2085 = vadd.f32 %v2042, %v2083
      %s2086 = scalar_lea.vmem %s1, 2592
      %v2087 = vld [vmem:[%s2086] sm:$0xff]
      %v2088 = vld [vmem:[%s2086 + $0x8] sm:$0xff]
      %v2089 = vmul.f32 %v2087, %v2070
      %v2090 = vmul.f32 %v2088, %v2072
      %v2091 = vadd.f32 %v2048, %v2089
      %v2092 = vadd.f32 %v2049, %v2090
      %s2093 = scalar_lea.vmem %s1, 2608
      %v2094 = vld [vmem:[%s2093] sm:$0xff]
      %v2095 = vld [vmem:[%s2093 + $0x8] sm:$0xff]
      %v2096 = vmul.f32 %v2094, %v2070
      %v2097 = vmul.f32 %v2095, %v2072
      %v2098 = vadd.f32 %v2055, %v2096
      %v2099 = vadd.f32 %v2056, %v2097
      %s2100 = scalar_lea.vmem %s1, 2624
      %v2101 = vld [vmem:[%s2100] sm:$0xff]
      %v2102 = vld [vmem:[%s2100 + $0x8] sm:$0xff]
      %2103 = vrot.lane.b32.xlu0 %v1793, 20
      %v2104 = vpop.permute.xlu0 %2103
      %2105 = vrot.lane.b32.xlu0 %v1794, 20
      %v2106 = vpop.permute.xlu0 %2105
      %2107 = vrot.lane.b32.xlu0 %v1795, 20
      %v2108 = vpop.permute.xlu0 %2107
      %v2109 = vrot.slane %v2104, 4
      %v2110 = vrot.slane %v2106, 4
      %v2111 = vrot.slane %v2108, 4
      %v2112 = vsel %vm276, %v2109, %v2110
      %v2113 = vsel %vm586, %v2104, %v2112
      %v2114 = vsel %vm276, %v2110, %v2111
      %v2115 = vsel %vm586, %v2106, %v2114
      %v2118 = vmul.f32 %v2101, %v2113
      %v2119 = vmul.f32 %v2102, %v2115
      %v2120 = vadd.f32 %v2077, %v2118
      %v2121 = vadd.f32 %v2078, %v2119
      %s2122 = scalar_lea.vmem %s1, 2640
      %v2123 = vld [vmem:[%s2122] sm:$0xff]
      %v2124 = vld [vmem:[%s2122 + $0x8] sm:$0xff]
      %v2125 = vmul.f32 %v2123, %v2113
      %v2126 = vmul.f32 %v2124, %v2115
      %v2127 = vadd.f32 %v2084, %v2125
      %v2128 = vadd.f32 %v2085, %v2126
      %s2129 = scalar_lea.vmem %s1, 2656
      %v2130 = vld [vmem:[%s2129] sm:$0xff]
      %v2131 = vld [vmem:[%s2129 + $0x8] sm:$0xff]
      %v2132 = vmul.f32 %v2130, %v2113
      %v2133 = vmul.f32 %v2131, %v2115
      %v2134 = vadd.f32 %v2091, %v2132
      %v2135 = vadd.f32 %v2092, %v2133
      %s2136 = scalar_lea.vmem %s1, 2672
      %v2137 = vld [vmem:[%s2136] sm:$0xff]
      %v2138 = vld [vmem:[%s2136 + $0x8] sm:$0xff]
      %v2139 = vmul.f32 %v2137, %v2113
      %v2140 = vmul.f32 %v2138, %v2115
      %v2141 = vadd.f32 %v2098, %v2139
      %v2142 = vadd.f32 %v2099, %v2140
      %s2143 = scalar_lea.vmem %s1, 2688
      %v2144 = vld [vmem:[%s2143] sm:$0xff]
      %v2145 = vld [vmem:[%s2143 + $0x8] sm:$0xff]
      %2146 = vrot.lane.b32.xlu0 %v1793, 19
      %v2147 = vpop.permute.xlu0 %2146
      %2148 = vrot.lane.b32.xlu0 %v1794, 19
      %v2149 = vpop.permute.xlu0 %2148
      %2150 = vrot.lane.b32.xlu0 %v1795, 19
      %v2151 = vpop.permute.xlu0 %2150
      %v2152 = vrot.slane %v2147, 4
      %v2153 = vrot.slane %v2149, 4
      %v2154 = vrot.slane %v2151, 4
      %v2155 = vsel %vm276, %v2152, %v2153
      %v2156 = vsel %vm630, %v2147, %v2155
      %v2157 = vsel %vm276, %v2153, %v2154
      %v2158 = vsel %vm630, %v2149, %v2157
      %v2161 = vmul.f32 %v2144, %v2156
      %v2162 = vmul.f32 %v2145, %v2158
      %v2163 = vadd.f32 %v2120, %v2161
      %v2164 = vadd.f32 %v2121, %v2162
      %s2165 = scalar_lea.vmem %s1, 2704
      %v2166 = vld [vmem:[%s2165] sm:$0xff]
      %v2167 = vld [vmem:[%s2165 + $0x8] sm:$0xff]
      %v2168 = vmul.f32 %v2166, %v2156
      %v2169 = vmul.f32 %v2167, %v2158
      %v2170 = vadd.f32 %v2127, %v2168
      %v2171 = vadd.f32 %v2128, %v2169
      %s2172 = scalar_lea.vmem %s1, 2720
      %v2173 = vld [vmem:[%s2172] sm:$0xff]
      %v2174 = vld [vmem:[%s2172 + $0x8] sm:$0xff]
      %v2175 = vmul.f32 %v2173, %v2156
      %v2176 = vmul.f32 %v2174, %v2158
      %v2177 = vadd.f32 %v2134, %v2175
      %v2178 = vadd.f32 %v2135, %v2176
      %s2179 = scalar_lea.vmem %s1, 2736
      %v2180 = vld [vmem:[%s2179] sm:$0xff]
      %v2181 = vld [vmem:[%s2179 + $0x8] sm:$0xff]
      %v2182 = vmul.f32 %v2180, %v2156
      %v2183 = vmul.f32 %v2181, %v2158
      %v2184 = vadd.f32 %v2141, %v2182
      %v2185 = vadd.f32 %v2142, %v2183
      %s2186 = scalar_lea.vmem %s1, 2752
      %v2187 = vld [vmem:[%s2186] sm:$0xff]
      %v2188 = vld [vmem:[%s2186 + $0x8] sm:$0xff]
      %2189 = vrot.lane.b32.xlu0 %v1793, 18
      %v2190 = vpop.permute.xlu0 %2189
      %2191 = vrot.lane.b32.xlu0 %v1794, 18
      %v2192 = vpop.permute.xlu0 %2191
      %2193 = vrot.lane.b32.xlu0 %v1795, 18
      %v2194 = vpop.permute.xlu0 %2193
      %v2195 = vrot.slane %v2190, 4
      %v2196 = vrot.slane %v2192, 4
      %v2197 = vrot.slane %v2194, 4
      %v2198 = vsel %vm276, %v2195, %v2196
      %v2199 = vsel %vm674, %v2190, %v2198
      %v2200 = vsel %vm276, %v2196, %v2197
      %v2201 = vsel %vm674, %v2192, %v2200
      %v2204 = vmul.f32 %v2187, %v2199
      %v2205 = vmul.f32 %v2188, %v2201
      %v2206 = vadd.f32 %v2163, %v2204
      %v2207 = vadd.f32 %v2164, %v2205
      %s2208 = scalar_lea.vmem %s1, 2768
      %v2209 = vld [vmem:[%s2208] sm:$0xff]
      %v2210 = vld [vmem:[%s2208 + $0x8] sm:$0xff]
      %v2211 = vmul.f32 %v2209, %v2199
      %v2212 = vmul.f32 %v2210, %v2201
      %v2213 = vadd.f32 %v2170, %v2211
      %v2214 = vadd.f32 %v2171, %v2212
      %s2215 = scalar_lea.vmem %s1, 2784
      %v2216 = vld [vmem:[%s2215] sm:$0xff]
      %v2217 = vld [vmem:[%s2215 + $0x8] sm:$0xff]
      %v2218 = vmul.f32 %v2216, %v2199
      %v2219 = vmul.f32 %v2217, %v2201
      %v2220 = vadd.f32 %v2177, %v2218
      %v2221 = vadd.f32 %v2178, %v2219
      %s2222 = scalar_lea.vmem %s1, 2800
      %v2223 = vld [vmem:[%s2222] sm:$0xff]
      %v2224 = vld [vmem:[%s2222 + $0x8] sm:$0xff]
      %v2225 = vmul.f32 %v2223, %v2199
      %v2226 = vmul.f32 %v2224, %v2201
      %v2227 = vadd.f32 %v2184, %v2225
      %v2228 = vadd.f32 %v2185, %v2226
      %s2229 = scalar_lea.vmem %s1, 2816
      %v2230 = vld [vmem:[%s2229] sm:$0xff]
      %v2231 = vld [vmem:[%s2229 + $0x8] sm:$0xff]
      %2232 = vrot.lane.b32.xlu0 %v1793, 2
      %v2233 = vpop.permute.xlu0 %2232
      %2234 = vrot.lane.b32.xlu0 %v1794, 2
      %v2235 = vpop.permute.xlu0 %2234
      %2236 = vrot.lane.b32.xlu0 %v1795, 2
      %v2237 = vpop.permute.xlu0 %2236
      %v2238 = vrot.slane %v2233, 4
      %v2239 = vrot.slane %v2235, 4
      %v2240 = vrot.slane %v2237, 4
      %v2241 = vsel %vm276, %v2238, %v2239
      %v2242 = vsel %vm718, %v2233, %v2241
      %v2243 = vsel %vm276, %v2239, %v2240
      %v2244 = vsel %vm718, %v2235, %v2243
      %v2247 = vmul.f32 %v2230, %v2242
      %v2248 = vmul.f32 %v2231, %v2244
      %v2249 = vadd.f32 %v2206, %v2247
      %v2250 = vadd.f32 %v2207, %v2248
      %s2251 = scalar_lea.vmem %s1, 2832
      %v2252 = vld [vmem:[%s2251] sm:$0xff]
      %v2253 = vld [vmem:[%s2251 + $0x8] sm:$0xff]
      %v2254 = vmul.f32 %v2252, %v2242
      %v2255 = vmul.f32 %v2253, %v2244
      %v2256 = vadd.f32 %v2213, %v2254
      %v2257 = vadd.f32 %v2214, %v2255
      %s2258 = scalar_lea.vmem %s1, 2848
      %v2259 = vld [vmem:[%s2258] sm:$0xff]
      %v2260 = vld [vmem:[%s2258 + $0x8] sm:$0xff]
      %v2261 = vmul.f32 %v2259, %v2242
      %v2262 = vmul.f32 %v2260, %v2244
      %v2263 = vadd.f32 %v2220, %v2261
      %v2264 = vadd.f32 %v2221, %v2262
      %s2265 = scalar_lea.vmem %s1, 2864
      %v2266 = vld [vmem:[%s2265] sm:$0xff]
      %v2267 = vld [vmem:[%s2265 + $0x8] sm:$0xff]
      %v2268 = vmul.f32 %v2266, %v2242
      %v2269 = vmul.f32 %v2267, %v2244
      %v2270 = vadd.f32 %v2227, %v2268
      %v2271 = vadd.f32 %v2228, %v2269
      %s2272 = scalar_lea.vmem %s1, 2880
      %v2273 = vld [vmem:[%s2272] sm:$0xff]
      %v2274 = vld [vmem:[%s2272 + $0x8] sm:$0xff]
      %2275 = vrot.lane.b32.xlu0 %v1793, 1
      %v2276 = vpop.permute.xlu0 %2275
      %2277 = vrot.lane.b32.xlu0 %v1794, 1
      %v2278 = vpop.permute.xlu0 %2277
      %2279 = vrot.lane.b32.xlu0 %v1795, 1
      %v2280 = vpop.permute.xlu0 %2279
      %v2281 = vrot.slane %v2276, 4
      %v2282 = vrot.slane %v2278, 4
      %v2283 = vrot.slane %v2280, 4
      %v2284 = vsel %vm276, %v2281, %v2282
      %v2285 = vsel %vm762, %v2276, %v2284
      %v2286 = vsel %vm276, %v2282, %v2283
      %v2287 = vsel %vm762, %v2278, %v2286
      %v2290 = vmul.f32 %v2273, %v2285
      %v2291 = vmul.f32 %v2274, %v2287
      %v2292 = vadd.f32 %v2249, %v2290
      %v2293 = vadd.f32 %v2250, %v2291
      %s2294 = scalar_lea.vmem %s1, 2896
      %v2295 = vld [vmem:[%s2294] sm:$0xff]
      %v2296 = vld [vmem:[%s2294 + $0x8] sm:$0xff]
      %v2297 = vmul.f32 %v2295, %v2285
      %v2298 = vmul.f32 %v2296, %v2287
      %v2299 = vadd.f32 %v2256, %v2297
      %v2300 = vadd.f32 %v2257, %v2298
      %s2301 = scalar_lea.vmem %s1, 2912
      %v2302 = vld [vmem:[%s2301] sm:$0xff]
      %v2303 = vld [vmem:[%s2301 + $0x8] sm:$0xff]
      %v2304 = vmul.f32 %v2302, %v2285
      %v2305 = vmul.f32 %v2303, %v2287
      %v2306 = vadd.f32 %v2263, %v2304
      %v2307 = vadd.f32 %v2264, %v2305
      %s2308 = scalar_lea.vmem %s1, 2928
      %v2309 = vld [vmem:[%s2308] sm:$0xff]
      %v2310 = vld [vmem:[%s2308 + $0x8] sm:$0xff]
      %v2311 = vmul.f32 %v2309, %v2285
      %v2312 = vmul.f32 %v2310, %v2287
      %v2313 = vadd.f32 %v2270, %v2311
      %v2314 = vadd.f32 %v2271, %v2312
      %s2315 = scalar_lea.vmem %s1, 2944
      %v2316 = vld [vmem:[%s2315] sm:$0xff]
      %v2317 = vld [vmem:[%s2315 + $0x8] sm:$0xff]
      %v2318 = vrot.slane %v1793, 4
      %v2319 = vrot.slane %v1794, 4
      %v2320 = vrot.slane %v1795, 4
      %v2321 = vsel %vm276, %v2318, %v2319
      %v2322 = vsel %vm276, %v2319, %v2320
      %v2325 = vmul.f32 %v2316, %v2321
      %v2326 = vmul.f32 %v2317, %v2322
      %v2327 = vadd.f32 %v2292, %v2325
      %v2328 = vadd.f32 %v2293, %v2326
      %s2329 = scalar_lea.vmem %s1, 2960
      %v2330 = vld [vmem:[%s2329] sm:$0xff]
      %v2331 = vld [vmem:[%s2329 + $0x8] sm:$0xff]
      %v2332 = vmul.f32 %v2330, %v2321
      %v2333 = vmul.f32 %v2331, %v2322
      %v2334 = vadd.f32 %v2299, %v2332
      %v2335 = vadd.f32 %v2300, %v2333
      %s2336 = scalar_lea.vmem %s1, 2976
      %v2337 = vld [vmem:[%s2336] sm:$0xff]
      %v2338 = vld [vmem:[%s2336 + $0x8] sm:$0xff]
      %v2339 = vmul.f32 %v2337, %v2321
      %v2340 = vmul.f32 %v2338, %v2322
      %v2341 = vadd.f32 %v2306, %v2339
      %v2342 = vadd.f32 %v2307, %v2340
      %s2343 = scalar_lea.vmem %s1, 2992
      %v2344 = vld [vmem:[%s2343] sm:$0xff]
      %v2345 = vld [vmem:[%s2343 + $0x8] sm:$0xff]
      %v2346 = vmul.f32 %v2344, %v2321
      %v2347 = vmul.f32 %v2345, %v2322
      %v2348 = vadd.f32 %v2313, %v2346
      %v2349 = vadd.f32 %v2314, %v2347
      %s2350 = scalar_lea.vmem %s1, 3008
      %v2351 = vld [vmem:[%s2350] sm:$0xff]
      %v2352 = vld [vmem:[%s2350 + $0x8] sm:$0xff]
      %2353 = vrot.lane.b32.xlu0 %v1793, 127
      %v2354 = vpop.permute.xlu0 %2353
      %2355 = vrot.lane.b32.xlu0 %v1794, 127
      %v2356 = vpop.permute.xlu0 %2355
      %2357 = vrot.lane.b32.xlu0 %v1795, 127
      %v2358 = vpop.permute.xlu0 %2357
      %v2359 = vrot.slane %v2354, 4
      %v2360 = vrot.slane %v2356, 4
      %v2361 = vrot.slane %v2358, 4
      %v2362 = vsel %vm276, %v2359, %v2360
      %v2363 = vsel %vm841, %v2362, %v2356
      %v2364 = vsel %vm276, %v2360, %v2361
      %v2365 = vsel %vm841, %v2364, %v2358
      %v2368 = vmul.f32 %v2351, %v2363
      %v2369 = vmul.f32 %v2352, %v2365
      %v2370 = vadd.f32 %v2327, %v2368
      %v2371 = vadd.f32 %v2328, %v2369
      %s2372 = scalar_lea.vmem %s1, 3024
      %v2373 = vld [vmem:[%s2372] sm:$0xff]
      %v2374 = vld [vmem:[%s2372 + $0x8] sm:$0xff]
      %v2375 = vmul.f32 %v2373, %v2363
      %v2376 = vmul.f32 %v2374, %v2365
      %v2377 = vadd.f32 %v2334, %v2375
      %v2378 = vadd.f32 %v2335, %v2376
      %s2379 = scalar_lea.vmem %s1, 3040
      %v2380 = vld [vmem:[%s2379] sm:$0xff]
      %v2381 = vld [vmem:[%s2379 + $0x8] sm:$0xff]
      %v2382 = vmul.f32 %v2380, %v2363
      %v2383 = vmul.f32 %v2381, %v2365
      %v2384 = vadd.f32 %v2341, %v2382
      %v2385 = vadd.f32 %v2342, %v2383
      %s2386 = scalar_lea.vmem %s1, 3056
      %v2387 = vld [vmem:[%s2386] sm:$0xff]
      %v2388 = vld [vmem:[%s2386 + $0x8] sm:$0xff]
      %v2389 = vmul.f32 %v2387, %v2363
      %v2390 = vmul.f32 %v2388, %v2365
      %v2391 = vadd.f32 %v2348, %v2389
      %v2392 = vadd.f32 %v2349, %v2390
      %s2393 = scalar_lea.vmem %s1, 3072
      %v2394 = vld [vmem:[%s2393] sm:$0xff]
      %v2395 = vld [vmem:[%s2393 + $0x8] sm:$0xff]
      %2396 = vrot.lane.b32.xlu0 %v1793, 126
      %v2397 = vpop.permute.xlu0 %2396
      %2398 = vrot.lane.b32.xlu0 %v1794, 126
      %v2399 = vpop.permute.xlu0 %2398
      %2400 = vrot.lane.b32.xlu0 %v1795, 126
      %v2401 = vpop.permute.xlu0 %2400
      %v2402 = vrot.slane %v2397, 4
      %v2403 = vrot.slane %v2399, 4
      %v2404 = vrot.slane %v2401, 4
      %v2405 = vsel %vm276, %v2402, %v2403
      %v2406 = vsel %vm885, %v2405, %v2399
      %v2407 = vsel %vm276, %v2403, %v2404
      %v2408 = vsel %vm885, %v2407, %v2401
      %v2411 = vmul.f32 %v2394, %v2406
      %v2412 = vmul.f32 %v2395, %v2408
      %v2413 = vadd.f32 %v2370, %v2411
      %v2414 = vadd.f32 %v2371, %v2412
      %s2415 = scalar_lea.vmem %s1, 3088
      %v2416 = vld [vmem:[%s2415] sm:$0xff]
      %v2417 = vld [vmem:[%s2415 + $0x8] sm:$0xff]
      %v2418 = vmul.f32 %v2416, %v2406
      %v2419 = vmul.f32 %v2417, %v2408
      %v2420 = vadd.f32 %v2377, %v2418
      %v2421 = vadd.f32 %v2378, %v2419
      %s2422 = scalar_lea.vmem %s1, 3104
      %v2423 = vld [vmem:[%s2422] sm:$0xff]
      %v2424 = vld [vmem:[%s2422 + $0x8] sm:$0xff]
      %v2425 = vmul.f32 %v2423, %v2406
      %v2426 = vmul.f32 %v2424, %v2408
      %v2427 = vadd.f32 %v2384, %v2425
      %v2428 = vadd.f32 %v2385, %v2426
      %s2429 = scalar_lea.vmem %s1, 3120
      %v2430 = vld [vmem:[%s2429] sm:$0xff]
      %v2431 = vld [vmem:[%s2429 + $0x8] sm:$0xff]
      %v2432 = vmul.f32 %v2430, %v2406
      %v2433 = vmul.f32 %v2431, %v2408
      %v2434 = vadd.f32 %v2391, %v2432
      %v2435 = vadd.f32 %v2392, %v2433
      %s2436 = scalar_lea.vmem %s1, 3136
      %v2437 = vld [vmem:[%s2436] sm:$0xff]
      %v2438 = vld [vmem:[%s2436 + $0x8] sm:$0xff]
      %2439 = vrot.lane.b32.xlu0 %v1793, 110
      %v2440 = vpop.permute.xlu0 %2439
      %2441 = vrot.lane.b32.xlu0 %v1794, 110
      %v2442 = vpop.permute.xlu0 %2441
      %2443 = vrot.lane.b32.xlu0 %v1795, 110
      %v2444 = vpop.permute.xlu0 %2443
      %v2445 = vrot.slane %v2440, 4
      %v2446 = vrot.slane %v2442, 4
      %v2447 = vrot.slane %v2444, 4
      %v2448 = vsel %vm276, %v2445, %v2446
      %v2449 = vsel %vm929, %v2448, %v2442
      %v2450 = vsel %vm276, %v2446, %v2447
      %v2451 = vsel %vm929, %v2450, %v2444
      %v2454 = vmul.f32 %v2437, %v2449
      %v2455 = vmul.f32 %v2438, %v2451
      %v2456 = vadd.f32 %v2413, %v2454
      %v2457 = vadd.f32 %v2414, %v2455
      %s2458 = scalar_lea.vmem %s1, 3152
      %v2459 = vld [vmem:[%s2458] sm:$0xff]
      %v2460 = vld [vmem:[%s2458 + $0x8] sm:$0xff]
      %v2461 = vmul.f32 %v2459, %v2449
      %v2462 = vmul.f32 %v2460, %v2451
      %v2463 = vadd.f32 %v2420, %v2461
      %v2464 = vadd.f32 %v2421, %v2462
      %s2465 = scalar_lea.vmem %s1, 3168
      %v2466 = vld [vmem:[%s2465] sm:$0xff]
      %v2467 = vld [vmem:[%s2465 + $0x8] sm:$0xff]
      %v2468 = vmul.f32 %v2466, %v2449
      %v2469 = vmul.f32 %v2467, %v2451
      %v2470 = vadd.f32 %v2427, %v2468
      %v2471 = vadd.f32 %v2428, %v2469
      %s2472 = scalar_lea.vmem %s1, 3184
      %v2473 = vld [vmem:[%s2472] sm:$0xff]
      %v2474 = vld [vmem:[%s2472 + $0x8] sm:$0xff]
      %v2475 = vmul.f32 %v2473, %v2449
      %v2476 = vmul.f32 %v2474, %v2451
      %v2477 = vadd.f32 %v2434, %v2475
      %v2478 = vadd.f32 %v2435, %v2476
      %s2479 = scalar_lea.vmem %s1, 3200
      %v2480 = vld [vmem:[%s2479] sm:$0xff]
      %v2481 = vld [vmem:[%s2479 + $0x8] sm:$0xff]
      %2482 = vrot.lane.b32.xlu0 %v1793, 109
      %v2483 = vpop.permute.xlu0 %2482
      %2484 = vrot.lane.b32.xlu0 %v1794, 109
      %v2485 = vpop.permute.xlu0 %2484
      %2486 = vrot.lane.b32.xlu0 %v1795, 109
      %v2487 = vpop.permute.xlu0 %2486
      %v2488 = vrot.slane %v2483, 4
      %v2489 = vrot.slane %v2485, 4
      %v2490 = vrot.slane %v2487, 4
      %v2491 = vsel %vm276, %v2488, %v2489
      %v2492 = vsel %vm973, %v2491, %v2485
      %v2493 = vsel %vm276, %v2489, %v2490
      %v2494 = vsel %vm973, %v2493, %v2487
      %v2497 = vmul.f32 %v2480, %v2492
      %v2498 = vmul.f32 %v2481, %v2494
      %v2499 = vadd.f32 %v2456, %v2497
      %v2500 = vadd.f32 %v2457, %v2498
      %s2501 = scalar_lea.vmem %s1, 3216
      %v2502 = vld [vmem:[%s2501] sm:$0xff]
      %v2503 = vld [vmem:[%s2501 + $0x8] sm:$0xff]
      %v2504 = vmul.f32 %v2502, %v2492
      %v2505 = vmul.f32 %v2503, %v2494
      %v2506 = vadd.f32 %v2463, %v2504
      %v2507 = vadd.f32 %v2464, %v2505
      %s2508 = scalar_lea.vmem %s1, 3232
      %v2509 = vld [vmem:[%s2508] sm:$0xff]
      %v2510 = vld [vmem:[%s2508 + $0x8] sm:$0xff]
      %v2511 = vmul.f32 %v2509, %v2492
      %v2512 = vmul.f32 %v2510, %v2494
      %v2513 = vadd.f32 %v2470, %v2511
      %v2514 = vadd.f32 %v2471, %v2512
      %s2515 = scalar_lea.vmem %s1, 3248
      %v2516 = vld [vmem:[%s2515] sm:$0xff]
      %v2517 = vld [vmem:[%s2515 + $0x8] sm:$0xff]
      %v2518 = vmul.f32 %v2516, %v2492
      %v2519 = vmul.f32 %v2517, %v2494
      %v2520 = vadd.f32 %v2477, %v2518
      %v2521 = vadd.f32 %v2478, %v2519
      %s2522 = scalar_lea.vmem %s1, 3264
      %v2523 = vld [vmem:[%s2522] sm:$0xff]
      %v2524 = vld [vmem:[%s2522 + $0x8] sm:$0xff]
      %2525 = vrot.lane.b32.xlu0 %v1793, 108
      %v2526 = vpop.permute.xlu0 %2525
      %2527 = vrot.lane.b32.xlu0 %v1794, 108
      %v2528 = vpop.permute.xlu0 %2527
      %2529 = vrot.lane.b32.xlu0 %v1795, 108
      %v2530 = vpop.permute.xlu0 %2529
      %v2531 = vrot.slane %v2526, 4
      %v2532 = vrot.slane %v2528, 4
      %v2533 = vrot.slane %v2530, 4
      %v2534 = vsel %vm276, %v2531, %v2532
      %v2535 = vsel %vm1017, %v2534, %v2528
      %v2536 = vsel %vm276, %v2532, %v2533
      %v2537 = vsel %vm1017, %v2536, %v2530
      %v2540 = vmul.f32 %v2523, %v2535
      %v2541 = vmul.f32 %v2524, %v2537
      %v2542 = vadd.f32 %v2499, %v2540
      %v2543 = vadd.f32 %v2500, %v2541
      %s2544 = scalar_lea.vmem %s1, 3280
      %v2545 = vld [vmem:[%s2544] sm:$0xff]
      %v2546 = vld [vmem:[%s2544 + $0x8] sm:$0xff]
      %v2547 = vmul.f32 %v2545, %v2535
      %v2548 = vmul.f32 %v2546, %v2537
      %v2549 = vadd.f32 %v2506, %v2547
      %v2550 = vadd.f32 %v2507, %v2548
      %s2551 = scalar_lea.vmem %s1, 3296
      %v2552 = vld [vmem:[%s2551] sm:$0xff]
      %v2553 = vld [vmem:[%s2551 + $0x8] sm:$0xff]
      %v2554 = vmul.f32 %v2552, %v2535
      %v2555 = vmul.f32 %v2553, %v2537
      %v2556 = vadd.f32 %v2513, %v2554
      %v2557 = vadd.f32 %v2514, %v2555
      %s2558 = scalar_lea.vmem %s1, 3312
      %v2559 = vld [vmem:[%s2558] sm:$0xff]
      %v2560 = vld [vmem:[%s2558 + $0x8] sm:$0xff]
      %v2561 = vmul.f32 %v2559, %v2535
      %v2562 = vmul.f32 %v2560, %v2537
      %v2563 = vadd.f32 %v2520, %v2561
      %v2564 = vadd.f32 %v2521, %v2562
      %s2565 = scalar_lea.vmem %s1, 3328
      %v2566 = vld [vmem:[%s2565] sm:$0xff]
      %v2567 = vld [vmem:[%s2565 + $0x8] sm:$0xff]
      %2568 = vrot.lane.b32.xlu0 %v1793, 107
      %v2569 = vpop.permute.xlu0 %2568
      %2570 = vrot.lane.b32.xlu0 %v1794, 107
      %v2571 = vpop.permute.xlu0 %2570
      %2572 = vrot.lane.b32.xlu0 %v1795, 107
      %v2573 = vpop.permute.xlu0 %2572
      %v2574 = vrot.slane %v2569, 4
      %v2575 = vrot.slane %v2571, 4
      %v2576 = vrot.slane %v2573, 4
      %v2577 = vsel %vm276, %v2574, %v2575
      %v2578 = vsel %vm1061, %v2577, %v2571
      %v2579 = vsel %vm276, %v2575, %v2576
      %v2580 = vsel %vm1061, %v2579, %v2573
      %v2583 = vmul.f32 %v2566, %v2578
      %v2584 = vmul.f32 %v2567, %v2580
      %v2585 = vadd.f32 %v2542, %v2583
      %v2586 = vadd.f32 %v2543, %v2584
      %s2587 = scalar_lea.vmem %s1, 3344
      %v2588 = vld [vmem:[%s2587] sm:$0xff]
      %v2589 = vld [vmem:[%s2587 + $0x8] sm:$0xff]
      %v2590 = vmul.f32 %v2588, %v2578
      %v2591 = vmul.f32 %v2589, %v2580
      %v2592 = vadd.f32 %v2549, %v2590
      %v2593 = vadd.f32 %v2550, %v2591
      %s2594 = scalar_lea.vmem %s1, 3360
      %v2595 = vld [vmem:[%s2594] sm:$0xff]
      %v2596 = vld [vmem:[%s2594 + $0x8] sm:$0xff]
      %v2597 = vmul.f32 %v2595, %v2578
      %v2598 = vmul.f32 %v2596, %v2580
      %v2599 = vadd.f32 %v2556, %v2597
      %v2600 = vadd.f32 %v2557, %v2598
      %s2601 = scalar_lea.vmem %s1, 3376
      %v2602 = vld [vmem:[%s2601] sm:$0xff]
      %v2603 = vld [vmem:[%s2601 + $0x8] sm:$0xff]
      %v2604 = vmul.f32 %v2602, %v2578
      %v2605 = vmul.f32 %v2603, %v2580
      %v2606 = vadd.f32 %v2563, %v2604
      %v2607 = vadd.f32 %v2564, %v2605
      %s2608 = scalar_lea.vmem %s1, 3392
      %v2609 = vld [vmem:[%s2608] sm:$0xff]
      %v2610 = vld [vmem:[%s2608 + $0x8] sm:$0xff]
      %2611 = vrot.lane.b32.xlu0 %v1793, 106
      %v2612 = vpop.permute.xlu0 %2611
      %2613 = vrot.lane.b32.xlu0 %v1794, 106
      %v2614 = vpop.permute.xlu0 %2613
      %2615 = vrot.lane.b32.xlu0 %v1795, 106
      %v2616 = vpop.permute.xlu0 %2615
      %v2617 = vrot.slane %v2612, 4
      %v2618 = vrot.slane %v2614, 4
      %v2619 = vrot.slane %v2616, 4
      %v2620 = vsel %vm276, %v2617, %v2618
      %v2621 = vsel %vm1105, %v2620, %v2614
      %v2622 = vsel %vm276, %v2618, %v2619
      %v2623 = vsel %vm1105, %v2622, %v2616
      %v2626 = vmul.f32 %v2609, %v2621
      %v2627 = vmul.f32 %v2610, %v2623
      %v2628 = vadd.f32 %v2585, %v2626
      %v2629 = vadd.f32 %v2586, %v2627
      %s2630 = scalar_lea.vmem %s1, 3408
      %v2631 = vld [vmem:[%s2630] sm:$0xff]
      %v2632 = vld [vmem:[%s2630 + $0x8] sm:$0xff]
      %v2633 = vmul.f32 %v2631, %v2621
      %v2634 = vmul.f32 %v2632, %v2623
      %v2635 = vadd.f32 %v2592, %v2633
      %v2636 = vadd.f32 %v2593, %v2634
      %s2637 = scalar_lea.vmem %s1, 3424
      %v2638 = vld [vmem:[%s2637] sm:$0xff]
      %v2639 = vld [vmem:[%s2637 + $0x8] sm:$0xff]
      %v2640 = vmul.f32 %v2638, %v2621
      %v2641 = vmul.f32 %v2639, %v2623
      %v2642 = vadd.f32 %v2599, %v2640
      %v2643 = vadd.f32 %v2600, %v2641
      %s2644 = scalar_lea.vmem %s1, 3440
      %v2645 = vld [vmem:[%s2644] sm:$0xff]
      %v2646 = vld [vmem:[%s2644 + $0x8] sm:$0xff]
      %v2647 = vmul.f32 %v2645, %v2621
      %v2648 = vmul.f32 %v2646, %v2623
      %v2649 = vadd.f32 %v2606, %v2647
      %v2650 = vadd.f32 %v2607, %v2648
      %s2651 = scalar_lea.vmem %s1, 3456
      %v2652 = vld [vmem:[%s2651] sm:$0xff]
      %v2653 = vld [vmem:[%s2651 + $0x8] sm:$0xff]
      %2654 = vrot.lane.b32.xlu0 %v1793, 90
      %v2655 = vpop.permute.xlu0 %2654
      %2656 = vrot.lane.b32.xlu0 %v1794, 90
      %v2657 = vpop.permute.xlu0 %2656
      %2658 = vrot.lane.b32.xlu0 %v1795, 90
      %v2659 = vpop.permute.xlu0 %2658
      %v2660 = vrot.slane %v2655, 4
      %v2661 = vrot.slane %v2657, 4
      %v2662 = vrot.slane %v2659, 4
      %v2663 = vsel %vm276, %v2660, %v2661
      %v2664 = vsel %vm1149, %v2663, %v2657
      %v2665 = vsel %vm276, %v2661, %v2662
      %v2666 = vsel %vm1149, %v2665, %v2659
      %v2669 = vmul.f32 %v2652, %v2664
      %v2670 = vmul.f32 %v2653, %v2666
      %v2671 = vadd.f32 %v2628, %v2669
      %v2672 = vadd.f32 %v2629, %v2670
      %s2673 = scalar_lea.vmem %s1, 3472
      %v2674 = vld [vmem:[%s2673] sm:$0xff]
      %v2675 = vld [vmem:[%s2673 + $0x8] sm:$0xff]
      %v2676 = vmul.f32 %v2674, %v2664
      %v2677 = vmul.f32 %v2675, %v2666
      %v2678 = vadd.f32 %v2635, %v2676
      %v2679 = vadd.f32 %v2636, %v2677
      %s2680 = scalar_lea.vmem %s1, 3488
      %v2681 = vld [vmem:[%s2680] sm:$0xff]
      %v2682 = vld [vmem:[%s2680 + $0x8] sm:$0xff]
      %v2683 = vmul.f32 %v2681, %v2664
      %v2684 = vmul.f32 %v2682, %v2666
      %v2685 = vadd.f32 %v2642, %v2683
      %v2686 = vadd.f32 %v2643, %v2684
      %s2687 = scalar_lea.vmem %s1, 3504
      %v2688 = vld [vmem:[%s2687] sm:$0xff]
      %v2689 = vld [vmem:[%s2687 + $0x8] sm:$0xff]
      %v2690 = vmul.f32 %v2688, %v2664
      %v2691 = vmul.f32 %v2689, %v2666
      %v2692 = vadd.f32 %v2649, %v2690
      %v2693 = vadd.f32 %v2650, %v2691
      %s2694 = scalar_lea.vmem %s1, 3520
      %v2695 = vld [vmem:[%s2694] sm:$0xff]
      %v2696 = vld [vmem:[%s2694 + $0x8] sm:$0xff]
      %2697 = vrot.lane.b32.xlu0 %v1793, 89
      %v2698 = vpop.permute.xlu0 %2697
      %2699 = vrot.lane.b32.xlu0 %v1794, 89
      %v2700 = vpop.permute.xlu0 %2699
      %2701 = vrot.lane.b32.xlu0 %v1795, 89
      %v2702 = vpop.permute.xlu0 %2701
      %v2703 = vrot.slane %v2698, 4
      %v2704 = vrot.slane %v2700, 4
      %v2705 = vrot.slane %v2702, 4
      %v2706 = vsel %vm276, %v2703, %v2704
      %v2707 = vsel %vm1193, %v2706, %v2700
      %v2708 = vsel %vm276, %v2704, %v2705
      %v2709 = vsel %vm1193, %v2708, %v2702
      %v2712 = vmul.f32 %v2695, %v2707
      %v2713 = vmul.f32 %v2696, %v2709
      %v2714 = vadd.f32 %v2671, %v2712
      %v2715 = vadd.f32 %v2672, %v2713
      %s2716 = scalar_lea.vmem %s1, 3536
      %v2717 = vld [vmem:[%s2716] sm:$0xff]
      %v2718 = vld [vmem:[%s2716 + $0x8] sm:$0xff]
      %v2719 = vmul.f32 %v2717, %v2707
      %v2720 = vmul.f32 %v2718, %v2709
      %v2721 = vadd.f32 %v2678, %v2719
      %v2722 = vadd.f32 %v2679, %v2720
      %s2723 = scalar_lea.vmem %s1, 3552
      %v2724 = vld [vmem:[%s2723] sm:$0xff]
      %v2725 = vld [vmem:[%s2723 + $0x8] sm:$0xff]
      %v2726 = vmul.f32 %v2724, %v2707
      %v2727 = vmul.f32 %v2725, %v2709
      %v2728 = vadd.f32 %v2685, %v2726
      %v2729 = vadd.f32 %v2686, %v2727
      %s2730 = scalar_lea.vmem %s1, 3568
      %v2731 = vld [vmem:[%s2730] sm:$0xff]
      %v2732 = vld [vmem:[%s2730 + $0x8] sm:$0xff]
      %v2733 = vmul.f32 %v2731, %v2707
      %v2734 = vmul.f32 %v2732, %v2709
      %v2735 = vadd.f32 %v2692, %v2733
      %v2736 = vadd.f32 %v2693, %v2734
      %s2737 = scalar_lea.vmem %s1, 3584
      %v2738 = vld [vmem:[%s2737] sm:$0xff]
      %v2739 = vld [vmem:[%s2737 + $0x8] sm:$0xff]
      %2740 = vrot.lane.b32.xlu0 %v1793, 88
      %v2741 = vpop.permute.xlu0 %2740
      %2742 = vrot.lane.b32.xlu0 %v1794, 88
      %v2743 = vpop.permute.xlu0 %2742
      %2744 = vrot.lane.b32.xlu0 %v1795, 88
      %v2745 = vpop.permute.xlu0 %2744
      %v2746 = vrot.slane %v2741, 4
      %v2747 = vrot.slane %v2743, 4
      %v2748 = vrot.slane %v2745, 4
      %v2749 = vsel %vm276, %v2746, %v2747
      %v2750 = vsel %vm1237, %v2749, %v2743
      %v2751 = vsel %vm276, %v2747, %v2748
      %v2752 = vsel %vm1237, %v2751, %v2745
      %v2755 = vmul.f32 %v2738, %v2750
      %v2756 = vmul.f32 %v2739, %v2752
      %v2757 = vadd.f32 %v2714, %v2755
      %v2758 = vadd.f32 %v2715, %v2756
      %s2759 = scalar_lea.vmem %s1, 3600
      %v2760 = vld [vmem:[%s2759] sm:$0xff]
      %v2761 = vld [vmem:[%s2759 + $0x8] sm:$0xff]
      %v2762 = vmul.f32 %v2760, %v2750
      %v2763 = vmul.f32 %v2761, %v2752
      %v2764 = vadd.f32 %v2721, %v2762
      %v2765 = vadd.f32 %v2722, %v2763
      %s2766 = scalar_lea.vmem %s1, 3616
      %v2767 = vld [vmem:[%s2766] sm:$0xff]
      %v2768 = vld [vmem:[%s2766 + $0x8] sm:$0xff]
      %v2769 = vmul.f32 %v2767, %v2750
      %v2770 = vmul.f32 %v2768, %v2752
      %v2771 = vadd.f32 %v2728, %v2769
      %v2772 = vadd.f32 %v2729, %v2770
      %s2773 = scalar_lea.vmem %s1, 3632
      %v2774 = vld [vmem:[%s2773] sm:$0xff]
      %v2775 = vld [vmem:[%s2773 + $0x8] sm:$0xff]
      %v2776 = vmul.f32 %v2774, %v2750
      %v2777 = vmul.f32 %v2775, %v2752
      %v2778 = vadd.f32 %v2735, %v2776
      %v2779 = vadd.f32 %v2736, %v2777
      %s2780 = scalar_lea.vmem %s1, 3648
      %v2781 = vld [vmem:[%s2780] sm:$0xff]
      %v2782 = vld [vmem:[%s2780 + $0x8] sm:$0xff]
      %2783 = vrot.lane.b32.xlu0 %v1793, 87
      %v2784 = vpop.permute.xlu0 %2783
      %2785 = vrot.lane.b32.xlu0 %v1794, 87
      %v2786 = vpop.permute.xlu0 %2785
      %2787 = vrot.lane.b32.xlu0 %v1795, 87
      %v2788 = vpop.permute.xlu0 %2787
      %v2789 = vrot.slane %v2784, 4
      %v2790 = vrot.slane %v2786, 4
      %v2791 = vrot.slane %v2788, 4
      %v2792 = vsel %vm276, %v2789, %v2790
      %v2793 = vsel %vm1281, %v2792, %v2786
      %v2794 = vsel %vm276, %v2790, %v2791
      %v2795 = vsel %vm1281, %v2794, %v2788
      %v2798 = vmul.f32 %v2781, %v2793
      %v2799 = vmul.f32 %v2782, %v2795
      %v2800 = vadd.f32 %v2757, %v2798
      %v2801 = vadd.f32 %v2758, %v2799
      %s2802 = scalar_lea.vmem %s1, 3664
      %v2803 = vld [vmem:[%s2802] sm:$0xff]
      %v2804 = vld [vmem:[%s2802 + $0x8] sm:$0xff]
      %v2805 = vmul.f32 %v2803, %v2793
      %v2806 = vmul.f32 %v2804, %v2795
      %v2807 = vadd.f32 %v2764, %v2805
      %v2808 = vadd.f32 %v2765, %v2806
      %s2809 = scalar_lea.vmem %s1, 3680
      %v2810 = vld [vmem:[%s2809] sm:$0xff]
      %v2811 = vld [vmem:[%s2809 + $0x8] sm:$0xff]
      %v2812 = vmul.f32 %v2810, %v2793
      %v2813 = vmul.f32 %v2811, %v2795
      %v2814 = vadd.f32 %v2771, %v2812
      %v2815 = vadd.f32 %v2772, %v2813
      %s2816 = scalar_lea.vmem %s1, 3696
      %v2817 = vld [vmem:[%s2816] sm:$0xff]
      %v2818 = vld [vmem:[%s2816 + $0x8] sm:$0xff]
      %v2819 = vmul.f32 %v2817, %v2793
      %v2820 = vmul.f32 %v2818, %v2795
      %v2821 = vadd.f32 %v2778, %v2819
      %v2822 = vadd.f32 %v2779, %v2820
      %s2823 = scalar_lea.vmem %s1, 3712
      %v2824 = vld [vmem:[%s2823] sm:$0xff]
      %v2825 = vld [vmem:[%s2823 + $0x8] sm:$0xff]
      %2826 = vrot.lane.b32.xlu0 %v1793, 86
      %v2827 = vpop.permute.xlu0 %2826
      %2828 = vrot.lane.b32.xlu0 %v1794, 86
      %v2829 = vpop.permute.xlu0 %2828
      %2830 = vrot.lane.b32.xlu0 %v1795, 86
      %v2831 = vpop.permute.xlu0 %2830
      %v2832 = vrot.slane %v2827, 4
      %v2833 = vrot.slane %v2829, 4
      %v2834 = vrot.slane %v2831, 4
      %v2835 = vsel %vm276, %v2832, %v2833
      %v2836 = vsel %vm1325, %v2835, %v2829
      %v2837 = vsel %vm276, %v2833, %v2834
      %v2838 = vsel %vm1325, %v2837, %v2831
      %v2841 = vmul.f32 %v2824, %v2836
      %v2842 = vmul.f32 %v2825, %v2838
      %v2843 = vadd.f32 %v2800, %v2841
      %v2844 = vadd.f32 %v2801, %v2842
      %s2845 = scalar_lea.vmem %s1, 3728
      %v2846 = vld [vmem:[%s2845] sm:$0xff]
      %v2847 = vld [vmem:[%s2845 + $0x8] sm:$0xff]
      %v2848 = vmul.f32 %v2846, %v2836
      %v2849 = vmul.f32 %v2847, %v2838
      %v2850 = vadd.f32 %v2807, %v2848
      %v2851 = vadd.f32 %v2808, %v2849
      %s2852 = scalar_lea.vmem %s1, 3744
      %v2853 = vld [vmem:[%s2852] sm:$0xff]
      %v2854 = vld [vmem:[%s2852 + $0x8] sm:$0xff]
      %v2855 = vmul.f32 %v2853, %v2836
      %v2856 = vmul.f32 %v2854, %v2838
      %v2857 = vadd.f32 %v2814, %v2855
      %v2858 = vadd.f32 %v2815, %v2856
      %s2859 = scalar_lea.vmem %s1, 3760
      %v2860 = vld [vmem:[%s2859] sm:$0xff]
      %v2861 = vld [vmem:[%s2859 + $0x8] sm:$0xff]
      %v2862 = vmul.f32 %v2860, %v2836
      %v2863 = vmul.f32 %v2861, %v2838
      %v2864 = vadd.f32 %v2821, %v2862
      %v2865 = vadd.f32 %v2822, %v2863
      %s2866 = scalar_lea.vmem %s1, 3776
      %v2867 = vld [vmem:[%s2866] sm:$0xff]
      %v2868 = vld [vmem:[%s2866 + $0x8] sm:$0xff]
      %v2869 = vmul.f32 %v2867, %v2070
      %v2870 = vmul.f32 %v2868, %v2072
      %v2871 = vadd.f32 %v2843, %v2869
      %v2872 = vadd.f32 %v2844, %v2870
      %s2873 = scalar_lea.vmem %s1, 3792
      %v2874 = vld [vmem:[%s2873] sm:$0xff]
      %v2875 = vld [vmem:[%s2873 + $0x8] sm:$0xff]
      %v2876 = vmul.f32 %v2874, %v2070
      %v2877 = vmul.f32 %v2875, %v2072
      %v2878 = vadd.f32 %v2850, %v2876
      %v2879 = vadd.f32 %v2851, %v2877
      %s2880 = scalar_lea.vmem %s1, 3808
      %v2881 = vld [vmem:[%s2880] sm:$0xff]
      %v2882 = vld [vmem:[%s2880 + $0x8] sm:$0xff]
      %v2883 = vmul.f32 %v2881, %v2070
      %v2884 = vmul.f32 %v2882, %v2072
      %v2885 = vadd.f32 %v2857, %v2883
      %v2886 = vadd.f32 %v2858, %v2884
      %s2887 = scalar_lea.vmem %s1, 3824
      %v2888 = vld [vmem:[%s2887] sm:$0xff]
      %v2889 = vld [vmem:[%s2887 + $0x8] sm:$0xff]
      %v2890 = vmul.f32 %v2888, %v2070
      %v2891 = vmul.f32 %v2889, %v2072
      %v2892 = vadd.f32 %v2864, %v2890
      %v2893 = vadd.f32 %v2865, %v2891
      %s2894 = scalar_lea.vmem %s1, 3840
      %v2895 = vld [vmem:[%s2894] sm:$0xff]
      %v2896 = vld [vmem:[%s2894 + $0x8] sm:$0xff]
      %v2897 = vmul.f32 %v2895, %v2113
      %v2898 = vmul.f32 %v2896, %v2115
      %v2899 = vadd.f32 %v2871, %v2897
      %v2900 = vadd.f32 %v2872, %v2898
      %s2901 = scalar_lea.vmem %s1, 3856
      %v2902 = vld [vmem:[%s2901] sm:$0xff]
      %v2903 = vld [vmem:[%s2901 + $0x8] sm:$0xff]
      %v2904 = vmul.f32 %v2902, %v2113
      %v2905 = vmul.f32 %v2903, %v2115
      %v2906 = vadd.f32 %v2878, %v2904
      %v2907 = vadd.f32 %v2879, %v2905
      %s2908 = scalar_lea.vmem %s1, 3872
      %v2909 = vld [vmem:[%s2908] sm:$0xff]
      %v2910 = vld [vmem:[%s2908 + $0x8] sm:$0xff]
      %v2911 = vmul.f32 %v2909, %v2113
      %v2912 = vmul.f32 %v2910, %v2115
      %v2913 = vadd.f32 %v2885, %v2911
      %v2914 = vadd.f32 %v2886, %v2912
      %s2915 = scalar_lea.vmem %s1, 3888
      %v2916 = vld [vmem:[%s2915] sm:$0xff]
      %v2917 = vld [vmem:[%s2915 + $0x8] sm:$0xff]
      %v2918 = vmul.f32 %v2916, %v2113
      %v2919 = vmul.f32 %v2917, %v2115
      %v2920 = vadd.f32 %v2892, %v2918
      %v2921 = vadd.f32 %v2893, %v2919
      %s2922 = scalar_lea.vmem %s1, 3904
      %v2923 = vld [vmem:[%s2922] sm:$0xff]
      %v2924 = vld [vmem:[%s2922 + $0x8] sm:$0xff]
      %v2925 = vmul.f32 %v2923, %v2156
      %v2926 = vmul.f32 %v2924, %v2158
      %v2927 = vadd.f32 %v2899, %v2925
      %v2928 = vadd.f32 %v2900, %v2926
      %s2929 = scalar_lea.vmem %s1, 3920
      %v2930 = vld [vmem:[%s2929] sm:$0xff]
      %v2931 = vld [vmem:[%s2929 + $0x8] sm:$0xff]
      %v2932 = vmul.f32 %v2930, %v2156
      %v2933 = vmul.f32 %v2931, %v2158
      %v2934 = vadd.f32 %v2906, %v2932
      %v2935 = vadd.f32 %v2907, %v2933
      %s2936 = scalar_lea.vmem %s1, 3936
      %v2937 = vld [vmem:[%s2936] sm:$0xff]
      %v2938 = vld [vmem:[%s2936 + $0x8] sm:$0xff]
      %v2939 = vmul.f32 %v2937, %v2156
      %v2940 = vmul.f32 %v2938, %v2158
      %v2941 = vadd.f32 %v2913, %v2939
      %v2942 = vadd.f32 %v2914, %v2940
      %s2943 = scalar_lea.vmem %s1, 3952
      %v2944 = vld [vmem:[%s2943] sm:$0xff]
      %v2945 = vld [vmem:[%s2943 + $0x8] sm:$0xff]
      %v2946 = vmul.f32 %v2944, %v2156
      %v2947 = vmul.f32 %v2945, %v2158
      %v2948 = vadd.f32 %v2920, %v2946
      %v2949 = vadd.f32 %v2921, %v2947
      %s2950 = scalar_lea.vmem %s1, 3968
      %v2951 = vld [vmem:[%s2950] sm:$0xff]
      %v2952 = vld [vmem:[%s2950 + $0x8] sm:$0xff]
      %v2953 = vmul.f32 %v2951, %v2285
      %v2954 = vmul.f32 %v2952, %v2287
      %v2955 = vadd.f32 %v2927, %v2953
      %v2956 = vadd.f32 %v2928, %v2954
      %s2957 = scalar_lea.vmem %s1, 3984
      %v2958 = vld [vmem:[%s2957] sm:$0xff]
      %v2959 = vld [vmem:[%s2957 + $0x8] sm:$0xff]
      %v2960 = vmul.f32 %v2958, %v2285
      %v2961 = vmul.f32 %v2959, %v2287
      %v2962 = vadd.f32 %v2934, %v2960
      %v2963 = vadd.f32 %v2935, %v2961
      %s2964 = scalar_lea.vmem %s1, 4000
      %v2965 = vld [vmem:[%s2964] sm:$0xff]
      %v2966 = vld [vmem:[%s2964 + $0x8] sm:$0xff]
      %v2967 = vmul.f32 %v2965, %v2285
      %v2968 = vmul.f32 %v2966, %v2287
      %v2969 = vadd.f32 %v2941, %v2967
      %v2970 = vadd.f32 %v2942, %v2968
      %s2971 = scalar_lea.vmem %s1, 4016
      %v2972 = vld [vmem:[%s2971] sm:$0xff]
      %v2973 = vld [vmem:[%s2971 + $0x8] sm:$0xff]
      %v2974 = vmul.f32 %v2972, %v2285
      %v2975 = vmul.f32 %v2973, %v2287
      %v2976 = vadd.f32 %v2948, %v2974
      %v2977 = vadd.f32 %v2949, %v2975
      %s2978 = scalar_lea.vmem %s1, 4032
      %v2979 = vld [vmem:[%s2978] sm:$0xff]
      %v2980 = vld [vmem:[%s2978 + $0x8] sm:$0xff]
      %v2981 = vmul.f32 %v2979, %v2321
      %v2982 = vmul.f32 %v2980, %v2322
      %v2983 = vadd.f32 %v2955, %v2981
      %v2984 = vadd.f32 %v2956, %v2982
      %s2985 = scalar_lea.vmem %s1, 4048
      %v2986 = vld [vmem:[%s2985] sm:$0xff]
      %v2987 = vld [vmem:[%s2985 + $0x8] sm:$0xff]
      %v2988 = vmul.f32 %v2986, %v2321
      %v2989 = vmul.f32 %v2987, %v2322
      %v2990 = vadd.f32 %v2962, %v2988
      %v2991 = vadd.f32 %v2963, %v2989
      %s2992 = scalar_lea.vmem %s1, 4064
      %v2993 = vld [vmem:[%s2992] sm:$0xff]
      %v2994 = vld [vmem:[%s2992 + $0x8] sm:$0xff]
      %v2995 = vmul.f32 %v2993, %v2321
      %v2996 = vmul.f32 %v2994, %v2322
      %v2997 = vadd.f32 %v2969, %v2995
      %v2998 = vadd.f32 %v2970, %v2996
      %s2999 = scalar_lea.vmem %s1, 4080
      %v3000 = vld [vmem:[%s2999] sm:$0xff]
      %v3001 = vld [vmem:[%s2999 + $0x8] sm:$0xff]
      %v3002 = vmul.f32 %v3000, %v2321
      %v3003 = vmul.f32 %v3001, %v2322
      %v3004 = vadd.f32 %v2976, %v3002
      %v3005 = vadd.f32 %v2977, %v3003
      %s3006 = scalar_lea.vmem %s1, 4096
      %v3007 = vld [vmem:[%s3006] sm:$0xff]
      %v3008 = vld [vmem:[%s3006 + $0x8] sm:$0xff]
      %v3009 = vmul.f32 %v3007, %v2363
      %v3010 = vmul.f32 %v3008, %v2365
      %v3011 = vadd.f32 %v2983, %v3009
      %v3012 = vadd.f32 %v2984, %v3010
      %s3013 = scalar_lea.vmem %s1, 4112
      %v3014 = vld [vmem:[%s3013] sm:$0xff]
      %v3015 = vld [vmem:[%s3013 + $0x8] sm:$0xff]
      %v3016 = vmul.f32 %v3014, %v2363
      %v3017 = vmul.f32 %v3015, %v2365
      %v3018 = vadd.f32 %v2990, %v3016
      %v3019 = vadd.f32 %v2991, %v3017
      %s3020 = scalar_lea.vmem %s1, 4128
      %v3021 = vld [vmem:[%s3020] sm:$0xff]
      %v3022 = vld [vmem:[%s3020 + $0x8] sm:$0xff]
      %v3023 = vmul.f32 %v3021, %v2363
      %v3024 = vmul.f32 %v3022, %v2365
      %v3025 = vadd.f32 %v2997, %v3023
      %v3026 = vadd.f32 %v2998, %v3024
      %s3027 = scalar_lea.vmem %s1, 4144
      %v3028 = vld [vmem:[%s3027] sm:$0xff]
      %v3029 = vld [vmem:[%s3027 + $0x8] sm:$0xff]
      %v3030 = vmul.f32 %v3028, %v2363
      %v3031 = vmul.f32 %v3029, %v2365
      %v3032 = vadd.f32 %v3004, %v3030
      %v3033 = vadd.f32 %v3005, %v3031
      %s3034 = scalar_lea.vmem %s1, 4160
      %v3035 = vld [vmem:[%s3034] sm:$0xff]
      %v3036 = vld [vmem:[%s3034 + $0x8] sm:$0xff]
      %v3037 = vmul.f32 %v3035, %v2492
      %v3038 = vmul.f32 %v3036, %v2494
      %v3039 = vadd.f32 %v3011, %v3037
      %v3040 = vadd.f32 %v3012, %v3038
      %s3041 = scalar_lea.vmem %s1, 4176
      %v3042 = vld [vmem:[%s3041] sm:$0xff]
      %v3043 = vld [vmem:[%s3041 + $0x8] sm:$0xff]
      %v3044 = vmul.f32 %v3042, %v2492
      %v3045 = vmul.f32 %v3043, %v2494
      %v3046 = vadd.f32 %v3018, %v3044
      %v3047 = vadd.f32 %v3019, %v3045
      %s3048 = scalar_lea.vmem %s1, 4192
      %v3049 = vld [vmem:[%s3048] sm:$0xff]
      %v3050 = vld [vmem:[%s3048 + $0x8] sm:$0xff]
      %v3051 = vmul.f32 %v3049, %v2492
      %v3052 = vmul.f32 %v3050, %v2494
      %v3053 = vadd.f32 %v3025, %v3051
      %v3054 = vadd.f32 %v3026, %v3052
      %s3055 = scalar_lea.vmem %s1, 4208
      %v3056 = vld [vmem:[%s3055] sm:$0xff]
      %v3057 = vld [vmem:[%s3055 + $0x8] sm:$0xff]
      %v3058 = vmul.f32 %v3056, %v2492
      %v3059 = vmul.f32 %v3057, %v2494
      %v3060 = vadd.f32 %v3032, %v3058
      %v3061 = vadd.f32 %v3033, %v3059
      %s3062 = scalar_lea.vmem %s1, 4224
      %v3063 = vld [vmem:[%s3062] sm:$0xff]
      %v3064 = vld [vmem:[%s3062 + $0x8] sm:$0xff]
      %v3065 = vmul.f32 %v3063, %v2535
      %v3066 = vmul.f32 %v3064, %v2537
      %v3067 = vadd.f32 %v3039, %v3065
      %v3068 = vadd.f32 %v3040, %v3066
      %s3069 = scalar_lea.vmem %s1, 4240
      %v3070 = vld [vmem:[%s3069] sm:$0xff]
      %v3071 = vld [vmem:[%s3069 + $0x8] sm:$0xff]
      %v3072 = vmul.f32 %v3070, %v2535
      %v3073 = vmul.f32 %v3071, %v2537
      %v3074 = vadd.f32 %v3046, %v3072
      %v3075 = vadd.f32 %v3047, %v3073
      %s3076 = scalar_lea.vmem %s1, 4256
      %v3077 = vld [vmem:[%s3076] sm:$0xff]
      %v3078 = vld [vmem:[%s3076 + $0x8] sm:$0xff]
      %v3079 = vmul.f32 %v3077, %v2535
      %v3080 = vmul.f32 %v3078, %v2537
      %v3081 = vadd.f32 %v3053, %v3079
      %v3082 = vadd.f32 %v3054, %v3080
      %s3083 = scalar_lea.vmem %s1, 4272
      %v3084 = vld [vmem:[%s3083] sm:$0xff]
      %v3085 = vld [vmem:[%s3083 + $0x8] sm:$0xff]
      %v3086 = vmul.f32 %v3084, %v2535
      %v3087 = vmul.f32 %v3085, %v2537
      %v3088 = vadd.f32 %v3060, %v3086
      %v3089 = vadd.f32 %v3061, %v3087
      %s3090 = scalar_lea.vmem %s1, 4288
      %v3091 = vld [vmem:[%s3090] sm:$0xff]
      %v3092 = vld [vmem:[%s3090 + $0x8] sm:$0xff]
      %v3093 = vmul.f32 %v3091, %v2578
      %v3094 = vmul.f32 %v3092, %v2580
      %v3095 = vadd.f32 %v3067, %v3093
      %v3096 = vadd.f32 %v3068, %v3094
      %s3097 = scalar_lea.vmem %s1, 4304
      %v3098 = vld [vmem:[%s3097] sm:$0xff]
      %v3099 = vld [vmem:[%s3097 + $0x8] sm:$0xff]
      %v3100 = vmul.f32 %v3098, %v2578
      %v3101 = vmul.f32 %v3099, %v2580
      %v3102 = vadd.f32 %v3074, %v3100
      %v3103 = vadd.f32 %v3075, %v3101
      %s3104 = scalar_lea.vmem %s1, 4320
      %v3105 = vld [vmem:[%s3104] sm:$0xff]
      %v3106 = vld [vmem:[%s3104 + $0x8] sm:$0xff]
      %v3107 = vmul.f32 %v3105, %v2578
      %v3108 = vmul.f32 %v3106, %v2580
      %v3109 = vadd.f32 %v3081, %v3107
      %v3110 = vadd.f32 %v3082, %v3108
      %s3111 = scalar_lea.vmem %s1, 4336
      %v3112 = vld [vmem:[%s3111] sm:$0xff]
      %v3113 = vld [vmem:[%s3111 + $0x8] sm:$0xff]
      %v3114 = vmul.f32 %v3112, %v2578
      %v3115 = vmul.f32 %v3113, %v2580
      %v3116 = vadd.f32 %v3088, %v3114
      %v3117 = vadd.f32 %v3089, %v3115
      %v3119 = vcombine.high %v3095, %v3095
      %v3121 = vsel %vm276, %v3095, 0.0
      %v3122 = vrot.slane %v3121, 4
      %v3123 = vadd.f32 %v3121, %v3122
      %v3124 = vrot.slane %v3123, 2
      %v3125 = vadd.f32 %v3123, %v3124
      %v3126 = vrot.slane %v3125, 1
      %v3127 = vadd.f32 %v3125, %v3126
      %v3128 = vsel %vm276, %v3119, 0.0
      %v3129 = vrot.slane %v3128, 4
      %v3130 = vadd.f32 %v3128, %v3129
      %v3131 = vrot.slane %v3130, 2
      %v3132 = vadd.f32 %v3130, %v3131
      %v3133 = vrot.slane %v3132, 1
      %v3134 = vadd.f32 %v3132, %v3133
      %v3135 = vsel %vm276, %v3096, 0.0
      %v3136 = vrot.slane %v3135, 4
      %v3137 = vadd.f32 %v3135, %v3136
      %v3138 = vrot.slane %v3137, 2
      %v3139 = vadd.f32 %v3137, %v3138
      %v3140 = vrot.slane %v3139, 1
      %v3141 = vadd.f32 %v3139, %v3140
      %v3143 = vcombine.high %v3102, %v3102
      %v3145 = vsel %vm276, %v3102, 0.0
      %v3146 = vrot.slane %v3145, 4
      %v3147 = vadd.f32 %v3145, %v3146
      %v3148 = vrot.slane %v3147, 2
      %v3149 = vadd.f32 %v3147, %v3148
      %v3150 = vrot.slane %v3149, 1
      %v3151 = vadd.f32 %v3149, %v3150
      %v3152 = vsel %vm276, %v3143, 0.0
      %v3153 = vrot.slane %v3152, 4
      %v3154 = vadd.f32 %v3152, %v3153
      %v3155 = vrot.slane %v3154, 2
      %v3156 = vadd.f32 %v3154, %v3155
      %v3157 = vrot.slane %v3156, 1
      %v3158 = vadd.f32 %v3156, %v3157
      %v3159 = vsel %vm276, %v3103, 0.0
      %v3160 = vrot.slane %v3159, 4
      %v3161 = vadd.f32 %v3159, %v3160
      %v3162 = vrot.slane %v3161, 2
      %v3163 = vadd.f32 %v3161, %v3162
      %v3164 = vrot.slane %v3163, 1
      %v3165 = vadd.f32 %v3163, %v3164
      %v3167 = vcombine.high %v3109, %v3109
      %v3169 = vsel %vm276, %v3109, 0.0
      %v3170 = vrot.slane %v3169, 4
      %v3171 = vadd.f32 %v3169, %v3170
      %v3172 = vrot.slane %v3171, 2
      %v3173 = vadd.f32 %v3171, %v3172
      %v3174 = vrot.slane %v3173, 1
      %v3175 = vadd.f32 %v3173, %v3174
      %v3176 = vsel %vm276, %v3167, 0.0
      %v3177 = vrot.slane %v3176, 4
      %v3178 = vadd.f32 %v3176, %v3177
      %v3179 = vrot.slane %v3178, 2
      %v3180 = vadd.f32 %v3178, %v3179
      %v3181 = vrot.slane %v3180, 1
      %v3182 = vadd.f32 %v3180, %v3181
      %v3183 = vsel %vm276, %v3110, 0.0
      %v3184 = vrot.slane %v3183, 4
      %v3185 = vadd.f32 %v3183, %v3184
      %v3186 = vrot.slane %v3185, 2
      %v3187 = vadd.f32 %v3185, %v3186
      %v3188 = vrot.slane %v3187, 1
      %v3189 = vadd.f32 %v3187, %v3188
      %v3191 = vcombine.high %v3116, %v3116
      %v3193 = vsel %vm276, %v3116, 0.0
      %v3194 = vrot.slane %v3193, 4
      %v3195 = vadd.f32 %v3193, %v3194
      %v3196 = vrot.slane %v3195, 2
      %v3197 = vadd.f32 %v3195, %v3196
      %v3198 = vrot.slane %v3197, 1
      %v3199 = vadd.f32 %v3197, %v3198
      %v3200 = vsel %vm276, %v3191, 0.0
      %v3201 = vrot.slane %v3200, 4
      %v3202 = vadd.f32 %v3200, %v3201
      %v3203 = vrot.slane %v3202, 2
      %v3204 = vadd.f32 %v3202, %v3203
      %v3205 = vrot.slane %v3204, 1
      %v3206 = vadd.f32 %v3204, %v3205
      %v3207 = vsel %vm276, %v3117, 0.0
      %v3208 = vrot.slane %v3207, 4
      %v3209 = vadd.f32 %v3207, %v3208
      %v3210 = vrot.slane %v3209, 2
      %v3211 = vadd.f32 %v3209, %v3210
      %v3212 = vrot.slane %v3211, 1
      %v3213 = vadd.f32 %v3211, %v3212
      %v3214 = vsel %vm1744, %v3127, %v3151
      %v3215 = vsel %vm1744, %v3134, %v3158
      %v3216 = vsel %vm1744, %v3141, %v3165
      %v3217 = vsel %vm1749, %v3214, %v3175
      %v3218 = vsel %vm1749, %v3215, %v3182
      %v3219 = vsel %vm1749, %v3216, %v3189
      %v3220 = vsel %vm1754, %v3217, %v3199
      %v3221 = vsel %vm1754, %v3218, %v3206
      %v3222 = vsel %vm1754, %v3219, %v3213
      %v3224 = vcombine.high %v152, %v152
      %v3226 = vadd.f32 %v3220, %v152
      %v3227 = vadd.f32 %v3221, %v3224
      %v3228 = vadd.f32 %v3222, %v153
      %v3229 = vadd.f32 %v3226, %v159
      %v3230 = vmax.f32 %v3229, 0.0
      %3232 = vrot.lane.b32.xlu0 %v3230, 86
      %v3233 = vpop.permute.xlu0 %3232
      %vm3235 = vcmask 125952
      %3236 = vst.msk [vmem:[#allocation2] sm:$0xf] %vm3235, %v3233
      %v3237 = vadd.f32 %v3226, %v164
      %v3238 = vmax.f32 %v3237, 0.0
      %3240 = vrot.lane.b32.xlu0 %v3238, 82
      %v3241 = vpop.permute.xlu0 %3240
      %vm3243 = vcmask 257152
      %3244 = vst.msk [vmem:[#allocation2] sm:$0xf] %vm3243, %v3241
      %v3245 = vadd.f32 %v3226, %v169
      %v3246 = vmax.f32 %v3245, 0.0
      %3248 = vrot.lane.b32.xlu0 %v3246, 78
      %v3249 = vpop.permute.xlu0 %3248
      %vm3251 = vcmask 388352
      %3252 = vst.msk [vmem:[#allocation2] sm:$0xf] %vm3251, %v3249
      %v3253 = vadd.f32 %v3226, %v174
      %v3254 = vmax.f32 %v3253, 0.0
      %3256 = vrot.lane.b32.xlu0 %v3254, 74
      %v3257 = vpop.permute.xlu0 %3256
      %vm3259 = vcmask 519552
      %3260 = vst.msk [vmem:[#allocation2] sm:$0xf] %vm3259, %v3257
      %v3262 = vadd.f32 %v3226, %v179
      %v3263 = vadd.f32 %v3227, %v179
      %v3264 = vmax.f32 %v3262, 0.0
      %v3265 = vmax.f32 %v3263, 0.0
      %v3268 = vcombine.low %v3264, %v3265
      %3269 = vrot.lane.b32.xlu0 %v3268, 70
      %v3270 = vpop.permute.xlu0 %3269
      %v3271 = vrot.slane %v3270, 4
      %vm3272 = vcmask 572416
      %v3273 = vsel %vm3272, %v3270, %v3271
      %vm3275 = vcmask 650752
      %3276 = vst.msk [vmem:[#allocation2] sm:$0xf] %vm3275, %v3273
      %v3277 = vadd.f32 %v3227, %v189
      %v3278 = vmax.f32 %v3277, 0.0
      %3280 = vrot.lane.b32.xlu0 %v3278, 66
      %v3281 = vpop.permute.xlu0 %3280
      %vm3283 = vcmask 781952
      %3284 = vst.msk [vmem:[#allocation2] sm:$0xf] %vm3283, %v3281
      %v3285 = vadd.f32 %v3227, %v194
      %v3286 = vmax.f32 %v3285, 0.0
      %3288 = vrot.lane.b32.xlu0 %v3286, 62
      %v3289 = vpop.permute.xlu0 %3288
      %vm3291 = vcmask 913152
      %3292 = vst.msk [vmem:[#allocation2] sm:$0xf] %vm3291, %v3289
      %v3293 = vadd.f32 %v3227, %v199
      %v3294 = vmax.f32 %v3293, 0.0
      %3296 = vrot.lane.b32.xlu0 %v3294, 58
      %v3297 = vpop.permute.xlu0 %3296
      %vm3299 = vcmask 1044352
      %3300 = vst.msk [vmem:[#allocation2] sm:$0xf] %vm3299, %v3297
      %v3301 = vcombine.high %v144, %v144
      %3302 = vrot.lane.b32.xlu0 %v3301, 74
      %v3303 = vpop.permute.xlu0 %3302
      %v3305 = vadd.f32 %v3227, %v3303
      %v3306 = vmax.f32 %v3305, 0.0
      %3308 = vrot.lane.b32.xlu0 %v3306, 54
      %v3309 = vpop.permute.xlu0 %3308
      %3311 = vst.msk [vmem:[#allocation2 + $0x4] sm:$0xf] %vm3235, %v3309
      %3312 = vrot.lane.b32.xlu0 %v3301, 78
      %v3313 = vpop.permute.xlu0 %3312
      %v3315 = vadd.f32 %v3227, %v3313
      %v3316 = vmax.f32 %v3315, 0.0
      %3318 = vrot.lane.b32.xlu0 %v3316, 50
      %v3319 = vpop.permute.xlu0 %3318
      %3321 = vst.msk [vmem:[#allocation2 + $0x4] sm:$0xf] %vm3243, %v3319
      %3322 = vrot.lane.b32.xlu0 %v3301, 82
      %v3323 = vpop.permute.xlu0 %3322
      %v3325 = vadd.f32 %v3227, %v3323
      %v3326 = vadd.f32 %v3228, %v3323
      %v3327 = vmax.f32 %v3325, 0.0
      %v3328 = vmax.f32 %v3326, 0.0
      %v3331 = vcombine.low %v3327, %v3328
      %3332 = vrot.lane.b32.xlu0 %v3331, 46
      %v3333 = vpop.permute.xlu0 %3332
      %v3334 = vrot.slane %v3333, 4
      %vm3335 = vcmask 375808
      %v3336 = vsel %vm3335, %v3333, %v3334
      %3338 = vst.msk [vmem:[#allocation2 + $0x4] sm:$0xf] %vm3251, %v3336
      %3339 = vrot.lane.b32.xlu0 %v3301, 86
      %v3340 = vpop.permute.xlu0 %3339
      %v3342 = vadd.f32 %v3228, %v3340
      %v3343 = vmax.f32 %v3342, 0.0
      %3345 = vrot.lane.b32.xlu0 %v3343, 42
      %v3346 = vpop.permute.xlu0 %3345
      %3348 = vst.msk [vmem:[#allocation2 + $0x4] sm:$0xf] %vm3259, %v3346
      %3349 = vrot.lane.b32.xlu0 %v3301, 90
      %v3350 = vpop.permute.xlu0 %3349
      %v3352 = vadd.f32 %v3228, %v3350
      %v3353 = vmax.f32 %v3352, 0.0
      %3355 = vrot.lane.b32.xlu0 %v3353, 38
      %v3356 = vpop.permute.xlu0 %3355
      %3358 = vst.msk [vmem:[#allocation2 + $0x4] sm:$0xf] %vm3275, %v3356
      %3359 = vrot.lane.b32.xlu0 %v3301, 94
      %v3360 = vpop.permute.xlu0 %3359
      %v3362 = vadd.f32 %v3228, %v3360
      %v3363 = vmax.f32 %v3362, 0.0
      %3365 = vrot.lane.b32.xlu0 %v3363, 34
      %v3366 = vpop.permute.xlu0 %3365
      %3368 = vst.msk [vmem:[#allocation2 + $0x4] sm:$0xf] %vm3283, %v3366
      %3369 = vrot.lane.b32.xlu0 %v3301, 98
      %v3370 = vpop.permute.xlu0 %3369
      %v3372 = vadd.f32 %v3228, %v3370
      %v3373 = vmax.f32 %v3372, 0.0
      %3375 = vrot.lane.b32.xlu0 %v3373, 30
      %v3376 = vpop.permute.xlu0 %3375
      %3378 = vst.msk [vmem:[#allocation2 + $0x4] sm:$0xf] %vm3291, %v3376
      %3379 = vrot.lane.b32.xlu0 %v3301, 102
      %v3380 = vpop.permute.xlu0 %3379
      %v3382 = vadd.f32 %v3228, %v3380
      %v3383 = vmax.f32 %v3382, 0.0
      %3385 = vrot.lane.b32.xlu0 %v3383, 26
      %v3386 = vpop.permute.xlu0 %3385
      %3388 = vst.msk [vmem:[#allocation2 + $0x4] sm:$0xf] %vm3299, %v3386
      %v3389 = vld [vmem:[#allocation2] sm:$0xff]
      %3390 = vst [vmem:[%s143] sm:$0xff] %v3389
      %p3391 = scmp.lt.s32.totalorder %s13, 1
      %s3392 = scalar_select %p3391, %s13, 1
      %s3393 = smul.addr %s3392, 2
      %s3394 = smul.addr %s3393, 4
      %s3395 = scalar_lea.vmem %s2, %s3394
      // Predicated region
      $region29: #{residual_block_forward.1} parent=27 // pred_check
        %p3396 = pneg %p78
      $region30: #{residual_block_forward.1} parent=27 // pred_check_branch
        %3398 = sbr.rel (%p3396) target = $region32
      $region31: #{residual_block_forward.1} parent=27 // pred_region
        _
      $region32: #{residual_block_forward.1} parent=27 // pred_fallthru
        _
    $region28: #{residual_block_forward.1} parent=5 // pred_fallthru
      _
    %p3399 = scmp.le.s32.totalorder 2, %s8
    // Predicated region
    $region33: #{residual_block_forward.1} parent=5 // pred_check
      %p3400 = pneg %p3399
    $region34: #{residual_block_forward.1} parent=5 // pred_check_branch
      %3402 = sbr.rel (%p3400) target = $region36
    $region35: #{residual_block_forward.1} parent=5 // pred_region
      %s3403 = ssub.s32 %s8, 2
      // Predicated region
      $region37: #{residual_block_forward.1} parent=35 // pred_check
        %p3404 = pneg %p84
      $region38: #{residual_block_forward.1} parent=35 // pred_check_branch
        %3406 = sbr.rel (%p3404) target = $region40
      $region39: #{residual_block_forward.1} parent=35 // pred_region
        %p3407 = scmp.lt.s32.totalorder %s14, 1
        %s3408 = scalar_select %p3407, %s14, 1
        %s3409 = smul.addr %s3408, 2
        %s3410 = smul.addr %s3409, 4
        %s3411 = scalar_lea.vmem %s2, %s3410
      $region40: #{residual_block_forward.1} parent=35 // pred_fallthru
        _
    $region36: #{residual_block_forward.1} parent=5 // pred_fallthru
      _
  $region6: #{residual_block_forward.1} parent=0 // loop_footer
    %s12 = sadd.s32 1, %s8
  $region7: #{residual_block_forward.1} parent=0 // loop_footer_branch
    %7 = sbr.rel target = $region3
  $region8: #{residual_block_forward.1} parent=0 // loop_exit
    _

</llo_original>
